<compile_context>
chip_gen: v5e
topology: v5e:2x2
jax: 0.10.0
libtpu: 0.0.40
codegen_flags: <defaults>
</compile_context>

<pallas_src>
import jax
import jax.numpy as jnp
from jax.experimental import pallas as pl
from jax.experimental.pallas import tpu as pltpu

KH, KW = 5, 5
PAD = 2
EPS = 1e-5
LANES = 128


def _dwconv_bn_kernel(x_ref, w_ref, g_ref, b_ref, o_ref, xpad_ref):
    """One channel-tile of fused depthwise 5x5 conv + training-mode BN.

    x_ref   : (N, H, W, Ct)      input tile (channels on the lane axis)
    w_ref   : (KH*KW, 1, Ct)     one row per tap (kh-major, kw-minor)
    g_ref   : (1, 1, 1, Ct)      BN gamma
    b_ref   : (1, 1, 1, Ct)      BN beta
    o_ref   : (N, H, W, Ct)      output tile
    xpad_ref: (N, H+4, W+4, Ct)  VMEM scratch: zero-padded copy of the tile
    """
    N, H, W, Ct = x_ref.shape
    cdt = xpad_ref.dtype

    # ---- fused zero padding: zero only the halo stripes, then write the
    # interior. Per-step (not pid==0-gated) so v7x megacore stays correct.
    xpad_ref[:, :PAD, :, :] = jnp.zeros((N, PAD, W + 2 * PAD, Ct), cdt)
    xpad_ref[:, PAD + H:, :, :] = jnp.zeros((N, PAD, W + 2 * PAD, Ct), cdt)
    xpad_ref[:, PAD:PAD + H, :PAD, :] = jnp.zeros((N, H, PAD, Ct), cdt)
    xpad_ref[:, PAD:PAD + H, PAD + W:, :] = jnp.zeros((N, H, PAD, Ct), cdt)
    xpad_ref[:, PAD:PAD + H, PAD:PAD + W, :] = x_ref[...].astype(cdt)

    # ---- depthwise conv: 5 W-shifted windows sliced straight off the padded
    # ref (sublane axis); H shifts are leading-dim slices (free). Each kw
    # column's 5 taps accumulate in the compute dtype, then convert to f32
    # once per kw before joining the f32 accumulator.
    acc = jnp.zeros((N, H, W, Ct), jnp.float32)
    for kw in range(KW):
        x_kw = xpad_ref[:, :, kw:kw + W, :]                 # (N, H+4, W, Ct)
        part = x_kw[:, 0:H, :, :] * w_ref[0 * KW + kw]      # (1, Ct) row read
        for kh in range(1, KH):
            part = part + x_kw[:, kh:kh + H, :, :] * w_ref[kh * KW + kw]
        acc = acc + part.astype(jnp.float32)

    # ---- BatchNorm2d (training-mode biased batch stats), centered two-pass.
    inv_m = 1.0 / float(N * H * W)
    mean = jnp.sum(acc, axis=(0, 1, 2), keepdims=True) * inv_m      # (1,1,1,Ct)
    cent = acc - mean
    var = jnp.sum(cent * cent, axis=(0, 1, 2), keepdims=True) * inv_m
    inv = jax.lax.rsqrt(var + EPS)
    scale = g_ref[...] * inv
    o_ref[...] = (cent * scale + b_ref[...]).astype(o_ref.dtype)


def _device_kind():
    try:
        return jax.devices()[0].device_kind.lower()
    except Exception:
        return ""


def _pick_channel_block(C):
    """Channel-tile size per generation.

    v5e / v6e are single-TC: one full-C block (no per-step overhead, no padded
    last tile). v7x has 2 TCs: keep >=2 lane-aligned blocks so
    dimension_semantics=("parallel",) actually shards across both cores.
    """
    if C <= LANES:
        return C
    kind = _device_kind()
    if "v7" in kind or "tpu7" in kind:
        half_blocks = pl.cdiv(pl.cdiv(C, LANES), 2)
        return min(half_blocks * LANES, C)
    return C


def _compute_dtype(in_dtype):
    # bf16 multiplies only pay off on chips with a bf16 VALU (v6e/v7x); v5e
    # would promote them anyway, so stay in f32 there (and for f32 inputs).
    if jnp.dtype(in_dtype) == jnp.bfloat16 and "v5" not in _device_kind():
        return jnp.bfloat16
    return jnp.float32


def dwconv_bn_nhwc(x_nhwc, w_oihw, gamma, beta):
    """Optimized path. x_nhwc: (N, H, W, C); w_oihw: (C, 1, KH, KW); gamma/beta: (C,)."""
    N, H, W, C = x_nhwc.shape
    cdt = _compute_dtype(x_nhwc.dtype)

    # (C, 1, KH, KW) -> (KH*KW, 1, C): tap-major rows, channels on the lane axis.
    w_taps = jnp.transpose(w_oihw[:, 0, :, :], (1, 2, 0)).reshape(KH * KW, 1, C)
    w_taps = w_taps.astype(cdt)
    g4 = gamma.reshape(1, 1, 1, C).astype(jnp.float32)
    b4 = beta.reshape(1, 1, 1, C).astype(jnp.float32)

    cb = _pick_channel_block(C)
    grid = (pl.cdiv(C, cb),)

    # TODO(synk): the block shape scales with N*H*W; for production batch
    # sizes (e.g. N>=16 at 28x28x128 f32) add an N/H grid axis and split BN
    # into two passes (partial s1/s2, then apply) to stay inside v7x's 64 MiB.
    # TODO(synk): for tiny C (< 128) the lane axis is underfilled; a lane-dense
    # (W*C) repack would help small-C layers but is not applied here.
    return pl.pallas_call(
        _dwconv_bn_kernel,
        out_shape=jax.ShapeDtypeStruct((N, H, W, C), x_nhwc.dtype),
        grid=grid,
        in_specs=[
            pl.BlockSpec((N, H, W, cb), lambda c: (0, 0, 0, c)),
            pl.BlockSpec((KH * KW, 1, cb), lambda c: (0, 0, c)),
            pl.BlockSpec((1, 1, 1, cb), lambda c: (0, 0, 0, c)),
            pl.BlockSpec((1, 1, 1, cb), lambda c: (0, 0, 0, c)),
        ],
        out_specs=pl.BlockSpec((N, H, W, cb), lambda c: (0, 0, 0, c)),
        scratch_shapes=[pltpu.VMEM((N, H + 2 * PAD, W + 2 * PAD, cb), cdt)],
        compiler_params=pltpu.CompilerParams(
            dimension_semantics=("parallel",),          # megacore-shardable on v7x
            vmem_limit_bytes=32 * 1024 * 1024,
        ),
    )(x_nhwc, w_taps, g4, b4)


def dwconv_bn_nchw(x_nchw, w_oihw, gamma, beta):
    """Drop-in NCHW adapter (PyTorch convention). In a real model keep NHWC
    end-to-end and call dwconv_bn_nhwc directly to avoid these two boundary
    transposes (full HBM round trips around a small kernel)."""
    x_nhwc = jnp.transpose(x_nchw, (0, 2, 3, 1))
    out_nhwc = dwconv_bn_nhwc(x_nhwc, w_oihw, gamma, beta)
    return jnp.transpose(out_nhwc, (0, 3, 1, 2))


def reference_nchw(x_nchw, w_oihw, gamma, beta):
    """Pure-JAX reference (depthwise conv + training-mode BN), NCHW."""
    C = x_nchw.shape[1]
    conv = jax.lax.conv_general_dilated(
        x_nchw, w_oihw,
        window_strides=(1, 1),
        padding=((PAD, PAD), (PAD, PAD)),
        feature_group_count=C,
        dimension_numbers=("NCHW", "OIHW", "NCHW"),
    )
    mean = conv.mean(axis=(0, 2, 3), keepdims=True)
    var = ((conv - mean) ** 2).mean(axis=(0, 2, 3), keepdims=True)
    g = gamma.reshape(1, C, 1, 1)
    b = beta.reshape(1, C, 1, 1)
    return (conv - mean) * jax.lax.rsqrt(var + EPS) * g + b


# TODO(synk): BatchNorm2d running_mean/running_var buffer updates (momentum=0.1)
# are module state side effects and do not affect the returned tensor; not emitted.

if __name__ == "__main__":
    # Small shapes consistent with the module (depthwise: groups == channels).
    # Original: (1, 480, 28, 28); here: batch=2, channels=8, spatial=16.
    N, C, H, W = 2, 8, 16, 16

    key = jax.random.PRNGKey(0)
    kx, kw_, kg, kb = jax.random.split(key, 4)
    x = jax.random.normal(kx, (N, C, H, W), dtype=jnp.float32)
    w = jax.random.normal(kw_, (C, 1, KH, KW), dtype=jnp.float32) * 0.1
    gamma = 1.0 + 0.1 * jax.random.normal(kg, (C,), dtype=jnp.float32)
    beta = 0.1 * jax.random.normal(kb, (C,), dtype=jnp.float32)

    out = dwconv_bn_nchw(x, w, gamma, beta)
    out = jax.block_until_ready(out)

    ref = reference_nchw(x, w, gamma, beta)
    assert out.shape == (N, C, H, W)
    assert jnp.allclose(out, ref, atol=1e-4, rtol=1e-4), "mismatch vs reference"

    print("KERNEL_OK")
</pallas_src>

<mosaic_0001>
module attributes {stable_mosaic.version = 11 : i64} {
  func.func @_dwconv_bn_kernel(%arg0: i32, %arg1: memref<2x16x16x8xf32, #tpu.memory_space<vmem>>, %arg2: memref<25x1x8xf32, #tpu.memory_space<vmem>>, %arg3: memref<1x1x1x8xf32, #tpu.memory_space<vmem>>, %arg4: memref<1x1x1x8xf32, #tpu.memory_space<vmem>>, %arg5: memref<2x16x16x8xf32, #tpu.memory_space<vmem>>, %arg6: memref<2x20x20x8xf32, #tpu.memory_space<vmem>>) attributes {dimension_semantics = [#tpu.dimension_semantics<parallel>], iteration_bounds = array<i64: 1>, scalar_prefetch = 0 : i64, scratch_operands = 1 : i64, tpu.core_type = #tpu.core_type<tc>, window_params = [{transform_indices = @transform_0, window_bounds = array<i64: 2, 16, 16, 8>}, {transform_indices = @transform_1, window_bounds = array<i64: 25, 1, 8>}, {transform_indices = @transform_2, window_bounds = array<i64: 1, 1, 1, 8>}, {transform_indices = @transform_3, window_bounds = array<i64: 1, 1, 1, 8>}, {transform_indices = @transform_4, window_bounds = array<i64: 2, 16, 16, 8>}]} {
    %cst = arith.constant 0.000000e+00 : f32
    %0 = vector.broadcast %cst : f32 to vector<2x2x20x8xf32>
    %c0 = arith.constant 0 : index
    %c0_0 = arith.constant 0 : index
    %c0_1 = arith.constant 0 : index
    %c0_2 = arith.constant 0 : index
    %1 = vector.load %arg6[%c0, %c0_0, %c0_1, %c0_2] : memref<2x20x20x8xf32, #tpu.memory_space<vmem>>, vector<2x2x20x8xf32>
    tpu.vector_store %arg6[%c0, %c0_0, %c0_1, %c0_2], %0 {strides = array<i32>} : memref<2x20x20x8xf32, #tpu.memory_space<vmem>>, vector<2x2x20x8xf32>,
    %cst_3 = arith.constant 0.000000e+00 : f32
    %2 = vector.broadcast %cst_3 : f32 to vector<2x2x20x8xf32>
    %c0_4 = arith.constant 0 : index
    %c18 = arith.constant 18 : index
    %c0_5 = arith.constant 0 : index
    %c0_6 = arith.constant 0 : index
    %3 = vector.load %arg6[%c0_4, %c18, %c0_5, %c0_6] : memref<2x20x20x8xf32, #tpu.memory_space<vmem>>, vector<2x2x20x8xf32>
    tpu.vector_store %arg6[%c0_4, %c18, %c0_5, %c0_6], %2 {strides = array<i32>} : memref<2x20x20x8xf32, #tpu.memory_space<vmem>>, vector<2x2x20x8xf32>,
    %cst_7 = arith.constant 0.000000e+00 : f32
    %4 = vector.broadcast %cst_7 : f32 to vector<2x16x2x8xf32>
    %c0_8 = arith.constant 0 : index
    %c2 = arith.constant 2 : index
    %c0_9 = arith.constant 0 : index
    %c0_10 = arith.constant 0 : index
    %5 = vector.load %arg6[%c0_8, %c2, %c0_9, %c0_10] : memref<2x20x20x8xf32, #tpu.memory_space<vmem>>, vector<2x16x2x8xf32>
    tpu.vector_store %arg6[%c0_8, %c2, %c0_9, %c0_10], %4 {strides = array<i32>} : memref<2x20x20x8xf32, #tpu.memory_space<vmem>>, vector<2x16x2x8xf32>,
    %cst_11 = arith.constant 0.000000e+00 : f32
    %6 = vector.broadcast %cst_11 : f32 to vector<2x16x2x8xf32>
    %c0_12 = arith.constant 0 : index
    %c2_13 = arith.constant 2 : index
    %c18_14 = arith.constant 18 : index
    %c0_15 = arith.constant 0 : index
    %7 = vector.load %arg6[%c0_12, %c2_13, %c18_14, %c0_15] : memref<2x20x20x8xf32, #tpu.memory_space<vmem>>, vector<2x16x2x8xf32>
    tpu.vector_store %arg6[%c0_12, %c2_13, %c18_14, %c0_15], %6 {strides = array<i32>} : memref<2x20x20x8xf32, #tpu.memory_space<vmem>>, vector<2x16x2x8xf32>,
    %c0_16 = arith.constant 0 : index
    %c0_17 = arith.constant 0 : index
    %c0_18 = arith.constant 0 : index
    %c0_19 = arith.constant 0 : index
    %8 = vector.load %arg1[%c0_16, %c0_17, %c0_18, %c0_19] : memref<2x16x16x8xf32, #tpu.memory_space<vmem>>, vector<2x16x16x8xf32>
    %c0_20 = arith.constant 0 : index
    %c2_21 = arith.constant 2 : index
    %c2_22 = arith.constant 2 : index
    %c0_23 = arith.constant 0 : index
    %9 = vector.load %arg6[%c0_20, %c2_21, %c2_22, %c0_23] : memref<2x20x20x8xf32, #tpu.memory_space<vmem>>, vector<2x16x16x8xf32>
    tpu.vector_store %arg6[%c0_20, %c2_21, %c2_22, %c0_23], %8 {strides = array<i32>} : memref<2x20x20x8xf32, #tpu.memory_space<vmem>>, vector<2x16x16x8xf32>,
    %cst_24 = arith.constant 0.000000e+00 : f32
    %10 = vector.broadcast %cst_24 : f32 to vector<2x16x16x8xf32>
    %c0_25 = arith.constant 0 : index
    %c0_26 = arith.constant 0 : index
    %c0_27 = arith.constant 0 : index
    %c0_28 = arith.constant 0 : index
    %11 = vector.load %arg6[%c0_25, %c0_26, %c0_27, %c0_28] : memref<2x20x20x8xf32, #tpu.memory_space<vmem>>, vector<2x20x16x8xf32>
    %12 = vector.extract_strided_slice %11 {offsets = [0, 0, 0, 0], sizes = [2, 16, 16, 8], strides = [1, 1, 1, 1]} : vector<2x20x16x8xf32> to vector<2x16x16x8xf32>
    %c0_29 = arith.constant 0 : index
    %c0_30 = arith.constant 0 : index
    %c0_31 = arith.constant 0 : index
    %13 = vector.load %arg2[%c0_29, %c0_30, %c0_31] : memref<25x1x8xf32, #tpu.memory_space<vmem>>, vector<1x1x8xf32>
    %14 = vector.shape_cast %13 : vector<1x1x8xf32> to vector<1x8xf32>
    %15 = vector.shape_cast %14 : vector<1x8xf32> to vector<1x1x1x8xf32>
    %16 = vector.broadcast %15 : vector<1x1x1x8xf32> to vector<2x16x16x8xf32>
    %17 = arith.mulf %12, %16 : vector<2x16x16x8xf32>
    %18 = vector.extract_strided_slice %11 {offsets = [0, 1, 0, 0], sizes = [2, 16, 16, 8], strides = [1, 1, 1, 1]} : vector<2x20x16x8xf32> to vector<2x16x16x8xf32>
    %c5 = arith.constant 5 : index
    %c0_32 = arith.constant 0 : index
    %c0_33 = arith.constant 0 : index
    %19 = vector.load %arg2[%c5, %c0_32, %c0_33] : memref<25x1x8xf32, #tpu.memory_space<vmem>>, vector<1x1x8xf32>
    %20 = vector.shape_cast %19 : vector<1x1x8xf32> to vector<1x8xf32>
    %21 = vector.shape_cast %20 : vector<1x8xf32> to vector<1x1x1x8xf32>
    %22 = vector.broadcast %21 : vector<1x1x1x8xf32> to vector<2x16x16x8xf32>
    %23 = arith.mulf %18, %22 : vector<2x16x16x8xf32>
    %24 = arith.addf %17, %23 : vector<2x16x16x8xf32>
    %25 = vector.extract_strided_slice %11 {offsets = [0, 2, 0, 0], sizes = [2, 16, 16, 8], strides = [1, 1, 1, 1]} : vector<2x20x16x8xf32> to vector<2x16x16x8xf32>
    %c10 = arith.constant 10 : index
    %c0_34 = arith.constant 0 : index
    %c0_35 = arith.constant 0 : index
    %26 = vector.load %arg2[%c10, %c0_34, %c0_35] : memref<25x1x8xf32, #tpu.memory_space<vmem>>, vector<1x1x8xf32>
    %27 = vector.shape_cast %26 : vector<1x1x8xf32> to vector<1x8xf32>
    %28 = vector.shape_cast %27 : vector<1x8xf32> to vector<1x1x1x8xf32>
    %29 = vector.broadcast %28 : vector<1x1x1x8xf32> to vector<2x16x16x8xf32>
    %30 = arith.mulf %25, %29 : vector<2x16x16x8xf32>
    %31 = arith.addf %24, %30 : vector<2x16x16x8xf32>
    %32 = vector.extract_strided_slice %11 {offsets = [0, 3, 0, 0], sizes = [2, 16, 16, 8], strides = [1, 1, 1, 1]} : vector<2x20x16x8xf32> to vector<2x16x16x8xf32>
    %c15 = arith.constant 15 : index
    %c0_36 = arith.constant 0 : index
    %c0_37 = arith.constant 0 : index
    %33 = vector.load %arg2[%c15, %c0_36, %c0_37] : memref<25x1x8xf32, #tpu.memory_space<vmem>>, vector<1x1x8xf32>
    %34 = vector.shape_cast %33 : vector<1x1x8xf32> to vector<1x8xf32>
    %35 = vector.shape_cast %34 : vector<1x8xf32> to vector<1x1x1x8xf32>
    %36 = vector.broadcast %35 : vector<1x1x1x8xf32> to vector<2x16x16x8xf32>
    %37 = arith.mulf %32, %36 : vector<2x16x16x8xf32>
    %38 = arith.addf %31, %37 : vector<2x16x16x8xf32>
    %39 = vector.extract_strided_slice %11 {offsets = [0, 4, 0, 0], sizes = [2, 16, 16, 8], strides = [1, 1, 1, 1]} : vector<2x20x16x8xf32> to vector<2x16x16x8xf32>
    %c20 = arith.constant 20 : index
    %c0_38 = arith.constant 0 : index
    %c0_39 = arith.constant 0 : index
    %40 = vector.load %arg2[%c20, %c0_38, %c0_39] : memref<25x1x8xf32, #tpu.memory_space<vmem>>, vector<1x1x8xf32>
    %41 = vector.shape_cast %40 : vector<1x1x8xf32> to vector<1x8xf32>
    %42 = vector.shape_cast %41 : vector<1x8xf32> to vector<1x1x1x8xf32>
    %43 = vector.broadcast %42 : vector<1x1x1x8xf32> to vector<2x16x16x8xf32>
    %44 = arith.mulf %39, %43 : vector<2x16x16x8xf32>
    %45 = arith.addf %38, %44 : vector<2x16x16x8xf32>
    %46 = arith.addf %10, %45 : vector<2x16x16x8xf32>
    %c0_40 = arith.constant 0 : index
    %c0_41 = arith.constant 0 : index
    %c1 = arith.constant 1 : index
    %c0_42 = arith.constant 0 : index
    %47 = vector.load %arg6[%c0_40, %c0_41, %c1, %c0_42] : memref<2x20x20x8xf32, #tpu.memory_space<vmem>>, vector<2x20x16x8xf32>
    %48 = vector.extract_strided_slice %47 {offsets = [0, 0, 0, 0], sizes = [2, 16, 16, 8], strides = [1, 1, 1, 1]} : vector<2x20x16x8xf32> to vector<2x16x16x8xf32>
    %c1_43 = arith.constant 1 : index
    %c0_44 = arith.constant 0 : index
    %c0_45 = arith.constant 0 : index
    %49 = vector.load %arg2[%c1_43, %c0_44, %c0_45] : memref<25x1x8xf32, #tpu.memory_space<vmem>>, vector<1x1x8xf32>
    %50 = vector.shape_cast %49 : vector<1x1x8xf32> to vector<1x8xf32>
    %51 = vector.shape_cast %50 : vector<1x8xf32> to vector<1x1x1x8xf32>
    %52 = vector.broadcast %51 : vector<1x1x1x8xf32> to vector<2x16x16x8xf32>
    %53 = arith.mulf %48, %52 : vector<2x16x16x8xf32>
    %54 = vector.extract_strided_slice %47 {offsets = [0, 1, 0, 0], sizes = [2, 16, 16, 8], strides = [1, 1, 1, 1]} : vector<2x20x16x8xf32> to vector<2x16x16x8xf32>
    %c6 = arith.constant 6 : index
    %c0_46 = arith.constant 0 : index
    %c0_47 = arith.constant 0 : index
    %55 = vector.load %arg2[%c6, %c0_46, %c0_47] : memref<25x1x8xf32, #tpu.memory_space<vmem>>, vector<1x1x8xf32>
    %56 = vector.shape_cast %55 : vector<1x1x8xf32> to vector<1x8xf32>
    %57 = vector.shape_cast %56 : vector<1x8xf32> to vector<1x1x1x8xf32>
    %58 = vector.broadcast %57 : vector<1x1x1x8xf32> to vector<2x16x16x8xf32>
    %59 = arith.mulf %54, %58 : vector<2x16x16x8xf32>
    %60 = arith.addf %53, %59 : vector<2x16x16x8xf32>
    %61 = vector.extract_strided_slice %47 {offsets = [0, 2, 0, 0], sizes = [2, 16, 16, 8], strides = [1, 1, 1, 1]} : vector<2x20x16x8xf32> to vector<2x16x16x8xf32>
    %c11 = arith.constant 11 : index
    %c0_48 = arith.constant 0 : index
    %c0_49 = arith.constant 0 : index
    %62 = vector.load %arg2[%c11, %c0_48, %c0_49] : memref<25x1x8xf32, #tpu.memory_space<vmem>>, vector<1x1x8xf32>
    %63 = vector.shape_cast %62 : vector<1x1x8xf32> to vector<1x8xf32>
    %64 = vector.shape_cast %63 : vector<1x8xf32> to vector<1x1x1x8xf32>
    %65 = vector.broadcast %64 : vector<1x1x1x8xf32> to vector<2x16x16x8xf32>
    %66 = arith.mulf %61, %65 : vector<2x16x16x8xf32>
    %67 = arith.addf %60, %66 : vector<2x16x16x8xf32>
    %68 = vector.extract_strided_slice %47 {offsets = [0, 3, 0, 0], sizes = [2, 16, 16, 8], strides = [1, 1, 1, 1]} : vector<2x20x16x8xf32> to vector<2x16x16x8xf32>
    %c16 = arith.constant 16 : index
    %c0_50 = arith.constant 0 : index
    %c0_51 = arith.constant 0 : index
    %69 = vector.load %arg2[%c16, %c0_50, %c0_51] : memref<25x1x8xf32, #tpu.memory_space<vmem>>, vector<1x1x8xf32>
    %70 = vector.shape_cast %69 : vector<1x1x8xf32> to vector<1x8xf32>
    %71 = vector.shape_cast %70 : vector<1x8xf32> to vector<1x1x1x8xf32>
    %72 = vector.broadcast %71 : vector<1x1x1x8xf32> to vector<2x16x16x8xf32>
    %73 = arith.mulf %68, %72 : vector<2x16x16x8xf32>
    %74 = arith.addf %67, %73 : vector<2x16x16x8xf32>
    %75 = vector.extract_strided_slice %47 {offsets = [0, 4, 0, 0], sizes = [2, 16, 16, 8], strides = [1, 1, 1, 1]} : vector<2x20x16x8xf32> to vector<2x16x16x8xf32>
    %c21 = arith.constant 21 : index
    %c0_52 = arith.constant 0 : index
    %c0_53 = arith.constant 0 : index
    %76 = vector.load %arg2[%c21, %c0_52, %c0_53] : memref<25x1x8xf32, #tpu.memory_space<vmem>>, vector<1x1x8xf32>
    %77 = vector.shape_cast %76 : vector<1x1x8xf32> to vector<1x8xf32>
    %78 = vector.shape_cast %77 : vector<1x8xf32> to vector<1x1x1x8xf32>
    %79 = vector.broadcast %78 : vector<1x1x1x8xf32> to vector<2x16x16x8xf32>
    %80 = arith.mulf %75, %79 : vector<2x16x16x8xf32>
    %81 = arith.addf %74, %80 : vector<2x16x16x8xf32>
    %82 = arith.addf %46, %81 : vector<2x16x16x8xf32>
    %c0_54 = arith.constant 0 : index
    %c0_55 = arith.constant 0 : index
    %c2_56 = arith.constant 2 : index
    %c0_57 = arith.constant 0 : index
    %83 = vector.load %arg6[%c0_54, %c0_55, %c2_56, %c0_57] : memref<2x20x20x8xf32, #tpu.memory_space<vmem>>, vector<2x20x16x8xf32>
    %84 = vector.extract_strided_slice %83 {offsets = [0, 0, 0, 0], sizes = [2, 16, 16, 8], strides = [1, 1, 1, 1]} : vector<2x20x16x8xf32> to vector<2x16x16x8xf32>
    %c2_58 = arith.constant 2 : index
    %c0_59 = arith.constant 0 : index
    %c0_60 = arith.constant 0 : index
    %85 = vector.load %arg2[%c2_58, %c0_59, %c0_60] : memref<25x1x8xf32, #tpu.memory_space<vmem>>, vector<1x1x8xf32>
    %86 = vector.shape_cast %85 : vector<1x1x8xf32> to vector<1x8xf32>
    %87 = vector.shape_cast %86 : vector<1x8xf32> to vector<1x1x1x8xf32>
    %88 = vector.broadcast %87 : vector<1x1x1x8xf32> to vector<2x16x16x8xf32>
    %89 = arith.mulf %84, %88 : vector<2x16x16x8xf32>
    %90 = vector.extract_strided_slice %83 {offsets = [0, 1, 0, 0], sizes = [2, 16, 16, 8], strides = [1, 1, 1, 1]} : vector<2x20x16x8xf32> to vector<2x16x16x8xf32>
    %c7 = arith.constant 7 : index
    %c0_61 = arith.constant 0 : index
    %c0_62 = arith.constant 0 : index
    %91 = vector.load %arg2[%c7, %c0_61, %c0_62] : memref<25x1x8xf32, #tpu.memory_space<vmem>>, vector<1x1x8xf32>
    %92 = vector.shape_cast %91 : vector<1x1x8xf32> to vector<1x8xf32>
    %93 = vector.shape_cast %92 : vector<1x8xf32> to vector<1x1x1x8xf32>
    %94 = vector.broadcast %93 : vector<1x1x1x8xf32> to vector<2x16x16x8xf32>
    %95 = arith.mulf %90, %94 : vector<2x16x16x8xf32>
    %96 = arith.addf %89, %95 : vector<2x16x16x8xf32>
    %97 = vector.extract_strided_slice %83 {offsets = [0, 2, 0, 0], sizes = [2, 16, 16, 8], strides = [1, 1, 1, 1]} : vector<2x20x16x8xf32> to vector<2x16x16x8xf32>
    %c12 = arith.constant 12 : index
    %c0_63 = arith.constant 0 : index
    %c0_64 = arith.constant 0 : index
    %98 = vector.load %arg2[%c12, %c0_63, %c0_64] : memref<25x1x8xf32, #tpu.memory_space<vmem>>, vector<1x1x8xf32>
    %99 = vector.shape_cast %98 : vector<1x1x8xf32> to vector<1x8xf32>
    %100 = vector.shape_cast %99 : vector<1x8xf32> to vector<1x1x1x8xf32>
    %101 = vector.broadcast %100 : vector<1x1x1x8xf32> to vector<2x16x16x8xf32>
    %102 = arith.mulf %97, %101 : vector<2x16x16x8xf32>
    %103 = arith.addf %96, %102 : vector<2x16x16x8xf32>
    %104 = vector.extract_strided_slice %83 {offsets = [0, 3, 0, 0], sizes = [2, 16, 16, 8], strides = [1, 1, 1, 1]} : vector<2x20x16x8xf32> to vector<2x16x16x8xf32>
    %c17 = arith.constant 17 : index
    %c0_65 = arith.constant 0 : index
    %c0_66 = arith.constant 0 : index
    %105 = vector.load %arg2[%c17, %c0_65, %c0_66] : memref<25x1x8xf32, #tpu.memory_space<vmem>>, vector<1x1x8xf32>
    %106 = vector.shape_cast %105 : vector<1x1x8xf32> to vector<1x8xf32>
    %107 = vector.shape_cast %106 : vector<1x8xf32> to vector<1x1x1x8xf32>
    %108 = vector.broadcast %107 : vector<1x1x1x8xf32> to vector<2x16x16x8xf32>
    %109 = arith.mulf %104, %108 : vector<2x16x16x8xf32>
    %110 = arith.addf %103, %109 : vector<2x16x16x8xf32>
    %111 = vector.extract_strided_slice %83 {offsets = [0, 4, 0, 0], sizes = [2, 16, 16, 8], strides = [1, 1, 1, 1]} : vector<2x20x16x8xf32> to vector<2x16x16x8xf32>
    %c22 = arith.constant 22 : index
    %c0_67 = arith.constant 0 : index
    %c0_68 = arith.constant 0 : index
    %112 = vector.load %arg2[%c22, %c0_67, %c0_68] : memref<25x1x8xf32, #tpu.memory_space<vmem>>, vector<1x1x8xf32>
    %113 = vector.shape_cast %112 : vector<1x1x8xf32> to vector<1x8xf32>
    %114 = vector.shape_cast %113 : vector<1x8xf32> to vector<1x1x1x8xf32>
    %115 = vector.broadcast %114 : vector<1x1x1x8xf32> to vector<2x16x16x8xf32>
    %116 = arith.mulf %111, %115 : vector<2x16x16x8xf32>
    %117 = arith.addf %110, %116 : vector<2x16x16x8xf32>
    %118 = arith.addf %82, %117 : vector<2x16x16x8xf32>
    %c0_69 = arith.constant 0 : index
    %c0_70 = arith.constant 0 : index
    %c3 = arith.constant 3 : index
    %c0_71 = arith.constant 0 : index
    %119 = vector.load %arg6[%c0_69, %c0_70, %c3, %c0_71] : memref<2x20x20x8xf32, #tpu.memory_space<vmem>>, vector<2x20x16x8xf32>
    %120 = vector.extract_strided_slice %119 {offsets = [0, 0, 0, 0], sizes = [2, 16, 16, 8], strides = [1, 1, 1, 1]} : vector<2x20x16x8xf32> to vector<2x16x16x8xf32>
    %c3_72 = arith.constant 3 : index
    %c0_73 = arith.constant 0 : index
    %c0_74 = arith.constant 0 : index
    %121 = vector.load %arg2[%c3_72, %c0_73, %c0_74] : memref<25x1x8xf32, #tpu.memory_space<vmem>>, vector<1x1x8xf32>
    %122 = vector.shape_cast %121 : vector<1x1x8xf32> to vector<1x8xf32>
    %123 = vector.shape_cast %122 : vector<1x8xf32> to vector<1x1x1x8xf32>
    %124 = vector.broadcast %123 : vector<1x1x1x8xf32> to vector<2x16x16x8xf32>
    %125 = arith.mulf %120, %124 : vector<2x16x16x8xf32>
    %126 = vector.extract_strided_slice %119 {offsets = [0, 1, 0, 0], sizes = [2, 16, 16, 8], strides = [1, 1, 1, 1]} : vector<2x20x16x8xf32> to vector<2x16x16x8xf32>
    %c8 = arith.constant 8 : index
    %c0_75 = arith.constant 0 : index
    %c0_76 = arith.constant 0 : index
    %127 = vector.load %arg2[%c8, %c0_75, %c0_76] : memref<25x1x8xf32, #tpu.memory_space<vmem>>, vector<1x1x8xf32>
    %128 = vector.shape_cast %127 : vector<1x1x8xf32> to vector<1x8xf32>
    %129 = vector.shape_cast %128 : vector<1x8xf32> to vector<1x1x1x8xf32>
    %130 = vector.broadcast %129 : vector<1x1x1x8xf32> to vector<2x16x16x8xf32>
    %131 = arith.mulf %126, %130 : vector<2x16x16x8xf32>
    %132 = arith.addf %125, %131 : vector<2x16x16x8xf32>
    %133 = vector.extract_strided_slice %119 {offsets = [0, 2, 0, 0], sizes = [2, 16, 16, 8], strides = [1, 1, 1, 1]} : vector<2x20x16x8xf32> to vector<2x16x16x8xf32>
    %c13 = arith.constant 13 : index
    %c0_77 = arith.constant 0 : index
    %c0_78 = arith.constant 0 : index
    %134 = vector.load %arg2[%c13, %c0_77, %c0_78] : memref<25x1x8xf32, #tpu.memory_space<vmem>>, vector<1x1x8xf32>
    %135 = vector.shape_cast %134 : vector<1x1x8xf32> to vector<1x8xf32>
    %136 = vector.shape_cast %135 : vector<1x8xf32> to vector<1x1x1x8xf32>
    %137 = vector.broadcast %136 : vector<1x1x1x8xf32> to vector<2x16x16x8xf32>
    %138 = arith.mulf %133, %137 : vector<2x16x16x8xf32>
    %139 = arith.addf %132, %138 : vector<2x16x16x8xf32>
    %140 = vector.extract_strided_slice %119 {offsets = [0, 3, 0, 0], sizes = [2, 16, 16, 8], strides = [1, 1, 1, 1]} : vector<2x20x16x8xf32> to vector<2x16x16x8xf32>
    %c18_79 = arith.constant 18 : index
    %c0_80 = arith.constant 0 : index
    %c0_81 = arith.constant 0 : index
    %141 = vector.load %arg2[%c18_79, %c0_80, %c0_81] : memref<25x1x8xf32, #tpu.memory_space<vmem>>, vector<1x1x8xf32>
    %142 = vector.shape_cast %141 : vector<1x1x8xf32> to vector<1x8xf32>
    %143 = vector.shape_cast %142 : vector<1x8xf32> to vector<1x1x1x8xf32>
    %144 = vector.broadcast %143 : vector<1x1x1x8xf32> to vector<2x16x16x8xf32>
    %145 = arith.mulf %140, %144 : vector<2x16x16x8xf32>
    %146 = arith.addf %139, %145 : vector<2x16x16x8xf32>
    %147 = vector.extract_strided_slice %119 {offsets = [0, 4, 0, 0], sizes = [2, 16, 16, 8], strides = [1, 1, 1, 1]} : vector<2x20x16x8xf32> to vector<2x16x16x8xf32>
    %c23 = arith.constant 23 : index
    %c0_82 = arith.constant 0 : index
    %c0_83 = arith.constant 0 : index
    %148 = vector.load %arg2[%c23, %c0_82, %c0_83] : memref<25x1x8xf32, #tpu.memory_space<vmem>>, vector<1x1x8xf32>
    %149 = vector.shape_cast %148 : vector<1x1x8xf32> to vector<1x8xf32>
    %150 = vector.shape_cast %149 : vector<1x8xf32> to vector<1x1x1x8xf32>
    %151 = vector.broadcast %150 : vector<1x1x1x8xf32> to vector<2x16x16x8xf32>
    %152 = arith.mulf %147, %151 : vector<2x16x16x8xf32>
    %153 = arith.addf %146, %152 : vector<2x16x16x8xf32>
    %154 = arith.addf %118, %153 : vector<2x16x16x8xf32>
    %c0_84 = arith.constant 0 : index
    %c0_85 = arith.constant 0 : index
    %c4 = arith.constant 4 : index
    %c0_86 = arith.constant 0 : index
    %155 = vector.load %arg6[%c0_84, %c0_85, %c4, %c0_86] : memref<2x20x20x8xf32, #tpu.memory_space<vmem>>, vector<2x20x16x8xf32>
    %156 = vector.extract_strided_slice %155 {offsets = [0, 0, 0, 0], sizes = [2, 16, 16, 8], strides = [1, 1, 1, 1]} : vector<2x20x16x8xf32> to vector<2x16x16x8xf32>
    %c4_87 = arith.constant 4 : index
    %c0_88 = arith.constant 0 : index
    %c0_89 = arith.constant 0 : index
    %157 = vector.load %arg2[%c4_87, %c0_88, %c0_89] : memref<25x1x8xf32, #tpu.memory_space<vmem>>, vector<1x1x8xf32>
    %158 = vector.shape_cast %157 : vector<1x1x8xf32> to vector<1x8xf32>
    %159 = vector.shape_cast %158 : vector<1x8xf32> to vector<1x1x1x8xf32>
    %160 = vector.broadcast %159 : vector<1x1x1x8xf32> to vector<2x16x16x8xf32>
    %161 = arith.mulf %156, %160 : vector<2x16x16x8xf32>
    %162 = vector.extract_strided_slice %155 {offsets = [0, 1, 0, 0], sizes = [2, 16, 16, 8], strides = [1, 1, 1, 1]} : vector<2x20x16x8xf32> to vector<2x16x16x8xf32>
    %c9 = arith.constant 9 : index
    %c0_90 = arith.constant 0 : index
    %c0_91 = arith.constant 0 : index
    %163 = vector.load %arg2[%c9, %c0_90, %c0_91] : memref<25x1x8xf32, #tpu.memory_space<vmem>>, vector<1x1x8xf32>
    %164 = vector.shape_cast %163 : vector<1x1x8xf32> to vector<1x8xf32>
    %165 = vector.shape_cast %164 : vector<1x8xf32> to vector<1x1x1x8xf32>
    %166 = vector.broadcast %165 : vector<1x1x1x8xf32> to vector<2x16x16x8xf32>
    %167 = arith.mulf %162, %166 : vector<2x16x16x8xf32>
    %168 = arith.addf %161, %167 : vector<2x16x16x8xf32>
    %169 = vector.extract_strided_slice %155 {offsets = [0, 2, 0, 0], sizes = [2, 16, 16, 8], strides = [1, 1, 1, 1]} : vector<2x20x16x8xf32> to vector<2x16x16x8xf32>
    %c14 = arith.constant 14 : index
    %c0_92 = arith.constant 0 : index
    %c0_93 = arith.constant 0 : index
    %170 = vector.load %arg2[%c14, %c0_92, %c0_93] : memref<25x1x8xf32, #tpu.memory_space<vmem>>, vector<1x1x8xf32>
    %171 = vector.shape_cast %170 : vector<1x1x8xf32> to vector<1x8xf32>
    %172 = vector.shape_cast %171 : vector<1x8xf32> to vector<1x1x1x8xf32>
    %173 = vector.broadcast %172 : vector<1x1x1x8xf32> to vector<2x16x16x8xf32>
    %174 = arith.mulf %169, %173 : vector<2x16x16x8xf32>
    %175 = arith.addf %168, %174 : vector<2x16x16x8xf32>
    %176 = vector.extract_strided_slice %155 {offsets = [0, 3, 0, 0], sizes = [2, 16, 16, 8], strides = [1, 1, 1, 1]} : vector<2x20x16x8xf32> to vector<2x16x16x8xf32>
    %c19 = arith.constant 19 : index
    %c0_94 = arith.constant 0 : index
    %c0_95 = arith.constant 0 : index
    %177 = vector.load %arg2[%c19, %c0_94, %c0_95] : memref<25x1x8xf32, #tpu.memory_space<vmem>>, vector<1x1x8xf32>
    %178 = vector.shape_cast %177 : vector<1x1x8xf32> to vector<1x8xf32>
    %179 = vector.shape_cast %178 : vector<1x8xf32> to vector<1x1x1x8xf32>
    %180 = vector.broadcast %179 : vector<1x1x1x8xf32> to vector<2x16x16x8xf32>
    %181 = arith.mulf %176, %180 : vector<2x16x16x8xf32>
    %182 = arith.addf %175, %181 : vector<2x16x16x8xf32>
    %183 = vector.extract_strided_slice %155 {offsets = [0, 4, 0, 0], sizes = [2, 16, 16, 8], strides = [1, 1, 1, 1]} : vector<2x20x16x8xf32> to vector<2x16x16x8xf32>
    %c24 = arith.constant 24 : index
    %c0_96 = arith.constant 0 : index
    %c0_97 = arith.constant 0 : index
    %184 = vector.load %arg2[%c24, %c0_96, %c0_97] : memref<25x1x8xf32, #tpu.memory_space<vmem>>, vector<1x1x8xf32>
    %185 = vector.shape_cast %184 : vector<1x1x8xf32> to vector<1x8xf32>
    %186 = vector.shape_cast %185 : vector<1x8xf32> to vector<1x1x1x8xf32>
    %187 = vector.broadcast %186 : vector<1x1x1x8xf32> to vector<2x16x16x8xf32>
    %188 = arith.mulf %183, %187 : vector<2x16x16x8xf32>
    %189 = arith.addf %182, %188 : vector<2x16x16x8xf32>
    %190 = arith.addf %154, %189 : vector<2x16x16x8xf32>
    %cst_98 = arith.constant dense<0.000000e+00> : vector<8xf32>
    %191 = vector.multi_reduction <add>, %190, %cst_98 [0, 1, 2] : vector<2x16x16x8xf32> to vector<8xf32>
    %192 = vector.shape_cast %191 : vector<8xf32> to vector<1x1x1x8xf32>
    %cst_99 = arith.constant 0.001953125 : f32
    %193 = vector.broadcast %cst_99 : f32 to vector<1x1x1x8xf32>
    %194 = arith.mulf %192, %193 : vector<1x1x1x8xf32>
    %195 = vector.broadcast %194 : vector<1x1x1x8xf32> to vector<2x16x16x8xf32>
    %196 = arith.subf %190, %195 : vector<2x16x16x8xf32>
    %197 = arith.mulf %196, %196 : vector<2x16x16x8xf32>
    %cst_100 = arith.constant dense<0.000000e+00> : vector<8xf32>
    %198 = vector.multi_reduction <add>, %197, %cst_100 [0, 1, 2] : vector<2x16x16x8xf32> to vector<8xf32>
    %199 = vector.shape_cast %198 : vector<8xf32> to vector<1x1x1x8xf32>
    %cst_101 = arith.constant 0.001953125 : f32
    %200 = vector.broadcast %cst_101 : f32 to vector<1x1x1x8xf32>
    %201 = arith.mulf %199, %200 : vector<1x1x1x8xf32>
    %cst_102 = arith.constant 9.99999974E-6 : f32
    %202 = vector.broadcast %cst_102 : f32 to vector<1x1x1x8xf32>
    %203 = arith.addf %201, %202 : vector<1x1x1x8xf32>
    %204 = math.rsqrt %203 : vector<1x1x1x8xf32>
    %c0_103 = arith.constant 0 : index
    %c0_104 = arith.constant 0 : index
    %c0_105 = arith.constant 0 : index
    %c0_106 = arith.constant 0 : index
    %205 = vector.load %arg3[%c0_103, %c0_104, %c0_105, %c0_106] : memref<1x1x1x8xf32, #tpu.memory_space<vmem>>, vector<1x1x1x8xf32>
    %206 = arith.mulf %205, %204 : vector<1x1x1x8xf32>
    %207 = vector.broadcast %206 : vector<1x1x1x8xf32> to vector<2x16x16x8xf32>
    %208 = arith.mulf %196, %207 : vector<2x16x16x8xf32>
    %c0_107 = arith.constant 0 : index
    %c0_108 = arith.constant 0 : index
    %c0_109 = arith.constant 0 : index
    %c0_110 = arith.constant 0 : index
    %209 = vector.load %arg4[%c0_107, %c0_108, %c0_109, %c0_110] : memref<1x1x1x8xf32, #tpu.memory_space<vmem>>, vector<1x1x1x8xf32>
    %210 = vector.broadcast %209 : vector<1x1x1x8xf32> to vector<2x16x16x8xf32>
    %211 = arith.addf %208, %210 : vector<2x16x16x8xf32>
    %c0_111 = arith.constant 0 : index
    %c0_112 = arith.constant 0 : index
    %c0_113 = arith.constant 0 : index
    %c0_114 = arith.constant 0 : index
    %212 = vector.load %arg5[%c0_111, %c0_112, %c0_113, %c0_114] : memref<2x16x16x8xf32, #tpu.memory_space<vmem>>, vector<2x16x16x8xf32>
    tpu.vector_store %arg5[%c0_111, %c0_112, %c0_113, %c0_114], %211 {strides = array<i32>} : memref<2x16x16x8xf32, #tpu.memory_space<vmem>>, vector<2x16x16x8xf32>,
    return
  }
  func.func @transform_0(%arg0: i32) -> (i32, i32, i32, i32) {
    %c0_i32 = arith.constant 0 : i32
    %c0_i32_0 = arith.constant 0 : i32
    %c0_i32_1 = arith.constant 0 : i32
    %c0_i32_2 = arith.constant 0 : i32
    return %c0_i32, %c0_i32_0, %c0_i32_1, %arg0 : i32, i32, i32, i32
  }
  func.func @transform_1(%arg0: i32) -> (i32, i32, i32) {
    %c0_i32 = arith.constant 0 : i32
    %c0_i32_0 = arith.constant 0 : i32
    %c0_i32_1 = arith.constant 0 : i32
    return %c0_i32, %c0_i32_0, %arg0 : i32, i32, i32
  }
  func.func @transform_2(%arg0: i32) -> (i32, i32, i32, i32) {
    %c0_i32 = arith.constant 0 : i32
    %c0_i32_0 = arith.constant 0 : i32
    %c0_i32_1 = arith.constant 0 : i32
    %c0_i32_2 = arith.constant 0 : i32
    return %c0_i32, %c0_i32_0, %c0_i32_1, %arg0 : i32, i32, i32, i32
  }
  func.func @transform_3(%arg0: i32) -> (i32, i32, i32, i32) {
    %c0_i32 = arith.constant 0 : i32
    %c0_i32_0 = arith.constant 0 : i32
    %c0_i32_1 = arith.constant 0 : i32
    %c0_i32_2 = arith.constant 0 : i32
    return %c0_i32, %c0_i32_0, %c0_i32_1, %arg0 : i32, i32, i32, i32
  }
  func.func @transform_4(%arg0: i32) -> (i32, i32, i32, i32) {
    %c0_i32 = arith.constant 0 : i32
    %c0_i32_0 = arith.constant 0 : i32
    %c0_i32_1 = arith.constant 0 : i32
    %c0_i32_2 = arith.constant 0 : i32
    return %c0_i32, %c0_i32_0, %c0_i32_1, %arg0 : i32, i32, i32, i32
  }
}

</mosaic_0001>

<llo_original>
// kernel: tpu_custom_call.1
$region0: #{tpu_custom_call.1}
  #allocation0 [shape = 'u32[]', space=smem, size = 0x4, offset = 0x4, fixed_abs, tag = 'smem constant byte address 0x4 - core index']
  #allocation1 [shape = 'u32[72,128]{1,0:T(1,128)}', space=vmem, size = 0x9000, scoped, tag = 'internal scratch']
  #allocation2 [shape = 'f32[2,20,20,8]{3,2,1,0:T(8,128)}', space=vmem, size = 0x78000, scoped, tag = 'scratch operand']
  %s0 = inlined_call_operand.vmem [shape: f32[2,16,16,8], index: 0, kind: input, shape index: {}]
  %s1 = inlined_call_operand.vmem [shape: f32[25,1,8], index: 1, kind: input, shape index: {}]
  %s2 = inlined_call_operand.vmem [shape: f32[1,1,1,8], index: 2, kind: input, shape index: {}]
  %s3 = inlined_call_operand.vmem [shape: f32[1,1,1,8], index: 3, kind: input, shape index: {}]
  %s4 = inlined_call_operand.vmem [shape: f32[2,16,16,8], index: 4, kind: output, shape index: {}]
  %s5 = sld [smem:[#allocation0]]
  $region26: #{tpu_custom_call.1} parent=0
    _
  %s7 = ssub.s32 1, %s5
  %s8 = scalar_select 0, %s7, %s5
  // Predicated region
  $region2: #{tpu_custom_call.1} parent=0 // pred_check
    _
  $region3: #{tpu_custom_call.1} parent=0 // pred_check_branch
    %10 = sbr.rel (0) target = $region5
  $region4: #{tpu_custom_call.1} parent=0 // pred_region
    _
  $region5: #{tpu_custom_call.1} parent=0 // pred_fallthru
    _
  // Predicated region
  $region6: #{tpu_custom_call.1} parent=0 // pred_check
    _
  $region7: #{tpu_custom_call.1} parent=0 // pred_check_branch
    %12 = sbr.rel (0) target = $region9
  $region8: #{tpu_custom_call.1} parent=0 // pred_region
    _
  $region9: #{tpu_custom_call.1} parent=0 // pred_fallthru
    _
  // Predicated region
  $region10: #{tpu_custom_call.1} parent=0 // pred_check
    _
  $region11: #{tpu_custom_call.1} parent=0 // pred_check_branch
    %14 = sbr.rel (0) target = $region13
  $region12: #{tpu_custom_call.1} parent=0 // pred_region
    _
  $region13: #{tpu_custom_call.1} parent=0 // pred_fallthru
    _
  // Predicated region
  $region14: #{tpu_custom_call.1} parent=0 // pred_check
    _
  $region15: #{tpu_custom_call.1} parent=0 // pred_check_branch
    %16 = sbr.rel (0) target = $region17
  $region16: #{tpu_custom_call.1} parent=0 // pred_region
    _
  $region17: #{tpu_custom_call.1} parent=0 // pred_fallthru
    _
  %vm17 = vcmask 64512
  %18 = vst.msk [vmem:[#allocation2] sm:$0xff] %vm17, 0.0
  %19 = vst.msk [vmem:[#allocation2 + $0x8] sm:$0xff] %vm17, 0.0
  %vm20 = vcmask 60416
  %21 = vst.msk [vmem:[#allocation2 + $0x10] sm:$0xf] %vm20, 0.0
  %22 = vst.msk [vmem:[#allocation2 + $0x18] sm:$0xff] %vm17, 0.0
  %23 = vst.msk [vmem:[#allocation2 + $0x20] sm:$0xff] %vm17, 0.0
  %24 = vst.msk [vmem:[#allocation2 + $0x28] sm:$0xf] %vm20, 0.0
  %25 = vst.msk [vmem:[#allocation2 + $0x1e0] sm:$0xff] %vm17, 0.0
  %26 = vst.msk [vmem:[#allocation2 + $0x1e8] sm:$0xff] %vm17, 0.0
  %27 = vst.msk [vmem:[#allocation2 + $0x1f0] sm:$0xf] %vm20, 0.0
  %28 = vst.msk [vmem:[#allocation2 + $0x1f8] sm:$0xff] %vm17, 0.0
  %29 = vst.msk [vmem:[#allocation2 + $0x200] sm:$0xff] %vm17, 0.0
  %30 = vst.msk [vmem:[#allocation2 + $0x208] sm:$0xf] %vm20, 0.0
  %s31 = scalar_lea.vmem [#allocation2], 432
  %32 = vst.msk [vmem:[%s31] sm:$0xff] %vm17, 0.0
  %33 = vst.msk [vmem:[%s31 + $0x8] sm:$0xff] %vm17, 0.0
  %34 = vst.msk [vmem:[%s31 + $0x10] sm:$0xf] %vm20, 0.0
  %35 = vst.msk [vmem:[%s31 + $0x18] sm:$0xff] %vm17, 0.0
  %36 = vst.msk [vmem:[%s31 + $0x20] sm:$0xff] %vm17, 0.0
  %37 = vst.msk [vmem:[%s31 + $0x28] sm:$0xf] %vm20, 0.0
  %38 = vst.msk [vmem:[%s31 + $0x1e0] sm:$0xff] %vm17, 0.0
  %39 = vst.msk [vmem:[%s31 + $0x1e8] sm:$0xff] %vm17, 0.0
  %40 = vst.msk [vmem:[%s31 + $0x1f0] sm:$0xf] %vm20, 0.0
  %41 = vst.msk [vmem:[%s31 + $0x1f8] sm:$0xff] %vm17, 0.0
  %42 = vst.msk [vmem:[%s31 + $0x200] sm:$0xff] %vm17, 0.0
  %43 = vst.msk [vmem:[%s31 + $0x208] sm:$0xf] %vm20, 0.0
  %s44 = scalar_lea.vmem [#allocation2], 48
  %vm45 = vcmask 58368
  %46 = vst.msk [vmem:[%s44] sm:$0x3] %vm45, 0.0
  %47 = vst.msk [vmem:[%s44 + $0x18] sm:$0x3] %vm45, 0.0
  %48 = vst.msk [vmem:[%s44 + $0x30] sm:$0x3] %vm45, 0.0
  %49 = vst.msk [vmem:[%s44 + $0x48] sm:$0x3] %vm45, 0.0
  %50 = vst.msk [vmem:[%s44 + $0x60] sm:$0x3] %vm45, 0.0
  %51 = vst.msk [vmem:[%s44 + $0x78] sm:$0x3] %vm45, 0.0
  %52 = vst.msk [vmem:[%s44 + $0x90] sm:$0x3] %vm45, 0.0
  %53 = vst.msk [vmem:[%s44 + $0xa8] sm:$0x3] %vm45, 0.0
  %54 = vst.msk [vmem:[%s44 + $0xc0] sm:$0x3] %vm45, 0.0
  %55 = vst.msk [vmem:[%s44 + $0xd8] sm:$0x3] %vm45, 0.0
  %56 = vst.msk [vmem:[%s44 + $0xf0] sm:$0x3] %vm45, 0.0
  %57 = vst.msk [vmem:[%s44 + $0x108] sm:$0x3] %vm45, 0.0
  %58 = vst.msk [vmem:[%s44 + $0x120] sm:$0x3] %vm45, 0.0
  %59 = vst.msk [vmem:[%s44 + $0x138] sm:$0x3] %vm45, 0.0
  %60 = vst.msk [vmem:[%s44 + $0x150] sm:$0x3] %vm45, 0.0
  %61 = vst.msk [vmem:[%s44 + $0x168] sm:$0x3] %vm45, 0.0
  %62 = vst.msk [vmem:[%s44 + $0x1e0] sm:$0x3] %vm45, 0.0
  %63 = vst.msk [vmem:[%s44 + $0x1f8] sm:$0x3] %vm45, 0.0
  %64 = vst.msk [vmem:[%s44 + $0x210] sm:$0x3] %vm45, 0.0
  %65 = vst.msk [vmem:[%s44 + $0x228] sm:$0x3] %vm45, 0.0
  %66 = vst.msk [vmem:[%s44 + $0x240] sm:$0x3] %vm45, 0.0
  %67 = vst.msk [vmem:[%s44 + $0x258] sm:$0x3] %vm45, 0.0
  %68 = vst.msk [vmem:[%s44 + $0x270] sm:$0x3] %vm45, 0.0
  %69 = vst.msk [vmem:[%s44 + $0x288] sm:$0x3] %vm45, 0.0
  %70 = vst.msk [vmem:[%s44 + $0x2a0] sm:$0x3] %vm45, 0.0
  %71 = vst.msk [vmem:[%s44 + $0x2b8] sm:$0x3] %vm45, 0.0
  %72 = vst.msk [vmem:[%s44 + $0x2d0] sm:$0x3] %vm45, 0.0
  %73 = vst.msk [vmem:[%s44 + $0x2e8] sm:$0x3] %vm45, 0.0
  %74 = vst.msk [vmem:[%s44 + $0x300] sm:$0x3] %vm45, 0.0
  %75 = vst.msk [vmem:[%s44 + $0x318] sm:$0x3] %vm45, 0.0
  %76 = vst.msk [vmem:[%s44 + $0x330] sm:$0x3] %vm45, 0.0
  %77 = vst.msk [vmem:[%s44 + $0x348] sm:$0x3] %vm45, 0.0
  %78 = vst.msk [vmem:[%s44 + $0x12] sm:$0x3] %vm45, 0.0
  %79 = vst.msk [vmem:[%s44 + $0x2a] sm:$0x3] %vm45, 0.0
  %80 = vst.msk [vmem:[%s44 + $0x42] sm:$0x3] %vm45, 0.0
  %81 = vst.msk [vmem:[%s44 + $0x5a] sm:$0x3] %vm45, 0.0
  %82 = vst.msk [vmem:[%s44 + $0x72] sm:$0x3] %vm45, 0.0
  %83 = vst.msk [vmem:[%s44 + $0x8a] sm:$0x3] %vm45, 0.0
  %84 = vst.msk [vmem:[%s44 + $0xa2] sm:$0x3] %vm45, 0.0
  %85 = vst.msk [vmem:[%s44 + $0xba] sm:$0x3] %vm45, 0.0
  %86 = vst.msk [vmem:[%s44 + $0xd2] sm:$0x3] %vm45, 0.0
  %87 = vst.msk [vmem:[%s44 + $0xea] sm:$0x3] %vm45, 0.0
  %88 = vst.msk [vmem:[%s44 + $0x102] sm:$0x3] %vm45, 0.0
  %89 = vst.msk [vmem:[%s44 + $0x11a] sm:$0x3] %vm45, 0.0
  %90 = vst.msk [vmem:[%s44 + $0x132] sm:$0x3] %vm45, 0.0
  %91 = vst.msk [vmem:[%s44 + $0x14a] sm:$0x3] %vm45, 0.0
  %92 = vst.msk [vmem:[%s44 + $0x162] sm:$0x3] %vm45, 0.0
  %93 = vst.msk [vmem:[%s44 + $0x17a] sm:$0x3] %vm45, 0.0
  %94 = vst.msk [vmem:[%s44 + $0x1f2] sm:$0x3] %vm45, 0.0
  %95 = vst.msk [vmem:[%s44 + $0x20a] sm:$0x3] %vm45, 0.0
  %96 = vst.msk [vmem:[%s44 + $0x222] sm:$0x3] %vm45, 0.0
  %97 = vst.msk [vmem:[%s44 + $0x23a] sm:$0x3] %vm45, 0.0
  %98 = vst.msk [vmem:[%s44 + $0x252] sm:$0x3] %vm45, 0.0
  %99 = vst.msk [vmem:[%s44 + $0x26a] sm:$0x3] %vm45, 0.0
  %100 = vst.msk [vmem:[%s44 + $0x282] sm:$0x3] %vm45, 0.0
  %101 = vst.msk [vmem:[%s44 + $0x29a] sm:$0x3] %vm45, 0.0
  %102 = vst.msk [vmem:[%s44 + $0x2b2] sm:$0x3] %vm45, 0.0
  %103 = vst.msk [vmem:[%s44 + $0x2ca] sm:$0x3] %vm45, 0.0
  %104 = vst.msk [vmem:[%s44 + $0x2e2] sm:$0x3] %vm45, 0.0
  %105 = vst.msk [vmem:[%s44 + $0x2fa] sm:$0x3] %vm45, 0.0
  %106 = vst.msk [vmem:[%s44 + $0x312] sm:$0x3] %vm45, 0.0
  %107 = vst.msk [vmem:[%s44 + $0x32a] sm:$0x3] %vm45, 0.0
  %108 = vst.msk [vmem:[%s44 + $0x342] sm:$0x3] %vm45, 0.0
  %109 = vst.msk [vmem:[%s44 + $0x35a] sm:$0x3] %vm45, 0.0
  %v110 = vld [vmem:[%s0] sm:$0xff]
  %v111 = vld [vmem:[%s0 + $0x8] sm:$0xff]
  %v112 = vld [vmem:[%s0 + $0x10] sm:$0xff]
  %v113 = vld [vmem:[%s0 + $0x18] sm:$0xff]
  %v114 = vld [vmem:[%s0 + $0x20] sm:$0xff]
  %v115 = vld [vmem:[%s0 + $0x28] sm:$0xff]
  %v116 = vld [vmem:[%s0 + $0x30] sm:$0xff]
  %v117 = vld [vmem:[%s0 + $0x38] sm:$0xff]
  %v118 = vld [vmem:[%s0 + $0x40] sm:$0xff]
  %v119 = vld [vmem:[%s0 + $0x48] sm:$0xff]
  %v120 = vld [vmem:[%s0 + $0x50] sm:$0xff]
  %v121 = vld [vmem:[%s0 + $0x58] sm:$0xff]
  %v122 = vld [vmem:[%s0 + $0x60] sm:$0xff]
  %v123 = vld [vmem:[%s0 + $0x68] sm:$0xff]
  %v124 = vld [vmem:[%s0 + $0x70] sm:$0xff]
  %v125 = vld [vmem:[%s0 + $0x78] sm:$0xff]
  %v126 = vld [vmem:[%s0 + $0x80] sm:$0xff]
  %v127 = vld [vmem:[%s0 + $0x88] sm:$0xff]
  %v128 = vld [vmem:[%s0 + $0x90] sm:$0xff]
  %v129 = vld [vmem:[%s0 + $0x98] sm:$0xff]
  %v130 = vld [vmem:[%s0 + $0xa0] sm:$0xff]
  %v131 = vld [vmem:[%s0 + $0xa8] sm:$0xff]
  %v132 = vld [vmem:[%s0 + $0xb0] sm:$0xff]
  %v133 = vld [vmem:[%s0 + $0xb8] sm:$0xff]
  %v134 = vld [vmem:[%s0 + $0xc0] sm:$0xff]
  %v135 = vld [vmem:[%s0 + $0xc8] sm:$0xff]
  %v136 = vld [vmem:[%s0 + $0xd0] sm:$0xff]
  %v137 = vld [vmem:[%s0 + $0xd8] sm:$0xff]
  %v138 = vld [vmem:[%s0 + $0xe0] sm:$0xff]
  %v139 = vld [vmem:[%s0 + $0xe8] sm:$0xff]
  %v140 = vld [vmem:[%s0 + $0xf0] sm:$0xff]
  %v141 = vld [vmem:[%s0 + $0xf8] sm:$0xff]
  %v142 = vld [vmem:[%s0 + $0x100] sm:$0xff]
  %v143 = vld [vmem:[%s0 + $0x108] sm:$0xff]
  %v144 = vld [vmem:[%s0 + $0x110] sm:$0xff]
  %v145 = vld [vmem:[%s0 + $0x118] sm:$0xff]
  %v146 = vld [vmem:[%s0 + $0x120] sm:$0xff]
  %v147 = vld [vmem:[%s0 + $0x128] sm:$0xff]
  %v148 = vld [vmem:[%s0 + $0x130] sm:$0xff]
  %v149 = vld [vmem:[%s0 + $0x138] sm:$0xff]
  %v150 = vld [vmem:[%s0 + $0x140] sm:$0xff]
  %v151 = vld [vmem:[%s0 + $0x148] sm:$0xff]
  %v152 = vld [vmem:[%s0 + $0x150] sm:$0xff]
  %v153 = vld [vmem:[%s0 + $0x158] sm:$0xff]
  %v154 = vld [vmem:[%s0 + $0x160] sm:$0xff]
  %v155 = vld [vmem:[%s0 + $0x168] sm:$0xff]
  %v156 = vld [vmem:[%s0 + $0x170] sm:$0xff]
  %v157 = vld [vmem:[%s0 + $0x178] sm:$0xff]
  %v158 = vld [vmem:[%s0 + $0x180] sm:$0xff]
  %v159 = vld [vmem:[%s0 + $0x188] sm:$0xff]
  %v160 = vld [vmem:[%s0 + $0x190] sm:$0xff]
  %v161 = vld [vmem:[%s0 + $0x198] sm:$0xff]
  %v162 = vld [vmem:[%s0 + $0x1a0] sm:$0xff]
  %v163 = vld [vmem:[%s0 + $0x1a8] sm:$0xff]
  %v164 = vld [vmem:[%s0 + $0x1b0] sm:$0xff]
  %v165 = vld [vmem:[%s0 + $0x1b8] sm:$0xff]
  %v166 = vld [vmem:[%s0 + $0x1c0] sm:$0xff]
  %v167 = vld [vmem:[%s0 + $0x1c8] sm:$0xff]
  %v168 = vld [vmem:[%s0 + $0x1d0] sm:$0xff]
  %v169 = vld [vmem:[%s0 + $0x1d8] sm:$0xff]
  %v170 = vld [vmem:[%s0 + $0x1e0] sm:$0xff]
  %v171 = vld [vmem:[%s0 + $0x1e8] sm:$0xff]
  %v172 = vld [vmem:[%s0 + $0x1f0] sm:$0xff]
  %v173 = vld [vmem:[%s0 + $0x1f8] sm:$0xff]
  %174 = vst.msk [vmem:[%s44 + $0x2] sm:$0xff] %vm17, %v110
  %175 = vst.msk [vmem:[%s44 + $0xa] sm:$0xff] %vm17, %v111
  %176 = vst.msk [vmem:[%s44 + $0x1a] sm:$0xff] %vm17, %v112
  %177 = vst.msk [vmem:[%s44 + $0x22] sm:$0xff] %vm17, %v113
  %178 = vst.msk [vmem:[%s44 + $0x32] sm:$0xff] %vm17, %v114
  %179 = vst.msk [vmem:[%s44 + $0x3a] sm:$0xff] %vm17, %v115
  %180 = vst.msk [vmem:[%s44 + $0x4a] sm:$0xff] %vm17, %v116
  %181 = vst.msk [vmem:[%s44 + $0x52] sm:$0xff] %vm17, %v117
  %182 = vst.msk [vmem:[%s44 + $0x62] sm:$0xff] %vm17, %v118
  %183 = vst.msk [vmem:[%s44 + $0x6a] sm:$0xff] %vm17, %v119
  %184 = vst.msk [vmem:[%s44 + $0x7a] sm:$0xff] %vm17, %v120
  %185 = vst.msk [vmem:[%s44 + $0x82] sm:$0xff] %vm17, %v121
  %186 = vst.msk [vmem:[%s44 + $0x92] sm:$0xff] %vm17, %v122
  %187 = vst.msk [vmem:[%s44 + $0x9a] sm:$0xff] %vm17, %v123
  %188 = vst.msk [vmem:[%s44 + $0xaa] sm:$0xff] %vm17, %v124
  %189 = vst.msk [vmem:[%s44 + $0xb2] sm:$0xff] %vm17, %v125
  %190 = vst.msk [vmem:[%s44 + $0xc2] sm:$0xff] %vm17, %v126
  %191 = vst.msk [vmem:[%s44 + $0xca] sm:$0xff] %vm17, %v127
  %192 = vst.msk [vmem:[%s44 + $0xda] sm:$0xff] %vm17, %v128
  %193 = vst.msk [vmem:[%s44 + $0xe2] sm:$0xff] %vm17, %v129
  %194 = vst.msk [vmem:[%s44 + $0xf2] sm:$0xff] %vm17, %v130
  %195 = vst.msk [vmem:[%s44 + $0xfa] sm:$0xff] %vm17, %v131
  %196 = vst.msk [vmem:[%s44 + $0x10a] sm:$0xff] %vm17, %v132
  %197 = vst.msk [vmem:[%s44 + $0x112] sm:$0xff] %vm17, %v133
  %198 = vst.msk [vmem:[%s44 + $0x122] sm:$0xff] %vm17, %v134
  %199 = vst.msk [vmem:[%s44 + $0x12a] sm:$0xff] %vm17, %v135
  %200 = vst.msk [vmem:[%s44 + $0x13a] sm:$0xff] %vm17, %v136
  %201 = vst.msk [vmem:[%s44 + $0x142] sm:$0xff] %vm17, %v137
  %202 = vst.msk [vmem:[%s44 + $0x152] sm:$0xff] %vm17, %v138
  %203 = vst.msk [vmem:[%s44 + $0x15a] sm:$0xff] %vm17, %v139
  %204 = vst.msk [vmem:[%s44 + $0x16a] sm:$0xff] %vm17, %v140
  %205 = vst.msk [vmem:[%s44 + $0x172] sm:$0xff] %vm17, %v141
  %206 = vst.msk [vmem:[%s44 + $0x1e2] sm:$0xff] %vm17, %v142
  %207 = vst.msk [vmem:[%s44 + $0x1ea] sm:$0xff] %vm17, %v143
  %208 = vst.msk [vmem:[%s44 + $0x1fa] sm:$0xff] %vm17, %v144
  %209 = vst.msk [vmem:[%s44 + $0x202] sm:$0xff] %vm17, %v145
  %210 = vst.msk [vmem:[%s44 + $0x212] sm:$0xff] %vm17, %v146
  %211 = vst.msk [vmem:[%s44 + $0x21a] sm:$0xff] %vm17, %v147
  %212 = vst.msk [vmem:[%s44 + $0x22a] sm:$0xff] %vm17, %v148
  %213 = vst.msk [vmem:[%s44 + $0x232] sm:$0xff] %vm17, %v149
  %214 = vst.msk [vmem:[%s44 + $0x242] sm:$0xff] %vm17, %v150
  %215 = vst.msk [vmem:[%s44 + $0x24a] sm:$0xff] %vm17, %v151
  %216 = vst.msk [vmem:[%s44 + $0x25a] sm:$0xff] %vm17, %v152
  %217 = vst.msk [vmem:[%s44 + $0x262] sm:$0xff] %vm17, %v153
  %218 = vst.msk [vmem:[%s44 + $0x272] sm:$0xff] %vm17, %v154
  %219 = vst.msk [vmem:[%s44 + $0x27a] sm:$0xff] %vm17, %v155
  %220 = vst.msk [vmem:[%s44 + $0x28a] sm:$0xff] %vm17, %v156
  %221 = vst.msk [vmem:[%s44 + $0x292] sm:$0xff] %vm17, %v157
  %222 = vst.msk [vmem:[%s44 + $0x2a2] sm:$0xff] %vm17, %v158
  %223 = vst.msk [vmem:[%s44 + $0x2aa] sm:$0xff] %vm17, %v159
  %224 = vst.msk [vmem:[%s44 + $0x2ba] sm:$0xff] %vm17, %v160
  %225 = vst.msk [vmem:[%s44 + $0x2c2] sm:$0xff] %vm17, %v161
  %226 = vst.msk [vmem:[%s44 + $0x2d2] sm:$0xff] %vm17, %v162
  %227 = vst.msk [vmem:[%s44 + $0x2da] sm:$0xff] %vm17, %v163
  %228 = vst.msk [vmem:[%s44 + $0x2ea] sm:$0xff] %vm17, %v164
  %229 = vst.msk [vmem:[%s44 + $0x2f2] sm:$0xff] %vm17, %v165
  %230 = vst.msk [vmem:[%s44 + $0x302] sm:$0xff] %vm17, %v166
  %231 = vst.msk [vmem:[%s44 + $0x30a] sm:$0xff] %vm17, %v167
  %232 = vst.msk [vmem:[%s44 + $0x31a] sm:$0xff] %vm17, %v168
  %233 = vst.msk [vmem:[%s44 + $0x322] sm:$0xff] %vm17, %v169
  %234 = vst.msk [vmem:[%s44 + $0x332] sm:$0xff] %vm17, %v170
  %235 = vst.msk [vmem:[%s44 + $0x33a] sm:$0xff] %vm17, %v171
  %236 = vst.msk [vmem:[%s44 + $0x34a] sm:$0xff] %vm17, %v172
  %237 = vst.msk [vmem:[%s44 + $0x352] sm:$0xff] %vm17, %v173
  %v238 = vld [vmem:[#allocation2] sm:$0xff]
  %v239 = vld [vmem:[#allocation2 + $0x8] sm:$0xff]
  %v240 = vld [vmem:[#allocation2 + $0x18] sm:$0xff]
  %v241 = vld [vmem:[#allocation2 + $0x20] sm:$0xff]
  %v242 = vld [vmem:[#allocation2 + $0x30] sm:$0xff]
  %v243 = vld [vmem:[#allocation2 + $0x38] sm:$0xff]
  %v244 = vld [vmem:[#allocation2 + $0x48] sm:$0xff]
  %v245 = vld [vmem:[#allocation2 + $0x50] sm:$0xff]
  %v246 = vld [vmem:[#allocation2 + $0x60] sm:$0xff]
  %v247 = vld [vmem:[#allocation2 + $0x68] sm:$0xff]
  %v248 = vld [vmem:[#allocation2 + $0x78] sm:$0xff]
  %v249 = vld [vmem:[#allocation2 + $0x80] sm:$0xff]
  %v250 = vld [vmem:[#allocation2 + $0x90] sm:$0xff]
  %v251 = vld [vmem:[#allocation2 + $0x98] sm:$0xff]
  %v252 = vld [vmem:[#allocation2 + $0xa8] sm:$0xff]
  %v253 = vld [vmem:[#allocation2 + $0xb0] sm:$0xff]
  %v254 = vld [vmem:[#allocation2 + $0xc0] sm:$0xff]
  %v255 = vld [vmem:[#allocation2 + $0xc8] sm:$0xff]
  %v256 = vld [vmem:[#allocation2 + $0xd8] sm:$0xff]
  %v257 = vld [vmem:[#allocation2 + $0xe0] sm:$0xff]
  %v258 = vld [vmem:[#allocation2 + $0xf0] sm:$0xff]
  %v259 = vld [vmem:[#allocation2 + $0xf8] sm:$0xff]
  %v260 = vld [vmem:[#allocation2 + $0x108] sm:$0xff]
  %v261 = vld [vmem:[#allocation2 + $0x110] sm:$0xff]
  %v262 = vld [vmem:[#allocation2 + $0x120] sm:$0xff]
  %v263 = vld [vmem:[#allocation2 + $0x128] sm:$0xff]
  %v264 = vld [vmem:[#allocation2 + $0x138] sm:$0xff]
  %v265 = vld [vmem:[#allocation2 + $0x140] sm:$0xff]
  %v266 = vld [vmem:[#allocation2 + $0x150] sm:$0xff]
  %v267 = vld [vmem:[#allocation2 + $0x158] sm:$0xff]
  %v268 = vld [vmem:[#allocation2 + $0x168] sm:$0xff]
  %v269 = vld [vmem:[#allocation2 + $0x170] sm:$0xff]
  %v270 = vld [vmem:[#allocation2 + $0x180] sm:$0xff]
  %v271 = vld [vmem:[#allocation2 + $0x188] sm:$0xff]
  %v272 = vld [vmem:[#allocation2 + $0x198] sm:$0xff]
  %v273 = vld [vmem:[#allocation2 + $0x1a0] sm:$0xff]
  %v274 = vld [vmem:[#allocation2 + $0x1b0] sm:$0xff]
  %v275 = vld [vmem:[#allocation2 + $0x1b8] sm:$0xff]
  %v276 = vld [vmem:[#allocation2 + $0x1c8] sm:$0xff]
  %v277 = vld [vmem:[#allocation2 + $0x1d0] sm:$0xff]
  %v278 = vld [vmem:[#allocation2 + $0x1e0] sm:$0xff]
  %v279 = vld [vmem:[#allocation2 + $0x1e8] sm:$0xff]
  %v280 = vld [vmem:[#allocation2 + $0x1f8] sm:$0xff]
  %v281 = vld [vmem:[#allocation2 + $0x200] sm:$0xff]
  %v282 = vld [vmem:[#allocation2 + $0x210] sm:$0xff]
  %v283 = vld [vmem:[#allocation2 + $0x218] sm:$0xff]
  %v284 = vld [vmem:[#allocation2 + $0x228] sm:$0xff]
  %v285 = vld [vmem:[#allocation2 + $0x230] sm:$0xff]
  %v286 = vld [vmem:[#allocation2 + $0x240] sm:$0xff]
  %v287 = vld [vmem:[#allocation2 + $0x248] sm:$0xff]
  %v288 = vld [vmem:[#allocation2 + $0x258] sm:$0xff]
  %v289 = vld [vmem:[#allocation2 + $0x260] sm:$0xff]
  %v290 = vld [vmem:[#allocation2 + $0x270] sm:$0xff]
  %v291 = vld [vmem:[#allocation2 + $0x278] sm:$0xff]
  %v292 = vld [vmem:[#allocation2 + $0x288] sm:$0xff]
  %v293 = vld [vmem:[#allocation2 + $0x290] sm:$0xff]
  %v294 = vld [vmem:[#allocation2 + $0x2a0] sm:$0xff]
  %v295 = vld [vmem:[#allocation2 + $0x2a8] sm:$0xff]
  %v296 = vld [vmem:[#allocation2 + $0x2b8] sm:$0xff]
  %v297 = vld [vmem:[#allocation2 + $0x2c0] sm:$0xff]
  %v298 = vld [vmem:[#allocation2 + $0x2d0] sm:$0xff]
  %v299 = vld [vmem:[#allocation2 + $0x2d8] sm:$0xff]
  %v300 = vld [vmem:[#allocation2 + $0x2e8] sm:$0xff]
  %v301 = vld [vmem:[#allocation2 + $0x2f0] sm:$0xff]
  %v302 = vld [vmem:[#allocation2 + $0x300] sm:$0xff]
  %v303 = vld [vmem:[#allocation2 + $0x308] sm:$0xff]
  %v304 = vld [vmem:[#allocation2 + $0x318] sm:$0xff]
  %v305 = vld [vmem:[#allocation2 + $0x320] sm:$0xff]
  %v306 = vld [vmem:[#allocation2 + $0x330] sm:$0xff]
  %v307 = vld [vmem:[#allocation2 + $0x338] sm:$0xff]
  %v308 = vld [vmem:[#allocation2 + $0x348] sm:$0xff]
  %v309 = vld [vmem:[#allocation2 + $0x350] sm:$0xff]
  %v310 = vld [vmem:[#allocation2 + $0x360] sm:$0xff]
  %v311 = vld [vmem:[#allocation2 + $0x368] sm:$0xff]
  %v312 = vld [vmem:[#allocation2 + $0x378] sm:$0xff]
  %v313 = vld [vmem:[#allocation2 + $0x380] sm:$0xff]
  %v314 = vld [vmem:[#allocation2 + $0x390] sm:$0xff]
  %v315 = vld [vmem:[#allocation2 + $0x398] sm:$0xff]
  %v316 = vld [vmem:[#allocation2 + $0x3a8] sm:$0xff]
  %v317 = vld [vmem:[#allocation2 + $0x3b0] sm:$0xff]
  %v318 = vld [vmem:[%s1] sm:$0x1]
  %v320 = vperm.slane %v318, 0
  %v322 = vmul.f32 %v238, %v320
  %v323 = vmul.f32 %v239, %v320
  %v324 = vmul.f32 %v240, %v320
  %v325 = vmul.f32 %v241, %v320
  %v326 = vmul.f32 %v242, %v320
  %v327 = vmul.f32 %v243, %v320
  %v328 = vmul.f32 %v244, %v320
  %v329 = vmul.f32 %v245, %v320
  %v330 = vmul.f32 %v246, %v320
  %v331 = vmul.f32 %v247, %v320
  %v332 = vmul.f32 %v248, %v320
  %v333 = vmul.f32 %v249, %v320
  %v334 = vmul.f32 %v250, %v320
  %v335 = vmul.f32 %v251, %v320
  %v336 = vmul.f32 %v252, %v320
  %v337 = vmul.f32 %v253, %v320
  %v338 = vmul.f32 %v254, %v320
  %v339 = vmul.f32 %v255, %v320
  %v340 = vmul.f32 %v256, %v320
  %v341 = vmul.f32 %v257, %v320
  %v342 = vmul.f32 %v258, %v320
  %v343 = vmul.f32 %v259, %v320
  %v344 = vmul.f32 %v260, %v320
  %v345 = vmul.f32 %v261, %v320
  %v346 = vmul.f32 %v262, %v320
  %v347 = vmul.f32 %v263, %v320
  %v348 = vmul.f32 %v264, %v320
  %v349 = vmul.f32 %v265, %v320
  %v350 = vmul.f32 %v266, %v320
  %v351 = vmul.f32 %v267, %v320
  %v352 = vmul.f32 %v268, %v320
  %v353 = vmul.f32 %v269, %v320
  %v354 = vmul.f32 %v278, %v320
  %v355 = vmul.f32 %v279, %v320
  %v356 = vmul.f32 %v280, %v320
  %v357 = vmul.f32 %v281, %v320
  %v358 = vmul.f32 %v282, %v320
  %v359 = vmul.f32 %v283, %v320
  %v360 = vmul.f32 %v284, %v320
  %v361 = vmul.f32 %v285, %v320
  %v362 = vmul.f32 %v286, %v320
  %v363 = vmul.f32 %v287, %v320
  %v364 = vmul.f32 %v288, %v320
  %v365 = vmul.f32 %v289, %v320
  %v366 = vmul.f32 %v290, %v320
  %v367 = vmul.f32 %v291, %v320
  %v368 = vmul.f32 %v292, %v320
  %v369 = vmul.f32 %v293, %v320
  %v370 = vmul.f32 %v294, %v320
  %v371 = vmul.f32 %v295, %v320
  %v372 = vmul.f32 %v296, %v320
  %v373 = vmul.f32 %v297, %v320
  %v374 = vmul.f32 %v298, %v320
  %v375 = vmul.f32 %v299, %v320
  %v376 = vmul.f32 %v300, %v320
  %v377 = vmul.f32 %v301, %v320
  %v378 = vmul.f32 %v302, %v320
  %v379 = vmul.f32 %v303, %v320
  %v380 = vmul.f32 %v304, %v320
  %v381 = vmul.f32 %v305, %v320
  %v382 = vmul.f32 %v306, %v320
  %v383 = vmul.f32 %v307, %v320
  %v384 = vmul.f32 %v308, %v320
  %v385 = vmul.f32 %v309, %v320
  %s386 = scalar_lea.vmem %s1, 5
  %v387 = vld [vmem:[%s386] sm:$0x1]
  %v389 = vperm.slane %v387, 0
  %v391 = vmul.f32 %v240, %v389
  %v392 = vmul.f32 %v241, %v389
  %v393 = vmul.f32 %v242, %v389
  %v394 = vmul.f32 %v243, %v389
  %v395 = vmul.f32 %v244, %v389
  %v396 = vmul.f32 %v245, %v389
  %v397 = vmul.f32 %v246, %v389
  %v398 = vmul.f32 %v247, %v389
  %v399 = vmul.f32 %v248, %v389
  %v400 = vmul.f32 %v249, %v389
  %v401 = vmul.f32 %v250, %v389
  %v402 = vmul.f32 %v251, %v389
  %v403 = vmul.f32 %v252, %v389
  %v404 = vmul.f32 %v253, %v389
  %v405 = vmul.f32 %v254, %v389
  %v406 = vmul.f32 %v255, %v389
  %v407 = vmul.f32 %v256, %v389
  %v408 = vmul.f32 %v257, %v389
  %v409 = vmul.f32 %v258, %v389
  %v410 = vmul.f32 %v259, %v389
  %v411 = vmul.f32 %v260, %v389
  %v412 = vmul.f32 %v261, %v389
  %v413 = vmul.f32 %v262, %v389
  %v414 = vmul.f32 %v263, %v389
  %v415 = vmul.f32 %v264, %v389
  %v416 = vmul.f32 %v265, %v389
  %v417 = vmul.f32 %v266, %v389
  %v418 = vmul.f32 %v267, %v389
  %v419 = vmul.f32 %v268, %v389
  %v420 = vmul.f32 %v269, %v389
  %v421 = vmul.f32 %v270, %v389
  %v422 = vmul.f32 %v271, %v389
  %v423 = vmul.f32 %v280, %v389
  %v424 = vmul.f32 %v281, %v389
  %v425 = vmul.f32 %v282, %v389
  %v426 = vmul.f32 %v283, %v389
  %v427 = vmul.f32 %v284, %v389
  %v428 = vmul.f32 %v285, %v389
  %v429 = vmul.f32 %v286, %v389
  %v430 = vmul.f32 %v287, %v389
  %v431 = vmul.f32 %v288, %v389
  %v432 = vmul.f32 %v289, %v389
  %v433 = vmul.f32 %v290, %v389
  %v434 = vmul.f32 %v291, %v389
  %v435 = vmul.f32 %v292, %v389
  %v436 = vmul.f32 %v293, %v389
  %v437 = vmul.f32 %v294, %v389
  %v438 = vmul.f32 %v295, %v389
  %v439 = vmul.f32 %v296, %v389
  %v440 = vmul.f32 %v297, %v389
  %v441 = vmul.f32 %v298, %v389
  %v442 = vmul.f32 %v299, %v389
  %v443 = vmul.f32 %v300, %v389
  %v444 = vmul.f32 %v301, %v389
  %v445 = vmul.f32 %v302, %v389
  %v446 = vmul.f32 %v303, %v389
  %v447 = vmul.f32 %v304, %v389
  %v448 = vmul.f32 %v305, %v389
  %v449 = vmul.f32 %v306, %v389
  %v450 = vmul.f32 %v307, %v389
  %v451 = vmul.f32 %v308, %v389
  %v452 = vmul.f32 %v309, %v389
  %v453 = vmul.f32 %v310, %v389
  %v454 = vmul.f32 %v311, %v389
  %v455 = vadd.f32 %v322, %v391
  %v456 = vadd.f32 %v323, %v392
  %v457 = vadd.f32 %v324, %v393
  %v458 = vadd.f32 %v325, %v394
  %v459 = vadd.f32 %v326, %v395
  %v460 = vadd.f32 %v327, %v396
  %v461 = vadd.f32 %v328, %v397
  %v462 = vadd.f32 %v329, %v398
  %v463 = vadd.f32 %v330, %v399
  %v464 = vadd.f32 %v331, %v400
  %v465 = vadd.f32 %v332, %v401
  %v466 = vadd.f32 %v333, %v402
  %v467 = vadd.f32 %v334, %v403
  %v468 = vadd.f32 %v335, %v404
  %v469 = vadd.f32 %v336, %v405
  %v470 = vadd.f32 %v337, %v406
  %v471 = vadd.f32 %v338, %v407
  %v472 = vadd.f32 %v339, %v408
  %v473 = vadd.f32 %v340, %v409
  %v474 = vadd.f32 %v341, %v410
  %v475 = vadd.f32 %v342, %v411
  %v476 = vadd.f32 %v343, %v412
  %v477 = vadd.f32 %v344, %v413
  %v478 = vadd.f32 %v345, %v414
  %v479 = vadd.f32 %v346, %v415
  %v480 = vadd.f32 %v347, %v416
  %v481 = vadd.f32 %v348, %v417
  %v482 = vadd.f32 %v349, %v418
  %v483 = vadd.f32 %v350, %v419
  %v484 = vadd.f32 %v351, %v420
  %v485 = vadd.f32 %v352, %v421
  %v486 = vadd.f32 %v353, %v422
  %v487 = vadd.f32 %v354, %v423
  %v488 = vadd.f32 %v355, %v424
  %v489 = vadd.f32 %v356, %v425
  %v490 = vadd.f32 %v357, %v426
  %v491 = vadd.f32 %v358, %v427
  %v492 = vadd.f32 %v359, %v428
  %v493 = vadd.f32 %v360, %v429
  %v494 = vadd.f32 %v361, %v430
  %v495 = vadd.f32 %v362, %v431
  %v496 = vadd.f32 %v363, %v432
  %v497 = vadd.f32 %v364, %v433
  %v498 = vadd.f32 %v365, %v434
  %v499 = vadd.f32 %v366, %v435
  %v500 = vadd.f32 %v367, %v436
  %v501 = vadd.f32 %v368, %v437
  %v502 = vadd.f32 %v369, %v438
  %v503 = vadd.f32 %v370, %v439
  %v504 = vadd.f32 %v371, %v440
  %v505 = vadd.f32 %v372, %v441
  %v506 = vadd.f32 %v373, %v442
  %v507 = vadd.f32 %v374, %v443
  %v508 = vadd.f32 %v375, %v444
  %v509 = vadd.f32 %v376, %v445
  %v510 = vadd.f32 %v377, %v446
  %v511 = vadd.f32 %v378, %v447
  %v512 = vadd.f32 %v379, %v448
  %v513 = vadd.f32 %v380, %v449
  %v514 = vadd.f32 %v381, %v450
  %v515 = vadd.f32 %v382, %v451
  %v516 = vadd.f32 %v383, %v452
  %v517 = vadd.f32 %v384, %v453
  %v518 = vadd.f32 %v385, %v454
  %s519 = scalar_lea.vmem %s1, 10
  %v520 = vld [vmem:[%s519] sm:$0x1]
  %v522 = vperm.slane %v520, 0
  %v524 = vmul.f32 %v242, %v522
  %v525 = vmul.f32 %v243, %v522
  %v526 = vmul.f32 %v244, %v522
  %v527 = vmul.f32 %v245, %v522
  %v528 = vmul.f32 %v246, %v522
  %v529 = vmul.f32 %v247, %v522
  %v530 = vmul.f32 %v248, %v522
  %v531 = vmul.f32 %v249, %v522
  %v532 = vmul.f32 %v250, %v522
  %v533 = vmul.f32 %v251, %v522
  %v534 = vmul.f32 %v252, %v522
  %v535 = vmul.f32 %v253, %v522
  %v536 = vmul.f32 %v254, %v522
  %v537 = vmul.f32 %v255, %v522
  %v538 = vmul.f32 %v256, %v522
  %v539 = vmul.f32 %v257, %v522
  %v540 = vmul.f32 %v258, %v522
  %v541 = vmul.f32 %v259, %v522
  %v542 = vmul.f32 %v260, %v522
  %v543 = vmul.f32 %v261, %v522
  %v544 = vmul.f32 %v262, %v522
  %v545 = vmul.f32 %v263, %v522
  %v546 = vmul.f32 %v264, %v522
  %v547 = vmul.f32 %v265, %v522
  %v548 = vmul.f32 %v266, %v522
  %v549 = vmul.f32 %v267, %v522
  %v550 = vmul.f32 %v268, %v522
  %v551 = vmul.f32 %v269, %v522
  %v552 = vmul.f32 %v270, %v522
  %v553 = vmul.f32 %v271, %v522
  %v554 = vmul.f32 %v272, %v522
  %v555 = vmul.f32 %v273, %v522
  %v556 = vmul.f32 %v282, %v522
  %v557 = vmul.f32 %v283, %v522
  %v558 = vmul.f32 %v284, %v522
  %v559 = vmul.f32 %v285, %v522
  %v560 = vmul.f32 %v286, %v522
  %v561 = vmul.f32 %v287, %v522
  %v562 = vmul.f32 %v288, %v522
  %v563 = vmul.f32 %v289, %v522
  %v564 = vmul.f32 %v290, %v522
  %v565 = vmul.f32 %v291, %v522
  %v566 = vmul.f32 %v292, %v522
  %v567 = vmul.f32 %v293, %v522
  %v568 = vmul.f32 %v294, %v522
  %v569 = vmul.f32 %v295, %v522
  %v570 = vmul.f32 %v296, %v522
  %v571 = vmul.f32 %v297, %v522
  %v572 = vmul.f32 %v298, %v522
  %v573 = vmul.f32 %v299, %v522
  %v574 = vmul.f32 %v300, %v522
  %v575 = vmul.f32 %v301, %v522
  %v576 = vmul.f32 %v302, %v522
  %v577 = vmul.f32 %v303, %v522
  %v578 = vmul.f32 %v304, %v522
  %v579 = vmul.f32 %v305, %v522
  %v580 = vmul.f32 %v306, %v522
  %v581 = vmul.f32 %v307, %v522
  %v582 = vmul.f32 %v308, %v522
  %v583 = vmul.f32 %v309, %v522
  %v584 = vmul.f32 %v310, %v522
  %v585 = vmul.f32 %v311, %v522
  %v586 = vmul.f32 %v312, %v522
  %v587 = vmul.f32 %v313, %v522
  %v588 = vadd.f32 %v455, %v524
  %v589 = vadd.f32 %v456, %v525
  %v590 = vadd.f32 %v457, %v526
  %v591 = vadd.f32 %v458, %v527
  %v592 = vadd.f32 %v459, %v528
  %v593 = vadd.f32 %v460, %v529
  %v594 = vadd.f32 %v461, %v530
  %v595 = vadd.f32 %v462, %v531
  %v596 = vadd.f32 %v463, %v532
  %v597 = vadd.f32 %v464, %v533
  %v598 = vadd.f32 %v465, %v534
  %v599 = vadd.f32 %v466, %v535
  %v600 = vadd.f32 %v467, %v536
  %v601 = vadd.f32 %v468, %v537
  %v602 = vadd.f32 %v469, %v538
  %v603 = vadd.f32 %v470, %v539
  %v604 = vadd.f32 %v471, %v540
  %v605 = vadd.f32 %v472, %v541
  %v606 = vadd.f32 %v473, %v542
  %v607 = vadd.f32 %v474, %v543
  %v608 = vadd.f32 %v475, %v544
  %v609 = vadd.f32 %v476, %v545
  %v610 = vadd.f32 %v477, %v546
  %v611 = vadd.f32 %v478, %v547
  %v612 = vadd.f32 %v479, %v548
  %v613 = vadd.f32 %v480, %v549
  %v614 = vadd.f32 %v481, %v550
  %v615 = vadd.f32 %v482, %v551
  %v616 = vadd.f32 %v483, %v552
  %v617 = vadd.f32 %v484, %v553
  %v618 = vadd.f32 %v485, %v554
  %v619 = vadd.f32 %v486, %v555
  %v620 = vadd.f32 %v487, %v556
  %v621 = vadd.f32 %v488, %v557
  %v622 = vadd.f32 %v489, %v558
  %v623 = vadd.f32 %v490, %v559
  %v624 = vadd.f32 %v491, %v560
  %v625 = vadd.f32 %v492, %v561
  %v626 = vadd.f32 %v493, %v562
  %v627 = vadd.f32 %v494, %v563
  %v628 = vadd.f32 %v495, %v564
  %v629 = vadd.f32 %v496, %v565
  %v630 = vadd.f32 %v497, %v566
  %v631 = vadd.f32 %v498, %v567
  %v632 = vadd.f32 %v499, %v568
  %v633 = vadd.f32 %v500, %v569
  %v634 = vadd.f32 %v501, %v570
  %v635 = vadd.f32 %v502, %v571
  %v636 = vadd.f32 %v503, %v572
  %v637 = vadd.f32 %v504, %v573
  %v638 = vadd.f32 %v505, %v574
  %v639 = vadd.f32 %v506, %v575
  %v640 = vadd.f32 %v507, %v576
  %v641 = vadd.f32 %v508, %v577
  %v642 = vadd.f32 %v509, %v578
  %v643 = vadd.f32 %v510, %v579
  %v644 = vadd.f32 %v511, %v580
  %v645 = vadd.f32 %v512, %v581
  %v646 = vadd.f32 %v513, %v582
  %v647 = vadd.f32 %v514, %v583
  %v648 = vadd.f32 %v515, %v584
  %v649 = vadd.f32 %v516, %v585
  %v650 = vadd.f32 %v517, %v586
  %v651 = vadd.f32 %v518, %v587
  %s652 = scalar_lea.vmem %s1, 15
  %v653 = vld [vmem:[%s652] sm:$0x1]
  %v655 = vperm.slane %v653, 0
  %v657 = vmul.f32 %v244, %v655
  %v658 = vmul.f32 %v245, %v655
  %v659 = vmul.f32 %v246, %v655
  %v660 = vmul.f32 %v247, %v655
  %v661 = vmul.f32 %v248, %v655
  %v662 = vmul.f32 %v249, %v655
  %v663 = vmul.f32 %v250, %v655
  %v664 = vmul.f32 %v251, %v655
  %v665 = vmul.f32 %v252, %v655
  %v666 = vmul.f32 %v253, %v655
  %v667 = vmul.f32 %v254, %v655
  %v668 = vmul.f32 %v255, %v655
  %v669 = vmul.f32 %v256, %v655
  %v670 = vmul.f32 %v257, %v655
  %v671 = vmul.f32 %v258, %v655
  %v672 = vmul.f32 %v259, %v655
  %v673 = vmul.f32 %v260, %v655
  %v674 = vmul.f32 %v261, %v655
  %v675 = vmul.f32 %v262, %v655
  %v676 = vmul.f32 %v263, %v655
  %v677 = vmul.f32 %v264, %v655
  %v678 = vmul.f32 %v265, %v655
  %v679 = vmul.f32 %v266, %v655
  %v680 = vmul.f32 %v267, %v655
  %v681 = vmul.f32 %v268, %v655
  %v682 = vmul.f32 %v269, %v655
  %v683 = vmul.f32 %v270, %v655
  %v684 = vmul.f32 %v271, %v655
  %v685 = vmul.f32 %v272, %v655
  %v686 = vmul.f32 %v273, %v655
  %v687 = vmul.f32 %v274, %v655
  %v688 = vmul.f32 %v275, %v655
  %v689 = vmul.f32 %v284, %v655
  %v690 = vmul.f32 %v285, %v655
  %v691 = vmul.f32 %v286, %v655
  %v692 = vmul.f32 %v287, %v655
  %v693 = vmul.f32 %v288, %v655
  %v694 = vmul.f32 %v289, %v655
  %v695 = vmul.f32 %v290, %v655
  %v696 = vmul.f32 %v291, %v655
  %v697 = vmul.f32 %v292, %v655
  %v698 = vmul.f32 %v293, %v655
  %v699 = vmul.f32 %v294, %v655
  %v700 = vmul.f32 %v295, %v655
  %v701 = vmul.f32 %v296, %v655
  %v702 = vmul.f32 %v297, %v655
  %v703 = vmul.f32 %v298, %v655
  %v704 = vmul.f32 %v299, %v655
  %v705 = vmul.f32 %v300, %v655
  %v706 = vmul.f32 %v301, %v655
  %v707 = vmul.f32 %v302, %v655
  %v708 = vmul.f32 %v303, %v655
  %v709 = vmul.f32 %v304, %v655
  %v710 = vmul.f32 %v305, %v655
  %v711 = vmul.f32 %v306, %v655
  %v712 = vmul.f32 %v307, %v655
  %v713 = vmul.f32 %v308, %v655
  %v714 = vmul.f32 %v309, %v655
  %v715 = vmul.f32 %v310, %v655
  %v716 = vmul.f32 %v311, %v655
  %v717 = vmul.f32 %v312, %v655
  %v718 = vmul.f32 %v313, %v655
  %v719 = vmul.f32 %v314, %v655
  %v720 = vmul.f32 %v315, %v655
  %v721 = vadd.f32 %v588, %v657
  %v722 = vadd.f32 %v589, %v658
  %v723 = vadd.f32 %v590, %v659
  %v724 = vadd.f32 %v591, %v660
  %v725 = vadd.f32 %v592, %v661
  %v726 = vadd.f32 %v593, %v662
  %v727 = vadd.f32 %v594, %v663
  %v728 = vadd.f32 %v595, %v664
  %v729 = vadd.f32 %v596, %v665
  %v730 = vadd.f32 %v597, %v666
  %v731 = vadd.f32 %v598, %v667
  %v732 = vadd.f32 %v599, %v668
  %v733 = vadd.f32 %v600, %v669
  %v734 = vadd.f32 %v601, %v670
  %v735 = vadd.f32 %v602, %v671
  %v736 = vadd.f32 %v603, %v672
  %v737 = vadd.f32 %v604, %v673
  %v738 = vadd.f32 %v605, %v674
  %v739 = vadd.f32 %v606, %v675
  %v740 = vadd.f32 %v607, %v676
  %v741 = vadd.f32 %v608, %v677
  %v742 = vadd.f32 %v609, %v678
  %v743 = vadd.f32 %v610, %v679
  %v744 = vadd.f32 %v611, %v680
  %v745 = vadd.f32 %v612, %v681
  %v746 = vadd.f32 %v613, %v682
  %v747 = vadd.f32 %v614, %v683
  %v748 = vadd.f32 %v615, %v684
  %v749 = vadd.f32 %v616, %v685
  %v750 = vadd.f32 %v617, %v686
  %v751 = vadd.f32 %v618, %v687
  %v752 = vadd.f32 %v619, %v688
  %v753 = vadd.f32 %v620, %v689
  %v754 = vadd.f32 %v621, %v690
  %v755 = vadd.f32 %v622, %v691
  %v756 = vadd.f32 %v623, %v692
  %v757 = vadd.f32 %v624, %v693
  %v758 = vadd.f32 %v625, %v694
  %v759 = vadd.f32 %v626, %v695
  %v760 = vadd.f32 %v627, %v696
  %v761 = vadd.f32 %v628, %v697
  %v762 = vadd.f32 %v629, %v698
  %v763 = vadd.f32 %v630, %v699
  %v764 = vadd.f32 %v631, %v700
  %v765 = vadd.f32 %v632, %v701
  %v766 = vadd.f32 %v633, %v702
  %v767 = vadd.f32 %v634, %v703
  %v768 = vadd.f32 %v635, %v704
  %v769 = vadd.f32 %v636, %v705
  %v770 = vadd.f32 %v637, %v706
  %v771 = vadd.f32 %v638, %v707
  %v772 = vadd.f32 %v639, %v708
  %v773 = vadd.f32 %v640, %v709
  %v774 = vadd.f32 %v641, %v710
  %v775 = vadd.f32 %v642, %v711
  %v776 = vadd.f32 %v643, %v712
  %v777 = vadd.f32 %v644, %v713
  %v778 = vadd.f32 %v645, %v714
  %v779 = vadd.f32 %v646, %v715
  %v780 = vadd.f32 %v647, %v716
  %v781 = vadd.f32 %v648, %v717
  %v782 = vadd.f32 %v649, %v718
  %v783 = vadd.f32 %v650, %v719
  %v784 = vadd.f32 %v651, %v720
  %s785 = scalar_lea.vmem %s1, 20
  %v786 = vld [vmem:[%s785] sm:$0x1]
  %v788 = vperm.slane %v786, 0
  %v790 = vmul.f32 %v246, %v788
  %v791 = vmul.f32 %v247, %v788
  %v792 = vmul.f32 %v248, %v788
  %v793 = vmul.f32 %v249, %v788
  %v794 = vmul.f32 %v250, %v788
  %v795 = vmul.f32 %v251, %v788
  %v796 = vmul.f32 %v252, %v788
  %v797 = vmul.f32 %v253, %v788
  %v798 = vmul.f32 %v254, %v788
  %v799 = vmul.f32 %v255, %v788
  %v800 = vmul.f32 %v256, %v788
  %v801 = vmul.f32 %v257, %v788
  %v802 = vmul.f32 %v258, %v788
  %v803 = vmul.f32 %v259, %v788
  %v804 = vmul.f32 %v260, %v788
  %v805 = vmul.f32 %v261, %v788
  %v806 = vmul.f32 %v262, %v788
  %v807 = vmul.f32 %v263, %v788
  %v808 = vmul.f32 %v264, %v788
  %v809 = vmul.f32 %v265, %v788
  %v810 = vmul.f32 %v266, %v788
  %v811 = vmul.f32 %v267, %v788
  %v812 = vmul.f32 %v268, %v788
  %v813 = vmul.f32 %v269, %v788
  %v814 = vmul.f32 %v270, %v788
  %v815 = vmul.f32 %v271, %v788
  %v816 = vmul.f32 %v272, %v788
  %v817 = vmul.f32 %v273, %v788
  %v818 = vmul.f32 %v274, %v788
  %v819 = vmul.f32 %v275, %v788
  %v820 = vmul.f32 %v276, %v788
  %v821 = vmul.f32 %v277, %v788
  %v822 = vmul.f32 %v286, %v788
  %v823 = vmul.f32 %v287, %v788
  %v824 = vmul.f32 %v288, %v788
  %v825 = vmul.f32 %v289, %v788
  %v826 = vmul.f32 %v290, %v788
  %v827 = vmul.f32 %v291, %v788
  %v828 = vmul.f32 %v292, %v788
  %v829 = vmul.f32 %v293, %v788
  %v830 = vmul.f32 %v294, %v788
  %v831 = vmul.f32 %v295, %v788
  %v832 = vmul.f32 %v296, %v788
  %v833 = vmul.f32 %v297, %v788
  %v834 = vmul.f32 %v298, %v788
  %v835 = vmul.f32 %v299, %v788
  %v836 = vmul.f32 %v300, %v788
  %v837 = vmul.f32 %v301, %v788
  %v838 = vmul.f32 %v302, %v788
  %v839 = vmul.f32 %v303, %v788
  %v840 = vmul.f32 %v304, %v788
  %v841 = vmul.f32 %v305, %v788
  %v842 = vmul.f32 %v306, %v788
  %v843 = vmul.f32 %v307, %v788
  %v844 = vmul.f32 %v308, %v788
  %v845 = vmul.f32 %v309, %v788
  %v846 = vmul.f32 %v310, %v788
  %v847 = vmul.f32 %v311, %v788
  %v848 = vmul.f32 %v312, %v788
  %v849 = vmul.f32 %v313, %v788
  %v850 = vmul.f32 %v314, %v788
  %v851 = vmul.f32 %v315, %v788
  %v852 = vmul.f32 %v316, %v788
  %v853 = vmul.f32 %v317, %v788
  %v854 = vadd.f32 %v721, %v790
  %v855 = vadd.f32 %v722, %v791
  %v856 = vadd.f32 %v723, %v792
  %v857 = vadd.f32 %v724, %v793
  %v858 = vadd.f32 %v725, %v794
  %v859 = vadd.f32 %v726, %v795
  %v860 = vadd.f32 %v727, %v796
  %v861 = vadd.f32 %v728, %v797
  %v862 = vadd.f32 %v729, %v798
  %v863 = vadd.f32 %v730, %v799
  %v864 = vadd.f32 %v731, %v800
  %v865 = vadd.f32 %v732, %v801
  %v866 = vadd.f32 %v733, %v802
  %v867 = vadd.f32 %v734, %v803
  %v868 = vadd.f32 %v735, %v804
  %v869 = vadd.f32 %v736, %v805
  %v870 = vadd.f32 %v737, %v806
  %v871 = vadd.f32 %v738, %v807
  %v872 = vadd.f32 %v739, %v808
  %v873 = vadd.f32 %v740, %v809
  %v874 = vadd.f32 %v741, %v810
  %v875 = vadd.f32 %v742, %v811
  %v876 = vadd.f32 %v743, %v812
  %v877 = vadd.f32 %v744, %v813
  %v878 = vadd.f32 %v745, %v814
  %v879 = vadd.f32 %v746, %v815
  %v880 = vadd.f32 %v747, %v816
  %v881 = vadd.f32 %v748, %v817
  %v882 = vadd.f32 %v749, %v818
  %v883 = vadd.f32 %v750, %v819
  %v884 = vadd.f32 %v751, %v820
  %v885 = vadd.f32 %v752, %v821
  %v886 = vadd.f32 %v753, %v822
  %v887 = vadd.f32 %v754, %v823
  %v888 = vadd.f32 %v755, %v824
  %v889 = vadd.f32 %v756, %v825
  %v890 = vadd.f32 %v757, %v826
  %v891 = vadd.f32 %v758, %v827
  %v892 = vadd.f32 %v759, %v828
  %v893 = vadd.f32 %v760, %v829
  %v894 = vadd.f32 %v761, %v830
  %v895 = vadd.f32 %v762, %v831
  %v896 = vadd.f32 %v763, %v832
  %v897 = vadd.f32 %v764, %v833
  %v898 = vadd.f32 %v765, %v834
  %v899 = vadd.f32 %v766, %v835
  %v900 = vadd.f32 %v767, %v836
  %v901 = vadd.f32 %v768, %v837
  %v902 = vadd.f32 %v769, %v838
  %v903 = vadd.f32 %v770, %v839
  %v904 = vadd.f32 %v771, %v840
  %v905 = vadd.f32 %v772, %v841
  %v906 = vadd.f32 %v773, %v842
  %v907 = vadd.f32 %v774, %v843
  %v908 = vadd.f32 %v775, %v844
  %v909 = vadd.f32 %v776, %v845
  %v910 = vadd.f32 %v777, %v846
  %v911 = vadd.f32 %v778, %v847
  %v912 = vadd.f32 %v779, %v848
  %v913 = vadd.f32 %v780, %v849
  %v914 = vadd.f32 %v781, %v850
  %v915 = vadd.f32 %v782, %v851
  %v916 = vadd.f32 %v783, %v852
  %v917 = vadd.f32 %v784, %v853
  %v918 = vadd.f32 %v854, 0.0
  %v919 = vadd.f32 %v855, 0.0
  %v920 = vadd.f32 %v856, 0.0
  %v921 = vadd.f32 %v857, 0.0
  %v922 = vadd.f32 %v858, 0.0
  %v923 = vadd.f32 %v859, 0.0
  %v924 = vadd.f32 %v860, 0.0
  %v925 = vadd.f32 %v861, 0.0
  %v926 = vadd.f32 %v862, 0.0
  %v927 = vadd.f32 %v863, 0.0
  %v928 = vadd.f32 %v864, 0.0
  %v929 = vadd.f32 %v865, 0.0
  %v930 = vadd.f32 %v866, 0.0
  %v931 = vadd.f32 %v867, 0.0
  %v932 = vadd.f32 %v868, 0.0
  %v933 = vadd.f32 %v869, 0.0
  %v934 = vadd.f32 %v870, 0.0
  %v935 = vadd.f32 %v871, 0.0
  %v936 = vadd.f32 %v872, 0.0
  %v937 = vadd.f32 %v873, 0.0
  %v938 = vadd.f32 %v874, 0.0
  %v939 = vadd.f32 %v875, 0.0
  %v940 = vadd.f32 %v876, 0.0
  %v941 = vadd.f32 %v877, 0.0
  %v942 = vadd.f32 %v878, 0.0
  %v943 = vadd.f32 %v879, 0.0
  %v944 = vadd.f32 %v880, 0.0
  %v945 = vadd.f32 %v881, 0.0
  %v946 = vadd.f32 %v882, 0.0
  %v947 = vadd.f32 %v883, 0.0
  %v948 = vadd.f32 %v884, 0.0
  %v949 = vadd.f32 %v885, 0.0
  %v950 = vadd.f32 %v886, 0.0
  %v951 = vadd.f32 %v887, 0.0
  %v952 = vadd.f32 %v888, 0.0
  %v953 = vadd.f32 %v889, 0.0
  %v954 = vadd.f32 %v890, 0.0
  %v955 = vadd.f32 %v891, 0.0
  %v956 = vadd.f32 %v892, 0.0
  %v957 = vadd.f32 %v893, 0.0
  %v958 = vadd.f32 %v894, 0.0
  %v959 = vadd.f32 %v895, 0.0
  %v960 = vadd.f32 %v896, 0.0
  %v961 = vadd.f32 %v897, 0.0
  %v962 = vadd.f32 %v898, 0.0
  %v963 = vadd.f32 %v899, 0.0
  %v964 = vadd.f32 %v900, 0.0
  %v965 = vadd.f32 %v901, 0.0
  %v966 = vadd.f32 %v902, 0.0
  %v967 = vadd.f32 %v903, 0.0
  %v968 = vadd.f32 %v904, 0.0
  %v969 = vadd.f32 %v905, 0.0
  %v970 = vadd.f32 %v906, 0.0
  %v971 = vadd.f32 %v907, 0.0
  %v972 = vadd.f32 %v908, 0.0
  %v973 = vadd.f32 %v909, 0.0
  %v974 = vadd.f32 %v910, 0.0
  %v975 = vadd.f32 %v911, 0.0
  %v976 = vadd.f32 %v912, 0.0
  %v977 = vadd.f32 %v913, 0.0
  %v978 = vadd.f32 %v914, 0.0
  %v979 = vadd.f32 %v915, 0.0
  %v980 = vadd.f32 %v916, 0.0
  %v981 = vadd.f32 %v917, 0.0
  %v982 = vld [vmem:[#allocation2 + $0x1] sm:$0xff]
  %v983 = vld [vmem:[#allocation2 + $0x9] sm:$0xff]
  %v984 = vld [vmem:[#allocation2 + $0x19] sm:$0xff]
  %v985 = vld [vmem:[#allocation2 + $0x21] sm:$0xff]
  %v986 = vld [vmem:[#allocation2 + $0x31] sm:$0xff]
  %v987 = vld [vmem:[#allocation2 + $0x39] sm:$0xff]
  %v988 = vld [vmem:[#allocation2 + $0x49] sm:$0xff]
  %v989 = vld [vmem:[#allocation2 + $0x51] sm:$0xff]
  %v990 = vld [vmem:[#allocation2 + $0x61] sm:$0xff]
  %v991 = vld [vmem:[#allocation2 + $0x69] sm:$0xff]
  %v992 = vld [vmem:[#allocation2 + $0x79] sm:$0xff]
  %v993 = vld [vmem:[#allocation2 + $0x81] sm:$0xff]
  %v994 = vld [vmem:[#allocation2 + $0x91] sm:$0xff]
  %v995 = vld [vmem:[#allocation2 + $0x99] sm:$0xff]
  %v996 = vld [vmem:[#allocation2 + $0xa9] sm:$0xff]
  %v997 = vld [vmem:[#allocation2 + $0xb1] sm:$0xff]
  %v998 = vld [vmem:[#allocation2 + $0xc1] sm:$0xff]
  %v999 = vld [vmem:[#allocation2 + $0xc9] sm:$0xff]
  %v1000 = vld [vmem:[#allocation2 + $0xd9] sm:$0xff]
  %v1001 = vld [vmem:[#allocation2 + $0xe1] sm:$0xff]
  %v1002 = vld [vmem:[#allocation2 + $0xf1] sm:$0xff]
  %v1003 = vld [vmem:[#allocation2 + $0xf9] sm:$0xff]
  %v1004 = vld [vmem:[#allocation2 + $0x109] sm:$0xff]
  %v1005 = vld [vmem:[#allocation2 + $0x111] sm:$0xff]
  %v1006 = vld [vmem:[#allocation2 + $0x121] sm:$0xff]
  %v1007 = vld [vmem:[#allocation2 + $0x129] sm:$0xff]
  %v1008 = vld [vmem:[#allocation2 + $0x139] sm:$0xff]
  %v1009 = vld [vmem:[#allocation2 + $0x141] sm:$0xff]
  %v1010 = vld [vmem:[#allocation2 + $0x151] sm:$0xff]
  %v1011 = vld [vmem:[#allocation2 + $0x159] sm:$0xff]
  %v1012 = vld [vmem:[#allocation2 + $0x169] sm:$0xff]
  %v1013 = vld [vmem:[#allocation2 + $0x171] sm:$0xff]
  %v1014 = vld [vmem:[#allocation2 + $0x181] sm:$0xff]
  %v1015 = vld [vmem:[#allocation2 + $0x189] sm:$0xff]
  %v1016 = vld [vmem:[#allocation2 + $0x199] sm:$0xff]
  %v1017 = vld [vmem:[#allocation2 + $0x1a1] sm:$0xff]
  %v1018 = vld [vmem:[#allocation2 + $0x1b1] sm:$0xff]
  %v1019 = vld [vmem:[#allocation2 + $0x1b9] sm:$0xff]
  %v1020 = vld [vmem:[#allocation2 + $0x1c9] sm:$0xff]
  %v1021 = vld [vmem:[#allocation2 + $0x1d1] sm:$0xff]
  %v1022 = vld [vmem:[#allocation2 + $0x1e1] sm:$0xff]
  %v1023 = vld [vmem:[#allocation2 + $0x1e9] sm:$0xff]
  %v1024 = vld [vmem:[#allocation2 + $0x1f9] sm:$0xff]
  %v1025 = vld [vmem:[#allocation2 + $0x201] sm:$0xff]
  %v1026 = vld [vmem:[#allocation2 + $0x211] sm:$0xff]
  %v1027 = vld [vmem:[#allocation2 + $0x219] sm:$0xff]
  %v1028 = vld [vmem:[#allocation2 + $0x229] sm:$0xff]
  %v1029 = vld [vmem:[#allocation2 + $0x231] sm:$0xff]
  %v1030 = vld [vmem:[#allocation2 + $0x241] sm:$0xff]
  %v1031 = vld [vmem:[#allocation2 + $0x249] sm:$0xff]
  %v1032 = vld [vmem:[#allocation2 + $0x259] sm:$0xff]
  %v1033 = vld [vmem:[#allocation2 + $0x261] sm:$0xff]
  %v1034 = vld [vmem:[#allocation2 + $0x271] sm:$0xff]
  %v1035 = vld [vmem:[#allocation2 + $0x279] sm:$0xff]
  %v1036 = vld [vmem:[#allocation2 + $0x289] sm:$0xff]
  %v1037 = vld [vmem:[#allocation2 + $0x291] sm:$0xff]
  %v1038 = vld [vmem:[#allocation2 + $0x2a1] sm:$0xff]
  %v1039 = vld [vmem:[#allocation2 + $0x2a9] sm:$0xff]
  %v1040 = vld [vmem:[#allocation2 + $0x2b9] sm:$0xff]
  %v1041 = vld [vmem:[#allocation2 + $0x2c1] sm:$0xff]
  %v1042 = vld [vmem:[#allocation2 + $0x2d1] sm:$0xff]
  %v1043 = vld [vmem:[#allocation2 + $0x2d9] sm:$0xff]
  %v1044 = vld [vmem:[#allocation2 + $0x2e9] sm:$0xff]
  %v1045 = vld [vmem:[#allocation2 + $0x2f1] sm:$0xff]
  %v1046 = vld [vmem:[#allocation2 + $0x301] sm:$0xff]
  %v1047 = vld [vmem:[#allocation2 + $0x309] sm:$0xff]
  %v1048 = vld [vmem:[#allocation2 + $0x319] sm:$0xff]
  %v1049 = vld [vmem:[#allocation2 + $0x321] sm:$0xff]
  %v1050 = vld [vmem:[#allocation2 + $0x331] sm:$0xff]
  %v1051 = vld [vmem:[#allocation2 + $0x339] sm:$0xff]
  %v1052 = vld [vmem:[#allocation2 + $0x349] sm:$0xff]
  %v1053 = vld [vmem:[#allocation2 + $0x351] sm:$0xff]
  %v1054 = vld [vmem:[#allocation2 + $0x361] sm:$0xff]
  %v1055 = vld [vmem:[#allocation2 + $0x369] sm:$0xff]
  %v1056 = vld [vmem:[#allocation2 + $0x379] sm:$0xff]
  %v1057 = vld [vmem:[#allocation2 + $0x381] sm:$0xff]
  %v1058 = vld [vmem:[#allocation2 + $0x391] sm:$0xff]
  %v1059 = vld [vmem:[#allocation2 + $0x399] sm:$0xff]
  %v1060 = vld [vmem:[#allocation2 + $0x3a9] sm:$0xff]
  %v1061 = vld [vmem:[#allocation2 + $0x3b1] sm:$0xff]
  %s1062 = scalar_lea.vmem %s1, 1
  %v1063 = vld [vmem:[%s1062] sm:$0x1]
  %v1065 = vperm.slane %v1063, 0
  %v1067 = vmul.f32 %v982, %v1065
  %v1068 = vmul.f32 %v983, %v1065
  %v1069 = vmul.f32 %v984, %v1065
  %v1070 = vmul.f32 %v985, %v1065
  %v1071 = vmul.f32 %v986, %v1065
  %v1072 = vmul.f32 %v987, %v1065
  %v1073 = vmul.f32 %v988, %v1065
  %v1074 = vmul.f32 %v989, %v1065
  %v1075 = vmul.f32 %v990, %v1065
  %v1076 = vmul.f32 %v991, %v1065
  %v1077 = vmul.f32 %v992, %v1065
  %v1078 = vmul.f32 %v993, %v1065
  %v1079 = vmul.f32 %v994, %v1065
  %v1080 = vmul.f32 %v995, %v1065
  %v1081 = vmul.f32 %v996, %v1065
  %v1082 = vmul.f32 %v997, %v1065
  %v1083 = vmul.f32 %v998, %v1065
  %v1084 = vmul.f32 %v999, %v1065
  %v1085 = vmul.f32 %v1000, %v1065
  %v1086 = vmul.f32 %v1001, %v1065
  %v1087 = vmul.f32 %v1002, %v1065
  %v1088 = vmul.f32 %v1003, %v1065
  %v1089 = vmul.f32 %v1004, %v1065
  %v1090 = vmul.f32 %v1005, %v1065
  %v1091 = vmul.f32 %v1006, %v1065
  %v1092 = vmul.f32 %v1007, %v1065
  %v1093 = vmul.f32 %v1008, %v1065
  %v1094 = vmul.f32 %v1009, %v1065
  %v1095 = vmul.f32 %v1010, %v1065
  %v1096 = vmul.f32 %v1011, %v1065
  %v1097 = vmul.f32 %v1012, %v1065
  %v1098 = vmul.f32 %v1013, %v1065
  %v1099 = vmul.f32 %v1022, %v1065
  %v1100 = vmul.f32 %v1023, %v1065
  %v1101 = vmul.f32 %v1024, %v1065
  %v1102 = vmul.f32 %v1025, %v1065
  %v1103 = vmul.f32 %v1026, %v1065
  %v1104 = vmul.f32 %v1027, %v1065
  %v1105 = vmul.f32 %v1028, %v1065
  %v1106 = vmul.f32 %v1029, %v1065
  %v1107 = vmul.f32 %v1030, %v1065
  %v1108 = vmul.f32 %v1031, %v1065
  %v1109 = vmul.f32 %v1032, %v1065
  %v1110 = vmul.f32 %v1033, %v1065
  %v1111 = vmul.f32 %v1034, %v1065
  %v1112 = vmul.f32 %v1035, %v1065
  %v1113 = vmul.f32 %v1036, %v1065
  %v1114 = vmul.f32 %v1037, %v1065
  %v1115 = vmul.f32 %v1038, %v1065
  %v1116 = vmul.f32 %v1039, %v1065
  %v1117 = vmul.f32 %v1040, %v1065
  %v1118 = vmul.f32 %v1041, %v1065
  %v1119 = vmul.f32 %v1042, %v1065
  %v1120 = vmul.f32 %v1043, %v1065
  %v1121 = vmul.f32 %v1044, %v1065
  %v1122 = vmul.f32 %v1045, %v1065
  %v1123 = vmul.f32 %v1046, %v1065
  %v1124 = vmul.f32 %v1047, %v1065
  %v1125 = vmul.f32 %v1048, %v1065
  %v1126 = vmul.f32 %v1049, %v1065
  %v1127 = vmul.f32 %v1050, %v1065
  %v1128 = vmul.f32 %v1051, %v1065
  %v1129 = vmul.f32 %v1052, %v1065
  %v1130 = vmul.f32 %v1053, %v1065
  %s1131 = scalar_lea.vmem %s1, 6
  %v1132 = vld [vmem:[%s1131] sm:$0x1]
  %v1134 = vperm.slane %v1132, 0
  %v1136 = vmul.f32 %v984, %v1134
  %v1137 = vmul.f32 %v985, %v1134
  %v1138 = vmul.f32 %v986, %v1134
  %v1139 = vmul.f32 %v987, %v1134
  %v1140 = vmul.f32 %v988, %v1134
  %v1141 = vmul.f32 %v989, %v1134
  %v1142 = vmul.f32 %v990, %v1134
  %v1143 = vmul.f32 %v991, %v1134
  %v1144 = vmul.f32 %v992, %v1134
  %v1145 = vmul.f32 %v993, %v1134
  %v1146 = vmul.f32 %v994, %v1134
  %v1147 = vmul.f32 %v995, %v1134
  %v1148 = vmul.f32 %v996, %v1134
  %v1149 = vmul.f32 %v997, %v1134
  %v1150 = vmul.f32 %v998, %v1134
  %v1151 = vmul.f32 %v999, %v1134
  %v1152 = vmul.f32 %v1000, %v1134
  %v1153 = vmul.f32 %v1001, %v1134
  %v1154 = vmul.f32 %v1002, %v1134
  %v1155 = vmul.f32 %v1003, %v1134
  %v1156 = vmul.f32 %v1004, %v1134
  %v1157 = vmul.f32 %v1005, %v1134
  %v1158 = vmul.f32 %v1006, %v1134
  %v1159 = vmul.f32 %v1007, %v1134
  %v1160 = vmul.f32 %v1008, %v1134
  %v1161 = vmul.f32 %v1009, %v1134
  %v1162 = vmul.f32 %v1010, %v1134
  %v1163 = vmul.f32 %v1011, %v1134
  %v1164 = vmul.f32 %v1012, %v1134
  %v1165 = vmul.f32 %v1013, %v1134
  %v1166 = vmul.f32 %v1014, %v1134
  %v1167 = vmul.f32 %v1015, %v1134
  %v1168 = vmul.f32 %v1024, %v1134
  %v1169 = vmul.f32 %v1025, %v1134
  %v1170 = vmul.f32 %v1026, %v1134
  %v1171 = vmul.f32 %v1027, %v1134
  %v1172 = vmul.f32 %v1028, %v1134
  %v1173 = vmul.f32 %v1029, %v1134
  %v1174 = vmul.f32 %v1030, %v1134
  %v1175 = vmul.f32 %v1031, %v1134
  %v1176 = vmul.f32 %v1032, %v1134
  %v1177 = vmul.f32 %v1033, %v1134
  %v1178 = vmul.f32 %v1034, %v1134
  %v1179 = vmul.f32 %v1035, %v1134
  %v1180 = vmul.f32 %v1036, %v1134
  %v1181 = vmul.f32 %v1037, %v1134
  %v1182 = vmul.f32 %v1038, %v1134
  %v1183 = vmul.f32 %v1039, %v1134
  %v1184 = vmul.f32 %v1040, %v1134
  %v1185 = vmul.f32 %v1041, %v1134
  %v1186 = vmul.f32 %v1042, %v1134
  %v1187 = vmul.f32 %v1043, %v1134
  %v1188 = vmul.f32 %v1044, %v1134
  %v1189 = vmul.f32 %v1045, %v1134
  %v1190 = vmul.f32 %v1046, %v1134
  %v1191 = vmul.f32 %v1047, %v1134
  %v1192 = vmul.f32 %v1048, %v1134
  %v1193 = vmul.f32 %v1049, %v1134
  %v1194 = vmul.f32 %v1050, %v1134
  %v1195 = vmul.f32 %v1051, %v1134
  %v1196 = vmul.f32 %v1052, %v1134
  %v1197 = vmul.f32 %v1053, %v1134
  %v1198 = vmul.f32 %v1054, %v1134
  %v1199 = vmul.f32 %v1055, %v1134
  %v1200 = vadd.f32 %v1067, %v1136
  %v1201 = vadd.f32 %v1068, %v1137
  %v1202 = vadd.f32 %v1069, %v1138
  %v1203 = vadd.f32 %v1070, %v1139
  %v1204 = vadd.f32 %v1071, %v1140
  %v1205 = vadd.f32 %v1072, %v1141
  %v1206 = vadd.f32 %v1073, %v1142
  %v1207 = vadd.f32 %v1074, %v1143
  %v1208 = vadd.f32 %v1075, %v1144
  %v1209 = vadd.f32 %v1076, %v1145
  %v1210 = vadd.f32 %v1077, %v1146
  %v1211 = vadd.f32 %v1078, %v1147
  %v1212 = vadd.f32 %v1079, %v1148
  %v1213 = vadd.f32 %v1080, %v1149
  %v1214 = vadd.f32 %v1081, %v1150
  %v1215 = vadd.f32 %v1082, %v1151
  %v1216 = vadd.f32 %v1083, %v1152
  %v1217 = vadd.f32 %v1084, %v1153
  %v1218 = vadd.f32 %v1085, %v1154
  %v1219 = vadd.f32 %v1086, %v1155
  %v1220 = vadd.f32 %v1087, %v1156
  %v1221 = vadd.f32 %v1088, %v1157
  %v1222 = vadd.f32 %v1089, %v1158
  %v1223 = vadd.f32 %v1090, %v1159
  %v1224 = vadd.f32 %v1091, %v1160
  %v1225 = vadd.f32 %v1092, %v1161
  %v1226 = vadd.f32 %v1093, %v1162
  %v1227 = vadd.f32 %v1094, %v1163
  %v1228 = vadd.f32 %v1095, %v1164
  %v1229 = vadd.f32 %v1096, %v1165
  %v1230 = vadd.f32 %v1097, %v1166
  %v1231 = vadd.f32 %v1098, %v1167
  %v1232 = vadd.f32 %v1099, %v1168
  %v1233 = vadd.f32 %v1100, %v1169
  %v1234 = vadd.f32 %v1101, %v1170
  %v1235 = vadd.f32 %v1102, %v1171
  %v1236 = vadd.f32 %v1103, %v1172
  %v1237 = vadd.f32 %v1104, %v1173
  %v1238 = vadd.f32 %v1105, %v1174
  %v1239 = vadd.f32 %v1106, %v1175
  %v1240 = vadd.f32 %v1107, %v1176
  %v1241 = vadd.f32 %v1108, %v1177
  %v1242 = vadd.f32 %v1109, %v1178
  %v1243 = vadd.f32 %v1110, %v1179
  %v1244 = vadd.f32 %v1111, %v1180
  %v1245 = vadd.f32 %v1112, %v1181
  %v1246 = vadd.f32 %v1113, %v1182
  %v1247 = vadd.f32 %v1114, %v1183
  %v1248 = vadd.f32 %v1115, %v1184
  %v1249 = vadd.f32 %v1116, %v1185
  %v1250 = vadd.f32 %v1117, %v1186
  %v1251 = vadd.f32 %v1118, %v1187
  %v1252 = vadd.f32 %v1119, %v1188
  %v1253 = vadd.f32 %v1120, %v1189
  %v1254 = vadd.f32 %v1121, %v1190
  %v1255 = vadd.f32 %v1122, %v1191
  %v1256 = vadd.f32 %v1123, %v1192
  %v1257 = vadd.f32 %v1124, %v1193
  %v1258 = vadd.f32 %v1125, %v1194
  %v1259 = vadd.f32 %v1126, %v1195
  %v1260 = vadd.f32 %v1127, %v1196
  %v1261 = vadd.f32 %v1128, %v1197
  %v1262 = vadd.f32 %v1129, %v1198
  %v1263 = vadd.f32 %v1130, %v1199
  %s1264 = scalar_lea.vmem %s1, 11
  %v1265 = vld [vmem:[%s1264] sm:$0x1]
  %v1267 = vperm.slane %v1265, 0
  %v1269 = vmul.f32 %v986, %v1267
  %v1270 = vmul.f32 %v987, %v1267
  %v1271 = vmul.f32 %v988, %v1267
  %v1272 = vmul.f32 %v989, %v1267
  %v1273 = vmul.f32 %v990, %v1267
  %v1274 = vmul.f32 %v991, %v1267
  %v1275 = vmul.f32 %v992, %v1267
  %v1276 = vmul.f32 %v993, %v1267
  %v1277 = vmul.f32 %v994, %v1267
  %v1278 = vmul.f32 %v995, %v1267
  %v1279 = vmul.f32 %v996, %v1267
  %v1280 = vmul.f32 %v997, %v1267
  %v1281 = vmul.f32 %v998, %v1267
  %v1282 = vmul.f32 %v999, %v1267
  %v1283 = vmul.f32 %v1000, %v1267
  %v1284 = vmul.f32 %v1001, %v1267
  %v1285 = vmul.f32 %v1002, %v1267
  %v1286 = vmul.f32 %v1003, %v1267
  %v1287 = vmul.f32 %v1004, %v1267
  %v1288 = vmul.f32 %v1005, %v1267
  %v1289 = vmul.f32 %v1006, %v1267
  %v1290 = vmul.f32 %v1007, %v1267
  %v1291 = vmul.f32 %v1008, %v1267
  %v1292 = vmul.f32 %v1009, %v1267
  %v1293 = vmul.f32 %v1010, %v1267
  %v1294 = vmul.f32 %v1011, %v1267
  %v1295 = vmul.f32 %v1012, %v1267
  %v1296 = vmul.f32 %v1013, %v1267
  %v1297 = vmul.f32 %v1014, %v1267
  %v1298 = vmul.f32 %v1015, %v1267
  %v1299 = vmul.f32 %v1016, %v1267
  %v1300 = vmul.f32 %v1017, %v1267
  %v1301 = vmul.f32 %v1026, %v1267
  %v1302 = vmul.f32 %v1027, %v1267
  %v1303 = vmul.f32 %v1028, %v1267
  %v1304 = vmul.f32 %v1029, %v1267
  %v1305 = vmul.f32 %v1030, %v1267
  %v1306 = vmul.f32 %v1031, %v1267
  %v1307 = vmul.f32 %v1032, %v1267
  %v1308 = vmul.f32 %v1033, %v1267
  %v1309 = vmul.f32 %v1034, %v1267
  %v1310 = vmul.f32 %v1035, %v1267
  %v1311 = vmul.f32 %v1036, %v1267
  %v1312 = vmul.f32 %v1037, %v1267
  %v1313 = vmul.f32 %v1038, %v1267
  %v1314 = vmul.f32 %v1039, %v1267
  %v1315 = vmul.f32 %v1040, %v1267
  %v1316 = vmul.f32 %v1041, %v1267
  %v1317 = vmul.f32 %v1042, %v1267
  %v1318 = vmul.f32 %v1043, %v1267
  %v1319 = vmul.f32 %v1044, %v1267
  %v1320 = vmul.f32 %v1045, %v1267
  %v1321 = vmul.f32 %v1046, %v1267
  %v1322 = vmul.f32 %v1047, %v1267
  %v1323 = vmul.f32 %v1048, %v1267
  %v1324 = vmul.f32 %v1049, %v1267
  %v1325 = vmul.f32 %v1050, %v1267
  %v1326 = vmul.f32 %v1051, %v1267
  %v1327 = vmul.f32 %v1052, %v1267
  %v1328 = vmul.f32 %v1053, %v1267
  %v1329 = vmul.f32 %v1054, %v1267
  %v1330 = vmul.f32 %v1055, %v1267
  %v1331 = vmul.f32 %v1056, %v1267
  %v1332 = vmul.f32 %v1057, %v1267
  %v1333 = vadd.f32 %v1200, %v1269
  %v1334 = vadd.f32 %v1201, %v1270
  %v1335 = vadd.f32 %v1202, %v1271
  %v1336 = vadd.f32 %v1203, %v1272
  %v1337 = vadd.f32 %v1204, %v1273
  %v1338 = vadd.f32 %v1205, %v1274
  %v1339 = vadd.f32 %v1206, %v1275
  %v1340 = vadd.f32 %v1207, %v1276
  %v1341 = vadd.f32 %v1208, %v1277
  %v1342 = vadd.f32 %v1209, %v1278
  %v1343 = vadd.f32 %v1210, %v1279
  %v1344 = vadd.f32 %v1211, %v1280
  %v1345 = vadd.f32 %v1212, %v1281
  %v1346 = vadd.f32 %v1213, %v1282
  %v1347 = vadd.f32 %v1214, %v1283
  %v1348 = vadd.f32 %v1215, %v1284
  %v1349 = vadd.f32 %v1216, %v1285
  %v1350 = vadd.f32 %v1217, %v1286
  %v1351 = vadd.f32 %v1218, %v1287
  %v1352 = vadd.f32 %v1219, %v1288
  %v1353 = vadd.f32 %v1220, %v1289
  %v1354 = vadd.f32 %v1221, %v1290
  %v1355 = vadd.f32 %v1222, %v1291
  %v1356 = vadd.f32 %v1223, %v1292
  %v1357 = vadd.f32 %v1224, %v1293
  %v1358 = vadd.f32 %v1225, %v1294
  %v1359 = vadd.f32 %v1226, %v1295
  %v1360 = vadd.f32 %v1227, %v1296
  %v1361 = vadd.f32 %v1228, %v1297
  %v1362 = vadd.f32 %v1229, %v1298
  %v1363 = vadd.f32 %v1230, %v1299
  %v1364 = vadd.f32 %v1231, %v1300
  %v1365 = vadd.f32 %v1232, %v1301
  %v1366 = vadd.f32 %v1233, %v1302
  %v1367 = vadd.f32 %v1234, %v1303
  %v1368 = vadd.f32 %v1235, %v1304
  %v1369 = vadd.f32 %v1236, %v1305
  %v1370 = vadd.f32 %v1237, %v1306
  %v1371 = vadd.f32 %v1238, %v1307
  %v1372 = vadd.f32 %v1239, %v1308
  %v1373 = vadd.f32 %v1240, %v1309
  %v1374 = vadd.f32 %v1241, %v1310
  %v1375 = vadd.f32 %v1242, %v1311
  %v1376 = vadd.f32 %v1243, %v1312
  %v1377 = vadd.f32 %v1244, %v1313
  %v1378 = vadd.f32 %v1245, %v1314
  %v1379 = vadd.f32 %v1246, %v1315
  %v1380 = vadd.f32 %v1247, %v1316
  %v1381 = vadd.f32 %v1248, %v1317
  %v1382 = vadd.f32 %v1249, %v1318
  %v1383 = vadd.f32 %v1250, %v1319
  %v1384 = vadd.f32 %v1251, %v1320
  %v1385 = vadd.f32 %v1252, %v1321
  %v1386 = vadd.f32 %v1253, %v1322
  %v1387 = vadd.f32 %v1254, %v1323
  %v1388 = vadd.f32 %v1255, %v1324
  %v1389 = vadd.f32 %v1256, %v1325
  %v1390 = vadd.f32 %v1257, %v1326
  %v1391 = vadd.f32 %v1258, %v1327
  %v1392 = vadd.f32 %v1259, %v1328
  %v1393 = vadd.f32 %v1260, %v1329
  %v1394 = vadd.f32 %v1261, %v1330
  %v1395 = vadd.f32 %v1262, %v1331
  %v1396 = vadd.f32 %v1263, %v1332
  %s1397 = scalar_lea.vmem %s1, 16
  %v1398 = vld [vmem:[%s1397] sm:$0x1]
  %v1400 = vperm.slane %v1398, 0
  %v1402 = vmul.f32 %v988, %v1400
  %v1403 = vmul.f32 %v989, %v1400
  %v1404 = vmul.f32 %v990, %v1400
  %v1405 = vmul.f32 %v991, %v1400
  %v1406 = vmul.f32 %v992, %v1400
  %v1407 = vmul.f32 %v993, %v1400
  %v1408 = vmul.f32 %v994, %v1400
  %v1409 = vmul.f32 %v995, %v1400
  %v1410 = vmul.f32 %v996, %v1400
  %v1411 = vmul.f32 %v997, %v1400
  %v1412 = vmul.f32 %v998, %v1400
  %v1413 = vmul.f32 %v999, %v1400
  %v1414 = vmul.f32 %v1000, %v1400
  %v1415 = vmul.f32 %v1001, %v1400
  %v1416 = vmul.f32 %v1002, %v1400
  %v1417 = vmul.f32 %v1003, %v1400
  %v1418 = vmul.f32 %v1004, %v1400
  %v1419 = vmul.f32 %v1005, %v1400
  %v1420 = vmul.f32 %v1006, %v1400
  %v1421 = vmul.f32 %v1007, %v1400
  %v1422 = vmul.f32 %v1008, %v1400
  %v1423 = vmul.f32 %v1009, %v1400
  %v1424 = vmul.f32 %v1010, %v1400
  %v1425 = vmul.f32 %v1011, %v1400
  %v1426 = vmul.f32 %v1012, %v1400
  %v1427 = vmul.f32 %v1013, %v1400
  %v1428 = vmul.f32 %v1014, %v1400
  %v1429 = vmul.f32 %v1015, %v1400
  %v1430 = vmul.f32 %v1016, %v1400
  %v1431 = vmul.f32 %v1017, %v1400
  %v1432 = vmul.f32 %v1018, %v1400
  %v1433 = vmul.f32 %v1019, %v1400
  %v1434 = vmul.f32 %v1028, %v1400
  %v1435 = vmul.f32 %v1029, %v1400
  %v1436 = vmul.f32 %v1030, %v1400
  %v1437 = vmul.f32 %v1031, %v1400
  %v1438 = vmul.f32 %v1032, %v1400
  %v1439 = vmul.f32 %v1033, %v1400
  %v1440 = vmul.f32 %v1034, %v1400
  %v1441 = vmul.f32 %v1035, %v1400
  %v1442 = vmul.f32 %v1036, %v1400
  %v1443 = vmul.f32 %v1037, %v1400
  %v1444 = vmul.f32 %v1038, %v1400
  %v1445 = vmul.f32 %v1039, %v1400
  %v1446 = vmul.f32 %v1040, %v1400
  %v1447 = vmul.f32 %v1041, %v1400
  %v1448 = vmul.f32 %v1042, %v1400
  %v1449 = vmul.f32 %v1043, %v1400
  %v1450 = vmul.f32 %v1044, %v1400
  %v1451 = vmul.f32 %v1045, %v1400
  %v1452 = vmul.f32 %v1046, %v1400
  %v1453 = vmul.f32 %v1047, %v1400
  %v1454 = vmul.f32 %v1048, %v1400
  %v1455 = vmul.f32 %v1049, %v1400
  %v1456 = vmul.f32 %v1050, %v1400
  %v1457 = vmul.f32 %v1051, %v1400
  %v1458 = vmul.f32 %v1052, %v1400
  %v1459 = vmul.f32 %v1053, %v1400
  %v1460 = vmul.f32 %v1054, %v1400
  %v1461 = vmul.f32 %v1055, %v1400
  %v1462 = vmul.f32 %v1056, %v1400
  %v1463 = vmul.f32 %v1057, %v1400
  %v1464 = vmul.f32 %v1058, %v1400
  %v1465 = vmul.f32 %v1059, %v1400
  %v1466 = vadd.f32 %v1333, %v1402
  %v1467 = vadd.f32 %v1334, %v1403
  %v1468 = vadd.f32 %v1335, %v1404
  %v1469 = vadd.f32 %v1336, %v1405
  %v1470 = vadd.f32 %v1337, %v1406
  %v1471 = vadd.f32 %v1338, %v1407
  %v1472 = vadd.f32 %v1339, %v1408
  %v1473 = vadd.f32 %v1340, %v1409
  %v1474 = vadd.f32 %v1341, %v1410
  %v1475 = vadd.f32 %v1342, %v1411
  %v1476 = vadd.f32 %v1343, %v1412
  %v1477 = vadd.f32 %v1344, %v1413
  %v1478 = vadd.f32 %v1345, %v1414
  %v1479 = vadd.f32 %v1346, %v1415
  %v1480 = vadd.f32 %v1347, %v1416
  %v1481 = vadd.f32 %v1348, %v1417
  %v1482 = vadd.f32 %v1349, %v1418
  %v1483 = vadd.f32 %v1350, %v1419
  %v1484 = vadd.f32 %v1351, %v1420
  %v1485 = vadd.f32 %v1352, %v1421
  %v1486 = vadd.f32 %v1353, %v1422
  %v1487 = vadd.f32 %v1354, %v1423
  %v1488 = vadd.f32 %v1355, %v1424
  %v1489 = vadd.f32 %v1356, %v1425
  %v1490 = vadd.f32 %v1357, %v1426
  %v1491 = vadd.f32 %v1358, %v1427
  %v1492 = vadd.f32 %v1359, %v1428
  %v1493 = vadd.f32 %v1360, %v1429
  %v1494 = vadd.f32 %v1361, %v1430
  %v1495 = vadd.f32 %v1362, %v1431
  %v1496 = vadd.f32 %v1363, %v1432
  %v1497 = vadd.f32 %v1364, %v1433
  %v1498 = vadd.f32 %v1365, %v1434
  %v1499 = vadd.f32 %v1366, %v1435
  %v1500 = vadd.f32 %v1367, %v1436
  %v1501 = vadd.f32 %v1368, %v1437
  %v1502 = vadd.f32 %v1369, %v1438
  %v1503 = vadd.f32 %v1370, %v1439
  %v1504 = vadd.f32 %v1371, %v1440
  %v1505 = vadd.f32 %v1372, %v1441
  %v1506 = vadd.f32 %v1373, %v1442
  %v1507 = vadd.f32 %v1374, %v1443
  %v1508 = vadd.f32 %v1375, %v1444
  %v1509 = vadd.f32 %v1376, %v1445
  %v1510 = vadd.f32 %v1377, %v1446
  %v1511 = vadd.f32 %v1378, %v1447
  %v1512 = vadd.f32 %v1379, %v1448
  %v1513 = vadd.f32 %v1380, %v1449
  %v1514 = vadd.f32 %v1381, %v1450
  %v1515 = vadd.f32 %v1382, %v1451
  %v1516 = vadd.f32 %v1383, %v1452
  %v1517 = vadd.f32 %v1384, %v1453
  %v1518 = vadd.f32 %v1385, %v1454
  %v1519 = vadd.f32 %v1386, %v1455
  %v1520 = vadd.f32 %v1387, %v1456
  %v1521 = vadd.f32 %v1388, %v1457
  %v1522 = vadd.f32 %v1389, %v1458
  %v1523 = vadd.f32 %v1390, %v1459
  %v1524 = vadd.f32 %v1391, %v1460
  %v1525 = vadd.f32 %v1392, %v1461
  %v1526 = vadd.f32 %v1393, %v1462
  %v1527 = vadd.f32 %v1394, %v1463
  %v1528 = vadd.f32 %v1395, %v1464
  %v1529 = vadd.f32 %v1396, %v1465
  %s1530 = scalar_lea.vmem %s1, 21
  %v1531 = vld [vmem:[%s1530] sm:$0x1]
  %v1533 = vperm.slane %v1531, 0
  %v1535 = vmul.f32 %v990, %v1533
  %v1536 = vmul.f32 %v991, %v1533
  %v1537 = vmul.f32 %v992, %v1533
  %v1538 = vmul.f32 %v993, %v1533
  %v1539 = vmul.f32 %v994, %v1533
  %v1540 = vmul.f32 %v995, %v1533
  %v1541 = vmul.f32 %v996, %v1533
  %v1542 = vmul.f32 %v997, %v1533
  %v1543 = vmul.f32 %v998, %v1533
  %v1544 = vmul.f32 %v999, %v1533
  %v1545 = vmul.f32 %v1000, %v1533
  %v1546 = vmul.f32 %v1001, %v1533
  %v1547 = vmul.f32 %v1002, %v1533
  %v1548 = vmul.f32 %v1003, %v1533
  %v1549 = vmul.f32 %v1004, %v1533
  %v1550 = vmul.f32 %v1005, %v1533
  %v1551 = vmul.f32 %v1006, %v1533
  %v1552 = vmul.f32 %v1007, %v1533
  %v1553 = vmul.f32 %v1008, %v1533
  %v1554 = vmul.f32 %v1009, %v1533
  %v1555 = vmul.f32 %v1010, %v1533
  %v1556 = vmul.f32 %v1011, %v1533
  %v1557 = vmul.f32 %v1012, %v1533
  %v1558 = vmul.f32 %v1013, %v1533
  %v1559 = vmul.f32 %v1014, %v1533
  %v1560 = vmul.f32 %v1015, %v1533
  %v1561 = vmul.f32 %v1016, %v1533
  %v1562 = vmul.f32 %v1017, %v1533
  %v1563 = vmul.f32 %v1018, %v1533
  %v1564 = vmul.f32 %v1019, %v1533
  %v1565 = vmul.f32 %v1020, %v1533
  %v1566 = vmul.f32 %v1021, %v1533
  %v1567 = vmul.f32 %v1030, %v1533
  %v1568 = vmul.f32 %v1031, %v1533
  %v1569 = vmul.f32 %v1032, %v1533
  %v1570 = vmul.f32 %v1033, %v1533
  %v1571 = vmul.f32 %v1034, %v1533
  %v1572 = vmul.f32 %v1035, %v1533
  %v1573 = vmul.f32 %v1036, %v1533
  %v1574 = vmul.f32 %v1037, %v1533
  %v1575 = vmul.f32 %v1038, %v1533
  %v1576 = vmul.f32 %v1039, %v1533
  %v1577 = vmul.f32 %v1040, %v1533
  %v1578 = vmul.f32 %v1041, %v1533
  %v1579 = vmul.f32 %v1042, %v1533
  %v1580 = vmul.f32 %v1043, %v1533
  %v1581 = vmul.f32 %v1044, %v1533
  %v1582 = vmul.f32 %v1045, %v1533
  %v1583 = vmul.f32 %v1046, %v1533
  %v1584 = vmul.f32 %v1047, %v1533
  %v1585 = vmul.f32 %v1048, %v1533
  %v1586 = vmul.f32 %v1049, %v1533
  %v1587 = vmul.f32 %v1050, %v1533
  %v1588 = vmul.f32 %v1051, %v1533
  %v1589 = vmul.f32 %v1052, %v1533
  %v1590 = vmul.f32 %v1053, %v1533
  %v1591 = vmul.f32 %v1054, %v1533
  %v1592 = vmul.f32 %v1055, %v1533
  %v1593 = vmul.f32 %v1056, %v1533
  %v1594 = vmul.f32 %v1057, %v1533
  %v1595 = vmul.f32 %v1058, %v1533
  %v1596 = vmul.f32 %v1059, %v1533
  %v1597 = vmul.f32 %v1060, %v1533
  %v1598 = vmul.f32 %v1061, %v1533
  %v1599 = vadd.f32 %v1466, %v1535
  %v1600 = vadd.f32 %v1467, %v1536
  %v1601 = vadd.f32 %v1468, %v1537
  %v1602 = vadd.f32 %v1469, %v1538
  %v1603 = vadd.f32 %v1470, %v1539
  %v1604 = vadd.f32 %v1471, %v1540
  %v1605 = vadd.f32 %v1472, %v1541
  %v1606 = vadd.f32 %v1473, %v1542
  %v1607 = vadd.f32 %v1474, %v1543
  %v1608 = vadd.f32 %v1475, %v1544
  %v1609 = vadd.f32 %v1476, %v1545
  %v1610 = vadd.f32 %v1477, %v1546
  %v1611 = vadd.f32 %v1478, %v1547
  %v1612 = vadd.f32 %v1479, %v1548
  %v1613 = vadd.f32 %v1480, %v1549
  %v1614 = vadd.f32 %v1481, %v1550
  %v1615 = vadd.f32 %v1482, %v1551
  %v1616 = vadd.f32 %v1483, %v1552
  %v1617 = vadd.f32 %v1484, %v1553
  %v1618 = vadd.f32 %v1485, %v1554
  %v1619 = vadd.f32 %v1486, %v1555
  %v1620 = vadd.f32 %v1487, %v1556
  %v1621 = vadd.f32 %v1488, %v1557
  %v1622 = vadd.f32 %v1489, %v1558
  %v1623 = vadd.f32 %v1490, %v1559
  %v1624 = vadd.f32 %v1491, %v1560
  %v1625 = vadd.f32 %v1492, %v1561
  %v1626 = vadd.f32 %v1493, %v1562
  %v1627 = vadd.f32 %v1494, %v1563
  %v1628 = vadd.f32 %v1495, %v1564
  %v1629 = vadd.f32 %v1496, %v1565
  %v1630 = vadd.f32 %v1497, %v1566
  %v1631 = vadd.f32 %v1498, %v1567
  %v1632 = vadd.f32 %v1499, %v1568
  %v1633 = vadd.f32 %v1500, %v1569
  %v1634 = vadd.f32 %v1501, %v1570
  %v1635 = vadd.f32 %v1502, %v1571
  %v1636 = vadd.f32 %v1503, %v1572
  %v1637 = vadd.f32 %v1504, %v1573
  %v1638 = vadd.f32 %v1505, %v1574
  %v1639 = vadd.f32 %v1506, %v1575
  %v1640 = vadd.f32 %v1507, %v1576
  %v1641 = vadd.f32 %v1508, %v1577
  %v1642 = vadd.f32 %v1509, %v1578
  %v1643 = vadd.f32 %v1510, %v1579
  %v1644 = vadd.f32 %v1511, %v1580
  %v1645 = vadd.f32 %v1512, %v1581
  %v1646 = vadd.f32 %v1513, %v1582
  %v1647 = vadd.f32 %v1514, %v1583
  %v1648 = vadd.f32 %v1515, %v1584
  %v1649 = vadd.f32 %v1516, %v1585
  %v1650 = vadd.f32 %v1517, %v1586
  %v1651 = vadd.f32 %v1518, %v1587
  %v1652 = vadd.f32 %v1519, %v1588
  %v1653 = vadd.f32 %v1520, %v1589
  %v1654 = vadd.f32 %v1521, %v1590
  %v1655 = vadd.f32 %v1522, %v1591
  %v1656 = vadd.f32 %v1523, %v1592
  %v1657 = vadd.f32 %v1524, %v1593
  %v1658 = vadd.f32 %v1525, %v1594
  %v1659 = vadd.f32 %v1526, %v1595
  %v1660 = vadd.f32 %v1527, %v1596
  %v1661 = vadd.f32 %v1528, %v1597
  %v1662 = vadd.f32 %v1529, %v1598
  %v1663 = vadd.f32 %v918, %v1599
  %v1664 = vadd.f32 %v919, %v1600
  %v1665 = vadd.f32 %v920, %v1601
  %v1666 = vadd.f32 %v921, %v1602
  %v1667 = vadd.f32 %v922, %v1603
  %v1668 = vadd.f32 %v923, %v1604
  %v1669 = vadd.f32 %v924, %v1605
  %v1670 = vadd.f32 %v925, %v1606
  %v1671 = vadd.f32 %v926, %v1607
  %v1672 = vadd.f32 %v927, %v1608
  %v1673 = vadd.f32 %v928, %v1609
  %v1674 = vadd.f32 %v929, %v1610
  %v1675 = vadd.f32 %v930, %v1611
  %v1676 = vadd.f32 %v931, %v1612
  %v1677 = vadd.f32 %v932, %v1613
  %v1678 = vadd.f32 %v933, %v1614
  %v1679 = vadd.f32 %v934, %v1615
  %v1680 = vadd.f32 %v935, %v1616
  %v1681 = vadd.f32 %v936, %v1617
  %v1682 = vadd.f32 %v937, %v1618
  %v1683 = vadd.f32 %v938, %v1619
  %v1684 = vadd.f32 %v939, %v1620
  %v1685 = vadd.f32 %v940, %v1621
  %v1686 = vadd.f32 %v941, %v1622
  %v1687 = vadd.f32 %v942, %v1623
  %v1688 = vadd.f32 %v943, %v1624
  %v1689 = vadd.f32 %v944, %v1625
  %v1690 = vadd.f32 %v945, %v1626
  %v1691 = vadd.f32 %v946, %v1627
  %v1692 = vadd.f32 %v947, %v1628
  %v1693 = vadd.f32 %v948, %v1629
  %v1694 = vadd.f32 %v949, %v1630
  %v1695 = vadd.f32 %v950, %v1631
  %v1696 = vadd.f32 %v951, %v1632
  %v1697 = vadd.f32 %v952, %v1633
  %v1698 = vadd.f32 %v953, %v1634
  %v1699 = vadd.f32 %v954, %v1635
  %v1700 = vadd.f32 %v955, %v1636
  %v1701 = vadd.f32 %v956, %v1637
  %v1702 = vadd.f32 %v957, %v1638
  %v1703 = vadd.f32 %v958, %v1639
  %v1704 = vadd.f32 %v959, %v1640
  %v1705 = vadd.f32 %v960, %v1641
  %v1706 = vadd.f32 %v961, %v1642
  %v1707 = vadd.f32 %v962, %v1643
  %v1708 = vadd.f32 %v963, %v1644
  %v1709 = vadd.f32 %v964, %v1645
  %v1710 = vadd.f32 %v965, %v1646
  %v1711 = vadd.f32 %v966, %v1647
  %v1712 = vadd.f32 %v967, %v1648
  %v1713 = vadd.f32 %v968, %v1649
  %v1714 = vadd.f32 %v969, %v1650
  %v1715 = vadd.f32 %v970, %v1651
  %v1716 = vadd.f32 %v971, %v1652
  %v1717 = vadd.f32 %v972, %v1653
  %v1718 = vadd.f32 %v973, %v1654
  %v1719 = vadd.f32 %v974, %v1655
  %v1720 = vadd.f32 %v975, %v1656
  %v1721 = vadd.f32 %v976, %v1657
  %v1722 = vadd.f32 %v977, %v1658
  %v1723 = vadd.f32 %v978, %v1659
  %v1724 = vadd.f32 %v979, %v1660
  %v1725 = vadd.f32 %v980, %v1661
  %v1726 = vadd.f32 %v981, %v1662
  %v1727 = vld [vmem:[#allocation2 + $0x2] sm:$0xff]
  %v1728 = vld [vmem:[#allocation2 + $0xa] sm:$0xff]
  %v1729 = vld [vmem:[#allocation2 + $0x1a] sm:$0xff]
  %v1730 = vld [vmem:[#allocation2 + $0x22] sm:$0xff]
  %v1731 = vld [vmem:[#allocation2 + $0x32] sm:$0xff]
  %v1732 = vld [vmem:[#allocation2 + $0x3a] sm:$0xff]
  %v1733 = vld [vmem:[#allocation2 + $0x4a] sm:$0xff]
  %v1734 = vld [vmem:[#allocation2 + $0x52] sm:$0xff]
  %v1735 = vld [vmem:[#allocation2 + $0x62] sm:$0xff]
  %v1736 = vld [vmem:[#allocation2 + $0x6a] sm:$0xff]
  %v1737 = vld [vmem:[#allocation2 + $0x7a] sm:$0xff]
  %v1738 = vld [vmem:[#allocation2 + $0x82] sm:$0xff]
  %v1739 = vld [vmem:[#allocation2 + $0x92] sm:$0xff]
  %v1740 = vld [vmem:[#allocation2 + $0x9a] sm:$0xff]
  %v1741 = vld [vmem:[#allocation2 + $0xaa] sm:$0xff]
  %v1742 = vld [vmem:[#allocation2 + $0xb2] sm:$0xff]
  %v1743 = vld [vmem:[#allocation2 + $0xc2] sm:$0xff]
  %v1744 = vld [vmem:[#allocation2 + $0xca] sm:$0xff]
  %v1745 = vld [vmem:[#allocation2 + $0xda] sm:$0xff]
  %v1746 = vld [vmem:[#allocation2 + $0xe2] sm:$0xff]
  %v1747 = vld [vmem:[#allocation2 + $0xf2] sm:$0xff]
  %v1748 = vld [vmem:[#allocation2 + $0xfa] sm:$0xff]
  %v1749 = vld [vmem:[#allocation2 + $0x10a] sm:$0xff]
  %v1750 = vld [vmem:[#allocation2 + $0x112] sm:$0xff]
  %v1751 = vld [vmem:[#allocation2 + $0x122] sm:$0xff]
  %v1752 = vld [vmem:[#allocation2 + $0x12a] sm:$0xff]
  %v1753 = vld [vmem:[#allocation2 + $0x13a] sm:$0xff]
  %v1754 = vld [vmem:[#allocation2 + $0x142] sm:$0xff]
  %v1755 = vld [vmem:[#allocation2 + $0x152] sm:$0xff]
  %v1756 = vld [vmem:[#allocation2 + $0x15a] sm:$0xff]
  %v1757 = vld [vmem:[#allocation2 + $0x16a] sm:$0xff]
  %v1758 = vld [vmem:[#allocation2 + $0x172] sm:$0xff]
  %v1759 = vld [vmem:[#allocation2 + $0x182] sm:$0xff]
  %v1760 = vld [vmem:[#allocation2 + $0x18a] sm:$0xff]
  %v1761 = vld [vmem:[#allocation2 + $0x19a] sm:$0xff]
  %v1762 = vld [vmem:[#allocation2 + $0x1a2] sm:$0xff]
  %v1763 = vld [vmem:[#allocation2 + $0x1b2] sm:$0xff]
  %v1764 = vld [vmem:[#allocation2 + $0x1ba] sm:$0xff]
  %v1765 = vld [vmem:[#allocation2 + $0x1ca] sm:$0xff]
  %v1766 = vld [vmem:[#allocation2 + $0x1d2] sm:$0xff]
  %v1767 = vld [vmem:[#allocation2 + $0x1e2] sm:$0xff]
  %v1768 = vld [vmem:[#allocation2 + $0x1ea] sm:$0xff]
  %v1769 = vld [vmem:[#allocation2 + $0x1fa] sm:$0xff]
  %v1770 = vld [vmem:[#allocation2 + $0x202] sm:$0xff]
  %v1771 = vld [vmem:[#allocation2 + $0x212] sm:$0xff]
  %v1772 = vld [vmem:[#allocation2 + $0x21a] sm:$0xff]
  %v1773 = vld [vmem:[#allocation2 + $0x22a] sm:$0xff]
  %v1774 = vld [vmem:[#allocation2 + $0x232] sm:$0xff]
  %v1775 = vld [vmem:[#allocation2 + $0x242] sm:$0xff]
  %v1776 = vld [vmem:[#allocation2 + $0x24a] sm:$0xff]
  %v1777 = vld [vmem:[#allocation2 + $0x25a] sm:$0xff]
  %v1778 = vld [vmem:[#allocation2 + $0x262] sm:$0xff]
  %v1779 = vld [vmem:[#allocation2 + $0x272] sm:$0xff]
  %v1780 = vld [vmem:[#allocation2 + $0x27a] sm:$0xff]
  %v1781 = vld [vmem:[#allocation2 + $0x28a] sm:$0xff]
  %v1782 = vld [vmem:[#allocation2 + $0x292] sm:$0xff]
  %v1783 = vld [vmem:[#allocation2 + $0x2a2] sm:$0xff]
  %v1784 = vld [vmem:[#allocation2 + $0x2aa] sm:$0xff]
  %v1785 = vld [vmem:[#allocation2 + $0x2ba] sm:$0xff]
  %v1786 = vld [vmem:[#allocation2 + $0x2c2] sm:$0xff]
  %v1787 = vld [vmem:[#allocation2 + $0x2d2] sm:$0xff]
  %v1788 = vld [vmem:[#allocation2 + $0x2da] sm:$0xff]
  %v1789 = vld [vmem:[#allocation2 + $0x2ea] sm:$0xff]
  %v1790 = vld [vmem:[#allocation2 + $0x2f2] sm:$0xff]
  %v1791 = vld [vmem:[#allocation2 + $0x302] sm:$0xff]
  %v1792 = vld [vmem:[#allocation2 + $0x30a] sm:$0xff]
  %v1793 = vld [vmem:[#allocation2 + $0x31a] sm:$0xff]
  %v1794 = vld [vmem:[#allocation2 + $0x322] sm:$0xff]
  %v1795 = vld [vmem:[#allocation2 + $0x332] sm:$0xff]
  %v1796 = vld [vmem:[#allocation2 + $0x33a] sm:$0xff]
  %v1797 = vld [vmem:[#allocation2 + $0x34a] sm:$0xff]
  %v1798 = vld [vmem:[#allocation2 + $0x352] sm:$0xff]
  %v1799 = vld [vmem:[#allocation2 + $0x362] sm:$0xff]
  %v1800 = vld [vmem:[#allocation2 + $0x36a] sm:$0xff]
  %v1801 = vld [vmem:[#allocation2 + $0x37a] sm:$0xff]
  %v1802 = vld [vmem:[#allocation2 + $0x382] sm:$0xff]
  %v1803 = vld [vmem:[#allocation2 + $0x392] sm:$0xff]
  %v1804 = vld [vmem:[#allocation2 + $0x39a] sm:$0xff]
  %v1805 = vld [vmem:[#allocation2 + $0x3aa] sm:$0xff]
  %v1806 = vld [vmem:[#allocation2 + $0x3b2] sm:$0xff]
  %s1807 = scalar_lea.vmem %s1, 2
  %v1808 = vld [vmem:[%s1807] sm:$0x1]
  %v1810 = vperm.slane %v1808, 0
  %v1812 = vmul.f32 %v1727, %v1810
  %v1813 = vmul.f32 %v1728, %v1810
  %v1814 = vmul.f32 %v1729, %v1810
  %v1815 = vmul.f32 %v1730, %v1810
  %v1816 = vmul.f32 %v1731, %v1810
  %v1817 = vmul.f32 %v1732, %v1810
  %v1818 = vmul.f32 %v1733, %v1810
  %v1819 = vmul.f32 %v1734, %v1810
  %v1820 = vmul.f32 %v1735, %v1810
  %v1821 = vmul.f32 %v1736, %v1810
  %v1822 = vmul.f32 %v1737, %v1810
  %v1823 = vmul.f32 %v1738, %v1810
  %v1824 = vmul.f32 %v1739, %v1810
  %v1825 = vmul.f32 %v1740, %v1810
  %v1826 = vmul.f32 %v1741, %v1810
  %v1827 = vmul.f32 %v1742, %v1810
  %v1828 = vmul.f32 %v1743, %v1810
  %v1829 = vmul.f32 %v1744, %v1810
  %v1830 = vmul.f32 %v1745, %v1810
  %v1831 = vmul.f32 %v1746, %v1810
  %v1832 = vmul.f32 %v1747, %v1810
  %v1833 = vmul.f32 %v1748, %v1810
  %v1834 = vmul.f32 %v1749, %v1810
  %v1835 = vmul.f32 %v1750, %v1810
  %v1836 = vmul.f32 %v1751, %v1810
  %v1837 = vmul.f32 %v1752, %v1810
  %v1838 = vmul.f32 %v1753, %v1810
  %v1839 = vmul.f32 %v1754, %v1810
  %v1840 = vmul.f32 %v1755, %v1810
  %v1841 = vmul.f32 %v1756, %v1810
  %v1842 = vmul.f32 %v1757, %v1810
  %v1843 = vmul.f32 %v1758, %v1810
  %v1844 = vmul.f32 %v1767, %v1810
  %v1845 = vmul.f32 %v1768, %v1810
  %v1846 = vmul.f32 %v1769, %v1810
  %v1847 = vmul.f32 %v1770, %v1810
  %v1848 = vmul.f32 %v1771, %v1810
  %v1849 = vmul.f32 %v1772, %v1810
  %v1850 = vmul.f32 %v1773, %v1810
  %v1851 = vmul.f32 %v1774, %v1810
  %v1852 = vmul.f32 %v1775, %v1810
  %v1853 = vmul.f32 %v1776, %v1810
  %v1854 = vmul.f32 %v1777, %v1810
  %v1855 = vmul.f32 %v1778, %v1810
  %v1856 = vmul.f32 %v1779, %v1810
  %v1857 = vmul.f32 %v1780, %v1810
  %v1858 = vmul.f32 %v1781, %v1810
  %v1859 = vmul.f32 %v1782, %v1810
  %v1860 = vmul.f32 %v1783, %v1810
  %v1861 = vmul.f32 %v1784, %v1810
  %v1862 = vmul.f32 %v1785, %v1810
  %v1863 = vmul.f32 %v1786, %v1810
  %v1864 = vmul.f32 %v1787, %v1810
  %v1865 = vmul.f32 %v1788, %v1810
  %v1866 = vmul.f32 %v1789, %v1810
  %v1867 = vmul.f32 %v1790, %v1810
  %v1868 = vmul.f32 %v1791, %v1810
  %v1869 = vmul.f32 %v1792, %v1810
  %v1870 = vmul.f32 %v1793, %v1810
  %v1871 = vmul.f32 %v1794, %v1810
  %v1872 = vmul.f32 %v1795, %v1810
  %v1873 = vmul.f32 %v1796, %v1810
  %v1874 = vmul.f32 %v1797, %v1810
  %v1875 = vmul.f32 %v1798, %v1810
  %s1876 = scalar_lea.vmem %s1, 7
  %v1877 = vld [vmem:[%s1876] sm:$0x1]
  %v1879 = vperm.slane %v1877, 0
  %v1881 = vmul.f32 %v1729, %v1879
  %v1882 = vmul.f32 %v1730, %v1879
  %v1883 = vmul.f32 %v1731, %v1879
  %v1884 = vmul.f32 %v1732, %v1879
  %v1885 = vmul.f32 %v1733, %v1879
  %v1886 = vmul.f32 %v1734, %v1879
  %v1887 = vmul.f32 %v1735, %v1879
  %v1888 = vmul.f32 %v1736, %v1879
  %v1889 = vmul.f32 %v1737, %v1879
  %v1890 = vmul.f32 %v1738, %v1879
  %v1891 = vmul.f32 %v1739, %v1879
  %v1892 = vmul.f32 %v1740, %v1879
  %v1893 = vmul.f32 %v1741, %v1879
  %v1894 = vmul.f32 %v1742, %v1879
  %v1895 = vmul.f32 %v1743, %v1879
  %v1896 = vmul.f32 %v1744, %v1879
  %v1897 = vmul.f32 %v1745, %v1879
  %v1898 = vmul.f32 %v1746, %v1879
  %v1899 = vmul.f32 %v1747, %v1879
  %v1900 = vmul.f32 %v1748, %v1879
  %v1901 = vmul.f32 %v1749, %v1879
  %v1902 = vmul.f32 %v1750, %v1879
  %v1903 = vmul.f32 %v1751, %v1879
  %v1904 = vmul.f32 %v1752, %v1879
  %v1905 = vmul.f32 %v1753, %v1879
  %v1906 = vmul.f32 %v1754, %v1879
  %v1907 = vmul.f32 %v1755, %v1879
  %v1908 = vmul.f32 %v1756, %v1879
  %v1909 = vmul.f32 %v1757, %v1879
  %v1910 = vmul.f32 %v1758, %v1879
  %v1911 = vmul.f32 %v1759, %v1879
  %v1912 = vmul.f32 %v1760, %v1879
  %v1913 = vmul.f32 %v1769, %v1879
  %v1914 = vmul.f32 %v1770, %v1879
  %v1915 = vmul.f32 %v1771, %v1879
  %v1916 = vmul.f32 %v1772, %v1879
  %v1917 = vmul.f32 %v1773, %v1879
  %v1918 = vmul.f32 %v1774, %v1879
  %v1919 = vmul.f32 %v1775, %v1879
  %v1920 = vmul.f32 %v1776, %v1879
  %v1921 = vmul.f32 %v1777, %v1879
  %v1922 = vmul.f32 %v1778, %v1879
  %v1923 = vmul.f32 %v1779, %v1879
  %v1924 = vmul.f32 %v1780, %v1879
  %v1925 = vmul.f32 %v1781, %v1879
  %v1926 = vmul.f32 %v1782, %v1879
  %v1927 = vmul.f32 %v1783, %v1879
  %v1928 = vmul.f32 %v1784, %v1879
  %v1929 = vmul.f32 %v1785, %v1879
  %v1930 = vmul.f32 %v1786, %v1879
  %v1931 = vmul.f32 %v1787, %v1879
  %v1932 = vmul.f32 %v1788, %v1879
  %v1933 = vmul.f32 %v1789, %v1879
  %v1934 = vmul.f32 %v1790, %v1879
  %v1935 = vmul.f32 %v1791, %v1879
  %v1936 = vmul.f32 %v1792, %v1879
  %v1937 = vmul.f32 %v1793, %v1879
  %v1938 = vmul.f32 %v1794, %v1879
  %v1939 = vmul.f32 %v1795, %v1879
  %v1940 = vmul.f32 %v1796, %v1879
  %v1941 = vmul.f32 %v1797, %v1879
  %v1942 = vmul.f32 %v1798, %v1879
  %v1943 = vmul.f32 %v1799, %v1879
  %v1944 = vmul.f32 %v1800, %v1879
  %v1945 = vadd.f32 %v1812, %v1881
  %v1946 = vadd.f32 %v1813, %v1882
  %v1947 = vadd.f32 %v1814, %v1883
  %v1948 = vadd.f32 %v1815, %v1884
  %v1949 = vadd.f32 %v1816, %v1885
  %v1950 = vadd.f32 %v1817, %v1886
  %v1951 = vadd.f32 %v1818, %v1887
  %v1952 = vadd.f32 %v1819, %v1888
  %v1953 = vadd.f32 %v1820, %v1889
  %v1954 = vadd.f32 %v1821, %v1890
  %v1955 = vadd.f32 %v1822, %v1891
  %v1956 = vadd.f32 %v1823, %v1892
  %v1957 = vadd.f32 %v1824, %v1893
  %v1958 = vadd.f32 %v1825, %v1894
  %v1959 = vadd.f32 %v1826, %v1895
  %v1960 = vadd.f32 %v1827, %v1896
  %v1961 = vadd.f32 %v1828, %v1897
  %v1962 = vadd.f32 %v1829, %v1898
  %v1963 = vadd.f32 %v1830, %v1899
  %v1964 = vadd.f32 %v1831, %v1900
  %v1965 = vadd.f32 %v1832, %v1901
  %v1966 = vadd.f32 %v1833, %v1902
  %v1967 = vadd.f32 %v1834, %v1903
  %v1968 = vadd.f32 %v1835, %v1904
  %v1969 = vadd.f32 %v1836, %v1905
  %v1970 = vadd.f32 %v1837, %v1906
  %v1971 = vadd.f32 %v1838, %v1907
  %v1972 = vadd.f32 %v1839, %v1908
  %v1973 = vadd.f32 %v1840, %v1909
  %v1974 = vadd.f32 %v1841, %v1910
  %v1975 = vadd.f32 %v1842, %v1911
  %v1976 = vadd.f32 %v1843, %v1912
  %v1977 = vadd.f32 %v1844, %v1913
  %v1978 = vadd.f32 %v1845, %v1914
  %v1979 = vadd.f32 %v1846, %v1915
  %v1980 = vadd.f32 %v1847, %v1916
  %v1981 = vadd.f32 %v1848, %v1917
  %v1982 = vadd.f32 %v1849, %v1918
  %v1983 = vadd.f32 %v1850, %v1919
  %v1984 = vadd.f32 %v1851, %v1920
  %v1985 = vadd.f32 %v1852, %v1921
  %v1986 = vadd.f32 %v1853, %v1922
  %v1987 = vadd.f32 %v1854, %v1923
  %v1988 = vadd.f32 %v1855, %v1924
  %v1989 = vadd.f32 %v1856, %v1925
  %v1990 = vadd.f32 %v1857, %v1926
  %v1991 = vadd.f32 %v1858, %v1927
  %v1992 = vadd.f32 %v1859, %v1928
  %v1993 = vadd.f32 %v1860, %v1929
  %v1994 = vadd.f32 %v1861, %v1930
  %v1995 = vadd.f32 %v1862, %v1931
  %v1996 = vadd.f32 %v1863, %v1932
  %v1997 = vadd.f32 %v1864, %v1933
  %v1998 = vadd.f32 %v1865, %v1934
  %v1999 = vadd.f32 %v1866, %v1935
  %v2000 = vadd.f32 %v1867, %v1936
  %v2001 = vadd.f32 %v1868, %v1937
  %v2002 = vadd.f32 %v1869, %v1938
  %v2003 = vadd.f32 %v1870, %v1939
  %v2004 = vadd.f32 %v1871, %v1940
  %v2005 = vadd.f32 %v1872, %v1941
  %v2006 = vadd.f32 %v1873, %v1942
  %v2007 = vadd.f32 %v1874, %v1943
  %v2008 = vadd.f32 %v1875, %v1944
  %s2009 = scalar_lea.vmem %s1, 12
  %v2010 = vld [vmem:[%s2009] sm:$0x1]
  %v2012 = vperm.slane %v2010, 0
  %v2014 = vmul.f32 %v1731, %v2012
  %v2015 = vmul.f32 %v1732, %v2012
  %v2016 = vmul.f32 %v1733, %v2012
  %v2017 = vmul.f32 %v1734, %v2012
  %v2018 = vmul.f32 %v1735, %v2012
  %v2019 = vmul.f32 %v1736, %v2012
  %v2020 = vmul.f32 %v1737, %v2012
  %v2021 = vmul.f32 %v1738, %v2012
  %v2022 = vmul.f32 %v1739, %v2012
  %v2023 = vmul.f32 %v1740, %v2012
  %v2024 = vmul.f32 %v1741, %v2012
  %v2025 = vmul.f32 %v1742, %v2012
  %v2026 = vmul.f32 %v1743, %v2012
  %v2027 = vmul.f32 %v1744, %v2012
  %v2028 = vmul.f32 %v1745, %v2012
  %v2029 = vmul.f32 %v1746, %v2012
  %v2030 = vmul.f32 %v1747, %v2012
  %v2031 = vmul.f32 %v1748, %v2012
  %v2032 = vmul.f32 %v1749, %v2012
  %v2033 = vmul.f32 %v1750, %v2012
  %v2034 = vmul.f32 %v1751, %v2012
  %v2035 = vmul.f32 %v1752, %v2012
  %v2036 = vmul.f32 %v1753, %v2012
  %v2037 = vmul.f32 %v1754, %v2012
  %v2038 = vmul.f32 %v1755, %v2012
  %v2039 = vmul.f32 %v1756, %v2012
  %v2040 = vmul.f32 %v1757, %v2012
  %v2041 = vmul.f32 %v1758, %v2012
  %v2042 = vmul.f32 %v1759, %v2012
  %v2043 = vmul.f32 %v1760, %v2012
  %v2044 = vmul.f32 %v1761, %v2012
  %v2045 = vmul.f32 %v1762, %v2012
  %v2046 = vmul.f32 %v1771, %v2012
  %v2047 = vmul.f32 %v1772, %v2012
  %v2048 = vmul.f32 %v1773, %v2012
  %v2049 = vmul.f32 %v1774, %v2012
  %v2050 = vmul.f32 %v1775, %v2012
  %v2051 = vmul.f32 %v1776, %v2012
  %v2052 = vmul.f32 %v1777, %v2012
  %v2053 = vmul.f32 %v1778, %v2012
  %v2054 = vmul.f32 %v1779, %v2012
  %v2055 = vmul.f32 %v1780, %v2012
  %v2056 = vmul.f32 %v1781, %v2012
  %v2057 = vmul.f32 %v1782, %v2012
  %v2058 = vmul.f32 %v1783, %v2012
  %v2059 = vmul.f32 %v1784, %v2012
  %v2060 = vmul.f32 %v1785, %v2012
  %v2061 = vmul.f32 %v1786, %v2012
  %v2062 = vmul.f32 %v1787, %v2012
  %v2063 = vmul.f32 %v1788, %v2012
  %v2064 = vmul.f32 %v1789, %v2012
  %v2065 = vmul.f32 %v1790, %v2012
  %v2066 = vmul.f32 %v1791, %v2012
  %v2067 = vmul.f32 %v1792, %v2012
  %v2068 = vmul.f32 %v1793, %v2012
  %v2069 = vmul.f32 %v1794, %v2012
  %v2070 = vmul.f32 %v1795, %v2012
  %v2071 = vmul.f32 %v1796, %v2012
  %v2072 = vmul.f32 %v1797, %v2012
  %v2073 = vmul.f32 %v1798, %v2012
  %v2074 = vmul.f32 %v1799, %v2012
  %v2075 = vmul.f32 %v1800, %v2012
  %v2076 = vmul.f32 %v1801, %v2012
  %v2077 = vmul.f32 %v1802, %v2012
  %v2078 = vadd.f32 %v1945, %v2014
  %v2079 = vadd.f32 %v1946, %v2015
  %v2080 = vadd.f32 %v1947, %v2016
  %v2081 = vadd.f32 %v1948, %v2017
  %v2082 = vadd.f32 %v1949, %v2018
  %v2083 = vadd.f32 %v1950, %v2019
  %v2084 = vadd.f32 %v1951, %v2020
  %v2085 = vadd.f32 %v1952, %v2021
  %v2086 = vadd.f32 %v1953, %v2022
  %v2087 = vadd.f32 %v1954, %v2023
  %v2088 = vadd.f32 %v1955, %v2024
  %v2089 = vadd.f32 %v1956, %v2025
  %v2090 = vadd.f32 %v1957, %v2026
  %v2091 = vadd.f32 %v1958, %v2027
  %v2092 = vadd.f32 %v1959, %v2028
  %v2093 = vadd.f32 %v1960, %v2029
  %v2094 = vadd.f32 %v1961, %v2030
  %v2095 = vadd.f32 %v1962, %v2031
  %v2096 = vadd.f32 %v1963, %v2032
  %v2097 = vadd.f32 %v1964, %v2033
  %v2098 = vadd.f32 %v1965, %v2034
  %v2099 = vadd.f32 %v1966, %v2035
  %v2100 = vadd.f32 %v1967, %v2036
  %v2101 = vadd.f32 %v1968, %v2037
  %v2102 = vadd.f32 %v1969, %v2038
  %v2103 = vadd.f32 %v1970, %v2039
  %v2104 = vadd.f32 %v1971, %v2040
  %v2105 = vadd.f32 %v1972, %v2041
  %v2106 = vadd.f32 %v1973, %v2042
  %v2107 = vadd.f32 %v1974, %v2043
  %v2108 = vadd.f32 %v1975, %v2044
  %v2109 = vadd.f32 %v1976, %v2045
  %v2110 = vadd.f32 %v1977, %v2046
  %v2111 = vadd.f32 %v1978, %v2047
  %v2112 = vadd.f32 %v1979, %v2048
  %v2113 = vadd.f32 %v1980, %v2049
  %v2114 = vadd.f32 %v1981, %v2050
  %v2115 = vadd.f32 %v1982, %v2051
  %v2116 = vadd.f32 %v1983, %v2052
  %v2117 = vadd.f32 %v1984, %v2053
  %v2118 = vadd.f32 %v1985, %v2054
  %v2119 = vadd.f32 %v1986, %v2055
  %v2120 = vadd.f32 %v1987, %v2056
  %v2121 = vadd.f32 %v1988, %v2057
  %v2122 = vadd.f32 %v1989, %v2058
  %v2123 = vadd.f32 %v1990, %v2059
  %v2124 = vadd.f32 %v1991, %v2060
  %v2125 = vadd.f32 %v1992, %v2061
  %v2126 = vadd.f32 %v1993, %v2062
  %v2127 = vadd.f32 %v1994, %v2063
  %v2128 = vadd.f32 %v1995, %v2064
  %v2129 = vadd.f32 %v1996, %v2065
  %v2130 = vadd.f32 %v1997, %v2066
  %v2131 = vadd.f32 %v1998, %v2067
  %v2132 = vadd.f32 %v1999, %v2068
  %v2133 = vadd.f32 %v2000, %v2069
  %v2134 = vadd.f32 %v2001, %v2070
  %v2135 = vadd.f32 %v2002, %v2071
  %v2136 = vadd.f32 %v2003, %v2072
  %v2137 = vadd.f32 %v2004, %v2073
  %v2138 = vadd.f32 %v2005, %v2074
  %v2139 = vadd.f32 %v2006, %v2075
  %v2140 = vadd.f32 %v2007, %v2076
  %v2141 = vadd.f32 %v2008, %v2077
  %s2142 = scalar_lea.vmem %s1, 17
  %v2143 = vld [vmem:[%s2142] sm:$0x1]
  %v2145 = vperm.slane %v2143, 0
  %v2147 = vmul.f32 %v1733, %v2145
  %v2148 = vmul.f32 %v1734, %v2145
  %v2149 = vmul.f32 %v1735, %v2145
  %v2150 = vmul.f32 %v1736, %v2145
  %v2151 = vmul.f32 %v1737, %v2145
  %v2152 = vmul.f32 %v1738, %v2145
  %v2153 = vmul.f32 %v1739, %v2145
  %v2154 = vmul.f32 %v1740, %v2145
  %v2155 = vmul.f32 %v1741, %v2145
  %v2156 = vmul.f32 %v1742, %v2145
  %v2157 = vmul.f32 %v1743, %v2145
  %v2158 = vmul.f32 %v1744, %v2145
  %v2159 = vmul.f32 %v1745, %v2145
  %v2160 = vmul.f32 %v1746, %v2145
  %v2161 = vmul.f32 %v1747, %v2145
  %v2162 = vmul.f32 %v1748, %v2145
  %v2163 = vmul.f32 %v1749, %v2145
  %v2164 = vmul.f32 %v1750, %v2145
  %v2165 = vmul.f32 %v1751, %v2145
  %v2166 = vmul.f32 %v1752, %v2145
  %v2167 = vmul.f32 %v1753, %v2145
  %v2168 = vmul.f32 %v1754, %v2145
  %v2169 = vmul.f32 %v1755, %v2145
  %v2170 = vmul.f32 %v1756, %v2145
  %v2171 = vmul.f32 %v1757, %v2145
  %v2172 = vmul.f32 %v1758, %v2145
  %v2173 = vmul.f32 %v1759, %v2145
  %v2174 = vmul.f32 %v1760, %v2145
  %v2175 = vmul.f32 %v1761, %v2145
  %v2176 = vmul.f32 %v1762, %v2145
  %v2177 = vmul.f32 %v1763, %v2145
  %v2178 = vmul.f32 %v1764, %v2145
  %v2179 = vmul.f32 %v1773, %v2145
  %v2180 = vmul.f32 %v1774, %v2145
  %v2181 = vmul.f32 %v1775, %v2145
  %v2182 = vmul.f32 %v1776, %v2145
  %v2183 = vmul.f32 %v1777, %v2145
  %v2184 = vmul.f32 %v1778, %v2145
  %v2185 = vmul.f32 %v1779, %v2145
  %v2186 = vmul.f32 %v1780, %v2145
  %v2187 = vmul.f32 %v1781, %v2145
  %v2188 = vmul.f32 %v1782, %v2145
  %v2189 = vmul.f32 %v1783, %v2145
  %v2190 = vmul.f32 %v1784, %v2145
  %v2191 = vmul.f32 %v1785, %v2145
  %v2192 = vmul.f32 %v1786, %v2145
  %v2193 = vmul.f32 %v1787, %v2145
  %v2194 = vmul.f32 %v1788, %v2145
  %v2195 = vmul.f32 %v1789, %v2145
  %v2196 = vmul.f32 %v1790, %v2145
  %v2197 = vmul.f32 %v1791, %v2145
  %v2198 = vmul.f32 %v1792, %v2145
  %v2199 = vmul.f32 %v1793, %v2145
  %v2200 = vmul.f32 %v1794, %v2145
  %v2201 = vmul.f32 %v1795, %v2145
  %v2202 = vmul.f32 %v1796, %v2145
  %v2203 = vmul.f32 %v1797, %v2145
  %v2204 = vmul.f32 %v1798, %v2145
  %v2205 = vmul.f32 %v1799, %v2145
  %v2206 = vmul.f32 %v1800, %v2145
  %v2207 = vmul.f32 %v1801, %v2145
  %v2208 = vmul.f32 %v1802, %v2145
  %v2209 = vmul.f32 %v1803, %v2145
  %v2210 = vmul.f32 %v1804, %v2145
  %v2211 = vadd.f32 %v2078, %v2147
  %v2212 = vadd.f32 %v2079, %v2148
  %v2213 = vadd.f32 %v2080, %v2149
  %v2214 = vadd.f32 %v2081, %v2150
  %v2215 = vadd.f32 %v2082, %v2151
  %v2216 = vadd.f32 %v2083, %v2152
  %v2217 = vadd.f32 %v2084, %v2153
  %v2218 = vadd.f32 %v2085, %v2154
  %v2219 = vadd.f32 %v2086, %v2155
  %v2220 = vadd.f32 %v2087, %v2156
  %v2221 = vadd.f32 %v2088, %v2157
  %v2222 = vadd.f32 %v2089, %v2158
  %v2223 = vadd.f32 %v2090, %v2159
  %v2224 = vadd.f32 %v2091, %v2160
  %v2225 = vadd.f32 %v2092, %v2161
  %v2226 = vadd.f32 %v2093, %v2162
  %v2227 = vadd.f32 %v2094, %v2163
  %v2228 = vadd.f32 %v2095, %v2164
  %v2229 = vadd.f32 %v2096, %v2165
  %v2230 = vadd.f32 %v2097, %v2166
  %v2231 = vadd.f32 %v2098, %v2167
  %v2232 = vadd.f32 %v2099, %v2168
  %v2233 = vadd.f32 %v2100, %v2169
  %v2234 = vadd.f32 %v2101, %v2170
  %v2235 = vadd.f32 %v2102, %v2171
  %v2236 = vadd.f32 %v2103, %v2172
  %v2237 = vadd.f32 %v2104, %v2173
  %v2238 = vadd.f32 %v2105, %v2174
  %v2239 = vadd.f32 %v2106, %v2175
  %v2240 = vadd.f32 %v2107, %v2176
  %v2241 = vadd.f32 %v2108, %v2177
  %v2242 = vadd.f32 %v2109, %v2178
  %v2243 = vadd.f32 %v2110, %v2179
  %v2244 = vadd.f32 %v2111, %v2180
  %v2245 = vadd.f32 %v2112, %v2181
  %v2246 = vadd.f32 %v2113, %v2182
  %v2247 = vadd.f32 %v2114, %v2183
  %v2248 = vadd.f32 %v2115, %v2184
  %v2249 = vadd.f32 %v2116, %v2185
  %v2250 = vadd.f32 %v2117, %v2186
  %v2251 = vadd.f32 %v2118, %v2187
  %v2252 = vadd.f32 %v2119, %v2188
  %v2253 = vadd.f32 %v2120, %v2189
  %v2254 = vadd.f32 %v2121, %v2190
  %v2255 = vadd.f32 %v2122, %v2191
  %v2256 = vadd.f32 %v2123, %v2192
  %v2257 = vadd.f32 %v2124, %v2193
  %v2258 = vadd.f32 %v2125, %v2194
  %v2259 = vadd.f32 %v2126, %v2195
  %v2260 = vadd.f32 %v2127, %v2196
  %v2261 = vadd.f32 %v2128, %v2197
  %v2262 = vadd.f32 %v2129, %v2198
  %v2263 = vadd.f32 %v2130, %v2199
  %v2264 = vadd.f32 %v2131, %v2200
  %v2265 = vadd.f32 %v2132, %v2201
  %v2266 = vadd.f32 %v2133, %v2202
  %v2267 = vadd.f32 %v2134, %v2203
  %v2268 = vadd.f32 %v2135, %v2204
  %v2269 = vadd.f32 %v2136, %v2205
  %v2270 = vadd.f32 %v2137, %v2206
  %v2271 = vadd.f32 %v2138, %v2207
  %v2272 = vadd.f32 %v2139, %v2208
  %v2273 = vadd.f32 %v2140, %v2209
  %v2274 = vadd.f32 %v2141, %v2210
  %s2275 = scalar_lea.vmem %s1, 22
  %v2276 = vld [vmem:[%s2275] sm:$0x1]
  %v2278 = vperm.slane %v2276, 0
  %v2280 = vmul.f32 %v1735, %v2278
  %v2281 = vmul.f32 %v1736, %v2278
  %v2282 = vmul.f32 %v1737, %v2278
  %v2283 = vmul.f32 %v1738, %v2278
  %v2284 = vmul.f32 %v1739, %v2278
  %v2285 = vmul.f32 %v1740, %v2278
  %v2286 = vmul.f32 %v1741, %v2278
  %v2287 = vmul.f32 %v1742, %v2278
  %v2288 = vmul.f32 %v1743, %v2278
  %v2289 = vmul.f32 %v1744, %v2278
  %v2290 = vmul.f32 %v1745, %v2278
  %v2291 = vmul.f32 %v1746, %v2278
  %v2292 = vmul.f32 %v1747, %v2278
  %v2293 = vmul.f32 %v1748, %v2278
  %v2294 = vmul.f32 %v1749, %v2278
  %v2295 = vmul.f32 %v1750, %v2278
  %v2296 = vmul.f32 %v1751, %v2278
  %v2297 = vmul.f32 %v1752, %v2278
  %v2298 = vmul.f32 %v1753, %v2278
  %v2299 = vmul.f32 %v1754, %v2278
  %v2300 = vmul.f32 %v1755, %v2278
  %v2301 = vmul.f32 %v1756, %v2278
  %v2302 = vmul.f32 %v1757, %v2278
  %v2303 = vmul.f32 %v1758, %v2278
  %v2304 = vmul.f32 %v1759, %v2278
  %v2305 = vmul.f32 %v1760, %v2278
  %v2306 = vmul.f32 %v1761, %v2278
  %v2307 = vmul.f32 %v1762, %v2278
  %v2308 = vmul.f32 %v1763, %v2278
  %v2309 = vmul.f32 %v1764, %v2278
  %v2310 = vmul.f32 %v1765, %v2278
  %v2311 = vmul.f32 %v1766, %v2278
  %v2312 = vmul.f32 %v1775, %v2278
  %v2313 = vmul.f32 %v1776, %v2278
  %v2314 = vmul.f32 %v1777, %v2278
  %v2315 = vmul.f32 %v1778, %v2278
  %v2316 = vmul.f32 %v1779, %v2278
  %v2317 = vmul.f32 %v1780, %v2278
  %v2318 = vmul.f32 %v1781, %v2278
  %v2319 = vmul.f32 %v1782, %v2278
  %v2320 = vmul.f32 %v1783, %v2278
  %v2321 = vmul.f32 %v1784, %v2278
  %v2322 = vmul.f32 %v1785, %v2278
  %v2323 = vmul.f32 %v1786, %v2278
  %v2324 = vmul.f32 %v1787, %v2278
  %v2325 = vmul.f32 %v1788, %v2278
  %v2326 = vmul.f32 %v1789, %v2278
  %v2327 = vmul.f32 %v1790, %v2278
  %v2328 = vmul.f32 %v1791, %v2278
  %v2329 = vmul.f32 %v1792, %v2278
  %v2330 = vmul.f32 %v1793, %v2278
  %v2331 = vmul.f32 %v1794, %v2278
  %v2332 = vmul.f32 %v1795, %v2278
  %v2333 = vmul.f32 %v1796, %v2278
  %v2334 = vmul.f32 %v1797, %v2278
  %v2335 = vmul.f32 %v1798, %v2278
  %v2336 = vmul.f32 %v1799, %v2278
  %v2337 = vmul.f32 %v1800, %v2278
  %v2338 = vmul.f32 %v1801, %v2278
  %v2339 = vmul.f32 %v1802, %v2278
  %v2340 = vmul.f32 %v1803, %v2278
  %v2341 = vmul.f32 %v1804, %v2278
  %v2342 = vmul.f32 %v1805, %v2278
  %v2343 = vmul.f32 %v1806, %v2278
  %v2344 = vadd.f32 %v2211, %v2280
  %v2345 = vadd.f32 %v2212, %v2281
  %v2346 = vadd.f32 %v2213, %v2282
  %v2347 = vadd.f32 %v2214, %v2283
  %v2348 = vadd.f32 %v2215, %v2284
  %v2349 = vadd.f32 %v2216, %v2285
  %v2350 = vadd.f32 %v2217, %v2286
  %v2351 = vadd.f32 %v2218, %v2287
  %v2352 = vadd.f32 %v2219, %v2288
  %v2353 = vadd.f32 %v2220, %v2289
  %v2354 = vadd.f32 %v2221, %v2290
  %v2355 = vadd.f32 %v2222, %v2291
  %v2356 = vadd.f32 %v2223, %v2292
  %v2357 = vadd.f32 %v2224, %v2293
  %v2358 = vadd.f32 %v2225, %v2294
  %v2359 = vadd.f32 %v2226, %v2295
  %v2360 = vadd.f32 %v2227, %v2296
  %v2361 = vadd.f32 %v2228, %v2297
  %v2362 = vadd.f32 %v2229, %v2298
  %v2363 = vadd.f32 %v2230, %v2299
  %v2364 = vadd.f32 %v2231, %v2300
  %v2365 = vadd.f32 %v2232, %v2301
  %v2366 = vadd.f32 %v2233, %v2302
  %v2367 = vadd.f32 %v2234, %v2303
  %v2368 = vadd.f32 %v2235, %v2304
  %v2369 = vadd.f32 %v2236, %v2305
  %v2370 = vadd.f32 %v2237, %v2306
  %v2371 = vadd.f32 %v2238, %v2307
  %v2372 = vadd.f32 %v2239, %v2308
  %v2373 = vadd.f32 %v2240, %v2309
  %v2374 = vadd.f32 %v2241, %v2310
  %v2375 = vadd.f32 %v2242, %v2311
  %v2376 = vadd.f32 %v2243, %v2312
  %v2377 = vadd.f32 %v2244, %v2313
  %v2378 = vadd.f32 %v2245, %v2314
  %v2379 = vadd.f32 %v2246, %v2315
  %v2380 = vadd.f32 %v2247, %v2316
  %v2381 = vadd.f32 %v2248, %v2317
  %v2382 = vadd.f32 %v2249, %v2318
  %v2383 = vadd.f32 %v2250, %v2319
  %v2384 = vadd.f32 %v2251, %v2320
  %v2385 = vadd.f32 %v2252, %v2321
  %v2386 = vadd.f32 %v2253, %v2322
  %v2387 = vadd.f32 %v2254, %v2323
  %v2388 = vadd.f32 %v2255, %v2324
  %v2389 = vadd.f32 %v2256, %v2325
  %v2390 = vadd.f32 %v2257, %v2326
  %v2391 = vadd.f32 %v2258, %v2327
  %v2392 = vadd.f32 %v2259, %v2328
  %v2393 = vadd.f32 %v2260, %v2329
  %v2394 = vadd.f32 %v2261, %v2330
  %v2395 = vadd.f32 %v2262, %v2331
  %v2396 = vadd.f32 %v2263, %v2332
  %v2397 = vadd.f32 %v2264, %v2333
  %v2398 = vadd.f32 %v2265, %v2334
  %v2399 = vadd.f32 %v2266, %v2335
  %v2400 = vadd.f32 %v2267, %v2336
  %v2401 = vadd.f32 %v2268, %v2337
  %v2402 = vadd.f32 %v2269, %v2338
  %v2403 = vadd.f32 %v2270, %v2339
  %v2404 = vadd.f32 %v2271, %v2340
  %v2405 = vadd.f32 %v2272, %v2341
  %v2406 = vadd.f32 %v2273, %v2342
  %v2407 = vadd.f32 %v2274, %v2343
  %v2408 = vadd.f32 %v1663, %v2344
  %v2409 = vadd.f32 %v1664, %v2345
  %v2410 = vadd.f32 %v1665, %v2346
  %v2411 = vadd.f32 %v1666, %v2347
  %v2412 = vadd.f32 %v1667, %v2348
  %v2413 = vadd.f32 %v1668, %v2349
  %v2414 = vadd.f32 %v1669, %v2350
  %v2415 = vadd.f32 %v1670, %v2351
  %v2416 = vadd.f32 %v1671, %v2352
  %v2417 = vadd.f32 %v1672, %v2353
  %v2418 = vadd.f32 %v1673, %v2354
  %v2419 = vadd.f32 %v1674, %v2355
  %v2420 = vadd.f32 %v1675, %v2356
  %v2421 = vadd.f32 %v1676, %v2357
  %v2422 = vadd.f32 %v1677, %v2358
  %v2423 = vadd.f32 %v1678, %v2359
  %v2424 = vadd.f32 %v1679, %v2360
  %v2425 = vadd.f32 %v1680, %v2361
  %v2426 = vadd.f32 %v1681, %v2362
  %v2427 = vadd.f32 %v1682, %v2363
  %v2428 = vadd.f32 %v1683, %v2364
  %v2429 = vadd.f32 %v1684, %v2365
  %v2430 = vadd.f32 %v1685, %v2366
  %v2431 = vadd.f32 %v1686, %v2367
  %v2432 = vadd.f32 %v1687, %v2368
  %v2433 = vadd.f32 %v1688, %v2369
  %v2434 = vadd.f32 %v1689, %v2370
  %v2435 = vadd.f32 %v1690, %v2371
  %v2436 = vadd.f32 %v1691, %v2372
  %v2437 = vadd.f32 %v1692, %v2373
  %v2438 = vadd.f32 %v1693, %v2374
  %v2439 = vadd.f32 %v1694, %v2375
  %v2440 = vadd.f32 %v1695, %v2376
  %v2441 = vadd.f32 %v1696, %v2377
  %v2442 = vadd.f32 %v1697, %v2378
  %v2443 = vadd.f32 %v1698, %v2379
  %v2444 = vadd.f32 %v1699, %v2380
  %v2445 = vadd.f32 %v1700, %v2381
  %v2446 = vadd.f32 %v1701, %v2382
  %v2447 = vadd.f32 %v1702, %v2383
  %v2448 = vadd.f32 %v1703, %v2384
  %v2449 = vadd.f32 %v1704, %v2385
  %v2450 = vadd.f32 %v1705, %v2386
  %v2451 = vadd.f32 %v1706, %v2387
  %v2452 = vadd.f32 %v1707, %v2388
  %v2453 = vadd.f32 %v1708, %v2389
  %v2454 = vadd.f32 %v1709, %v2390
  %v2455 = vadd.f32 %v1710, %v2391
  %v2456 = vadd.f32 %v1711, %v2392
  %v2457 = vadd.f32 %v1712, %v2393
  %v2458 = vadd.f32 %v1713, %v2394
  %v2459 = vadd.f32 %v1714, %v2395
  %v2460 = vadd.f32 %v1715, %v2396
  %v2461 = vadd.f32 %v1716, %v2397
  %v2462 = vadd.f32 %v1717, %v2398
  %v2463 = vadd.f32 %v1718, %v2399
  %v2464 = vadd.f32 %v1719, %v2400
  %v2465 = vadd.f32 %v1720, %v2401
  %v2466 = vadd.f32 %v1721, %v2402
  %v2467 = vadd.f32 %v1722, %v2403
  %v2468 = vadd.f32 %v1723, %v2404
  %v2469 = vadd.f32 %v1724, %v2405
  %v2470 = vadd.f32 %v1725, %v2406
  %v2471 = vadd.f32 %v1726, %v2407
  %v2472 = vld [vmem:[#allocation2 + $0x3] sm:$0xff]
  %v2473 = vld [vmem:[#allocation2 + $0xb] sm:$0xff]
  %v2474 = vld [vmem:[#allocation2 + $0x1b] sm:$0xff]
  %v2475 = vld [vmem:[#allocation2 + $0x23] sm:$0xff]
  %v2476 = vld [vmem:[#allocation2 + $0x33] sm:$0xff]
  %v2477 = vld [vmem:[#allocation2 + $0x3b] sm:$0xff]
  %v2478 = vld [vmem:[#allocation2 + $0x4b] sm:$0xff]
  %v2479 = vld [vmem:[#allocation2 + $0x53] sm:$0xff]
  %v2480 = vld [vmem:[#allocation2 + $0x63] sm:$0xff]
  %v2481 = vld [vmem:[#allocation2 + $0x6b] sm:$0xff]
  %v2482 = vld [vmem:[#allocation2 + $0x7b] sm:$0xff]
  %v2483 = vld [vmem:[#allocation2 + $0x83] sm:$0xff]
  %v2484 = vld [vmem:[#allocation2 + $0x93] sm:$0xff]
  %v2485 = vld [vmem:[#allocation2 + $0x9b] sm:$0xff]
  %v2486 = vld [vmem:[#allocation2 + $0xab] sm:$0xff]
  %v2487 = vld [vmem:[#allocation2 + $0xb3] sm:$0xff]
  %v2488 = vld [vmem:[#allocation2 + $0xc3] sm:$0xff]
  %v2489 = vld [vmem:[#allocation2 + $0xcb] sm:$0xff]
  %v2490 = vld [vmem:[#allocation2 + $0xdb] sm:$0xff]
  %v2491 = vld [vmem:[#allocation2 + $0xe3] sm:$0xff]
  %v2492 = vld [vmem:[#allocation2 + $0xf3] sm:$0xff]
  %v2493 = vld [vmem:[#allocation2 + $0xfb] sm:$0xff]
  %v2494 = vld [vmem:[#allocation2 + $0x10b] sm:$0xff]
  %v2495 = vld [vmem:[#allocation2 + $0x113] sm:$0xff]
  %v2496 = vld [vmem:[#allocation2 + $0x123] sm:$0xff]
  %v2497 = vld [vmem:[#allocation2 + $0x12b] sm:$0xff]
  %v2498 = vld [vmem:[#allocation2 + $0x13b] sm:$0xff]
  %v2499 = vld [vmem:[#allocation2 + $0x143] sm:$0xff]
  %v2500 = vld [vmem:[#allocation2 + $0x153] sm:$0xff]
  %v2501 = vld [vmem:[#allocation2 + $0x15b] sm:$0xff]
  %v2502 = vld [vmem:[#allocation2 + $0x16b] sm:$0xff]
  %v2503 = vld [vmem:[#allocation2 + $0x173] sm:$0xff]
  %v2504 = vld [vmem:[#allocation2 + $0x183] sm:$0xff]
  %v2505 = vld [vmem:[#allocation2 + $0x18b] sm:$0xff]
  %v2506 = vld [vmem:[#allocation2 + $0x19b] sm:$0xff]
  %v2507 = vld [vmem:[#allocation2 + $0x1a3] sm:$0xff]
  %v2508 = vld [vmem:[#allocation2 + $0x1b3] sm:$0xff]
  %v2509 = vld [vmem:[#allocation2 + $0x1bb] sm:$0xff]
  %v2510 = vld [vmem:[#allocation2 + $0x1cb] sm:$0xff]
  %v2511 = vld [vmem:[#allocation2 + $0x1d3] sm:$0xff]
  %v2512 = vld [vmem:[#allocation2 + $0x1e3] sm:$0xff]
  %v2513 = vld [vmem:[#allocation2 + $0x1eb] sm:$0xff]
  %v2514 = vld [vmem:[#allocation2 + $0x1fb] sm:$0xff]
  %v2515 = vld [vmem:[#allocation2 + $0x203] sm:$0xff]
  %v2516 = vld [vmem:[#allocation2 + $0x213] sm:$0xff]
  %v2517 = vld [vmem:[#allocation2 + $0x21b] sm:$0xff]
  %v2518 = vld [vmem:[#allocation2 + $0x22b] sm:$0xff]
  %v2519 = vld [vmem:[#allocation2 + $0x233] sm:$0xff]
  %v2520 = vld [vmem:[#allocation2 + $0x243] sm:$0xff]
  %v2521 = vld [vmem:[#allocation2 + $0x24b] sm:$0xff]
  %v2522 = vld [vmem:[#allocation2 + $0x25b] sm:$0xff]
  %v2523 = vld [vmem:[#allocation2 + $0x263] sm:$0xff]
  %v2524 = vld [vmem:[#allocation2 + $0x273] sm:$0xff]
  %v2525 = vld [vmem:[#allocation2 + $0x27b] sm:$0xff]
  %v2526 = vld [vmem:[#allocation2 + $0x28b] sm:$0xff]
  %v2527 = vld [vmem:[#allocation2 + $0x293] sm:$0xff]
  %v2528 = vld [vmem:[#allocation2 + $0x2a3] sm:$0xff]
  %v2529 = vld [vmem:[#allocation2 + $0x2ab] sm:$0xff]
  %v2530 = vld [vmem:[#allocation2 + $0x2bb] sm:$0xff]
  %v2531 = vld [vmem:[#allocation2 + $0x2c3] sm:$0xff]
  %v2532 = vld [vmem:[#allocation2 + $0x2d3] sm:$0xff]
  %v2533 = vld [vmem:[#allocation2 + $0x2db] sm:$0xff]
  %v2534 = vld [vmem:[#allocation2 + $0x2eb] sm:$0xff]
  %v2535 = vld [vmem:[#allocation2 + $0x2f3] sm:$0xff]
  %v2536 = vld [vmem:[#allocation2 + $0x303] sm:$0xff]
  %v2537 = vld [vmem:[#allocation2 + $0x30b] sm:$0xff]
  %v2538 = vld [vmem:[#allocation2 + $0x31b] sm:$0xff]
  %v2539 = vld [vmem:[#allocation2 + $0x323] sm:$0xff]
  %v2540 = vld [vmem:[#allocation2 + $0x333] sm:$0xff]
  %v2541 = vld [vmem:[#allocation2 + $0x33b] sm:$0xff]
  %v2542 = vld [vmem:[#allocation2 + $0x34b] sm:$0xff]
  %v2543 = vld [vmem:[#allocation2 + $0x353] sm:$0xff]
  %v2544 = vld [vmem:[#allocation2 + $0x363] sm:$0xff]
  %v2545 = vld [vmem:[#allocation2 + $0x36b] sm:$0xff]
  %v2546 = vld [vmem:[#allocation2 + $0x37b] sm:$0xff]
  %v2547 = vld [vmem:[#allocation2 + $0x383] sm:$0xff]
  %v2548 = vld [vmem:[#allocation2 + $0x393] sm:$0xff]
  %v2549 = vld [vmem:[#allocation2 + $0x39b] sm:$0xff]
  %v2550 = vld [vmem:[#allocation2 + $0x3ab] sm:$0xff]
  %v2551 = vld [vmem:[#allocation2 + $0x3b3] sm:$0xff]
  %s2552 = scalar_lea.vmem %s1, 3
  %v2553 = vld [vmem:[%s2552] sm:$0x1]
  %v2555 = vperm.slane %v2553, 0
  %v2557 = vmul.f32 %v2472, %v2555
  %v2558 = vmul.f32 %v2473, %v2555
  %v2559 = vmul.f32 %v2474, %v2555
  %v2560 = vmul.f32 %v2475, %v2555
  %v2561 = vmul.f32 %v2476, %v2555
  %v2562 = vmul.f32 %v2477, %v2555
  %v2563 = vmul.f32 %v2478, %v2555
  %v2564 = vmul.f32 %v2479, %v2555
  %v2565 = vmul.f32 %v2480, %v2555
  %v2566 = vmul.f32 %v2481, %v2555
  %v2567 = vmul.f32 %v2482, %v2555
  %v2568 = vmul.f32 %v2483, %v2555
  %v2569 = vmul.f32 %v2484, %v2555
  %v2570 = vmul.f32 %v2485, %v2555
  %v2571 = vmul.f32 %v2486, %v2555
  %v2572 = vmul.f32 %v2487, %v2555
  %v2573 = vmul.f32 %v2488, %v2555
  %v2574 = vmul.f32 %v2489, %v2555
  %v2575 = vmul.f32 %v2490, %v2555
  %v2576 = vmul.f32 %v2491, %v2555
  %v2577 = vmul.f32 %v2492, %v2555
  %v2578 = vmul.f32 %v2493, %v2555
  %v2579 = vmul.f32 %v2494, %v2555
  %v2580 = vmul.f32 %v2495, %v2555
  %v2581 = vmul.f32 %v2496, %v2555
  %v2582 = vmul.f32 %v2497, %v2555
  %v2583 = vmul.f32 %v2498, %v2555
  %v2584 = vmul.f32 %v2499, %v2555
  %v2585 = vmul.f32 %v2500, %v2555
  %v2586 = vmul.f32 %v2501, %v2555
  %v2587 = vmul.f32 %v2502, %v2555
  %v2588 = vmul.f32 %v2503, %v2555
  %v2589 = vmul.f32 %v2512, %v2555
  %v2590 = vmul.f32 %v2513, %v2555
  %v2591 = vmul.f32 %v2514, %v2555
  %v2592 = vmul.f32 %v2515, %v2555
  %v2593 = vmul.f32 %v2516, %v2555
  %v2594 = vmul.f32 %v2517, %v2555
  %v2595 = vmul.f32 %v2518, %v2555
  %v2596 = vmul.f32 %v2519, %v2555
  %v2597 = vmul.f32 %v2520, %v2555
  %v2598 = vmul.f32 %v2521, %v2555
  %v2599 = vmul.f32 %v2522, %v2555
  %v2600 = vmul.f32 %v2523, %v2555
  %v2601 = vmul.f32 %v2524, %v2555
  %v2602 = vmul.f32 %v2525, %v2555
  %v2603 = vmul.f32 %v2526, %v2555
  %v2604 = vmul.f32 %v2527, %v2555
  %v2605 = vmul.f32 %v2528, %v2555
  %v2606 = vmul.f32 %v2529, %v2555
  %v2607 = vmul.f32 %v2530, %v2555
  %v2608 = vmul.f32 %v2531, %v2555
  %v2609 = vmul.f32 %v2532, %v2555
  %v2610 = vmul.f32 %v2533, %v2555
  %v2611 = vmul.f32 %v2534, %v2555
  %v2612 = vmul.f32 %v2535, %v2555
  %v2613 = vmul.f32 %v2536, %v2555
  %v2614 = vmul.f32 %v2537, %v2555
  %v2615 = vmul.f32 %v2538, %v2555
  %v2616 = vmul.f32 %v2539, %v2555
  %v2617 = vmul.f32 %v2540, %v2555
  %v2618 = vmul.f32 %v2541, %v2555
  %v2619 = vmul.f32 %v2542, %v2555
  %v2620 = vmul.f32 %v2543, %v2555
  %s2621 = scalar_lea.vmem %s1, 8
  %v2622 = vld [vmem:[%s2621] sm:$0x1]
  %v2624 = vperm.slane %v2622, 0
  %v2626 = vmul.f32 %v2474, %v2624
  %v2627 = vmul.f32 %v2475, %v2624
  %v2628 = vmul.f32 %v2476, %v2624
  %v2629 = vmul.f32 %v2477, %v2624
  %v2630 = vmul.f32 %v2478, %v2624
  %v2631 = vmul.f32 %v2479, %v2624
  %v2632 = vmul.f32 %v2480, %v2624
  %v2633 = vmul.f32 %v2481, %v2624
  %v2634 = vmul.f32 %v2482, %v2624
  %v2635 = vmul.f32 %v2483, %v2624
  %v2636 = vmul.f32 %v2484, %v2624
  %v2637 = vmul.f32 %v2485, %v2624
  %v2638 = vmul.f32 %v2486, %v2624
  %v2639 = vmul.f32 %v2487, %v2624
  %v2640 = vmul.f32 %v2488, %v2624
  %v2641 = vmul.f32 %v2489, %v2624
  %v2642 = vmul.f32 %v2490, %v2624
  %v2643 = vmul.f32 %v2491, %v2624
  %v2644 = vmul.f32 %v2492, %v2624
  %v2645 = vmul.f32 %v2493, %v2624
  %v2646 = vmul.f32 %v2494, %v2624
  %v2647 = vmul.f32 %v2495, %v2624
  %v2648 = vmul.f32 %v2496, %v2624
  %v2649 = vmul.f32 %v2497, %v2624
  %v2650 = vmul.f32 %v2498, %v2624
  %v2651 = vmul.f32 %v2499, %v2624
  %v2652 = vmul.f32 %v2500, %v2624
  %v2653 = vmul.f32 %v2501, %v2624
  %v2654 = vmul.f32 %v2502, %v2624
  %v2655 = vmul.f32 %v2503, %v2624
  %v2656 = vmul.f32 %v2504, %v2624
  %v2657 = vmul.f32 %v2505, %v2624
  %v2658 = vmul.f32 %v2514, %v2624
  %v2659 = vmul.f32 %v2515, %v2624
  %v2660 = vmul.f32 %v2516, %v2624
  %v2661 = vmul.f32 %v2517, %v2624
  %v2662 = vmul.f32 %v2518, %v2624
  %v2663 = vmul.f32 %v2519, %v2624
  %v2664 = vmul.f32 %v2520, %v2624
  %v2665 = vmul.f32 %v2521, %v2624
  %v2666 = vmul.f32 %v2522, %v2624
  %v2667 = vmul.f32 %v2523, %v2624
  %v2668 = vmul.f32 %v2524, %v2624
  %v2669 = vmul.f32 %v2525, %v2624
  %v2670 = vmul.f32 %v2526, %v2624
  %v2671 = vmul.f32 %v2527, %v2624
  %v2672 = vmul.f32 %v2528, %v2624
  %v2673 = vmul.f32 %v2529, %v2624
  %v2674 = vmul.f32 %v2530, %v2624
  %v2675 = vmul.f32 %v2531, %v2624
  %v2676 = vmul.f32 %v2532, %v2624
  %v2677 = vmul.f32 %v2533, %v2624
  %v2678 = vmul.f32 %v2534, %v2624
  %v2679 = vmul.f32 %v2535, %v2624
  %v2680 = vmul.f32 %v2536, %v2624
  %v2681 = vmul.f32 %v2537, %v2624
  %v2682 = vmul.f32 %v2538, %v2624
  %v2683 = vmul.f32 %v2539, %v2624
  %v2684 = vmul.f32 %v2540, %v2624
  %v2685 = vmul.f32 %v2541, %v2624
  %v2686 = vmul.f32 %v2542, %v2624
  %v2687 = vmul.f32 %v2543, %v2624
  %v2688 = vmul.f32 %v2544, %v2624
  %v2689 = vmul.f32 %v2545, %v2624
  %v2690 = vadd.f32 %v2557, %v2626
  %v2691 = vadd.f32 %v2558, %v2627
  %v2692 = vadd.f32 %v2559, %v2628
  %v2693 = vadd.f32 %v2560, %v2629
  %v2694 = vadd.f32 %v2561, %v2630
  %v2695 = vadd.f32 %v2562, %v2631
  %v2696 = vadd.f32 %v2563, %v2632
  %v2697 = vadd.f32 %v2564, %v2633
  %v2698 = vadd.f32 %v2565, %v2634
  %v2699 = vadd.f32 %v2566, %v2635
  %v2700 = vadd.f32 %v2567, %v2636
  %v2701 = vadd.f32 %v2568, %v2637
  %v2702 = vadd.f32 %v2569, %v2638
  %v2703 = vadd.f32 %v2570, %v2639
  %v2704 = vadd.f32 %v2571, %v2640
  %v2705 = vadd.f32 %v2572, %v2641
  %v2706 = vadd.f32 %v2573, %v2642
  %v2707 = vadd.f32 %v2574, %v2643
  %v2708 = vadd.f32 %v2575, %v2644
  %v2709 = vadd.f32 %v2576, %v2645
  %v2710 = vadd.f32 %v2577, %v2646
  %v2711 = vadd.f32 %v2578, %v2647
  %v2712 = vadd.f32 %v2579, %v2648
  %v2713 = vadd.f32 %v2580, %v2649
  %v2714 = vadd.f32 %v2581, %v2650
  %v2715 = vadd.f32 %v2582, %v2651
  %v2716 = vadd.f32 %v2583, %v2652
  %v2717 = vadd.f32 %v2584, %v2653
  %v2718 = vadd.f32 %v2585, %v2654
  %v2719 = vadd.f32 %v2586, %v2655
  %v2720 = vadd.f32 %v2587, %v2656
  %v2721 = vadd.f32 %v2588, %v2657
  %v2722 = vadd.f32 %v2589, %v2658
  %v2723 = vadd.f32 %v2590, %v2659
  %v2724 = vadd.f32 %v2591, %v2660
  %v2725 = vadd.f32 %v2592, %v2661
  %v2726 = vadd.f32 %v2593, %v2662
  %v2727 = vadd.f32 %v2594, %v2663
  %v2728 = vadd.f32 %v2595, %v2664
  %v2729 = vadd.f32 %v2596, %v2665
  %v2730 = vadd.f32 %v2597, %v2666
  %v2731 = vadd.f32 %v2598, %v2667
  %v2732 = vadd.f32 %v2599, %v2668
  %v2733 = vadd.f32 %v2600, %v2669
  %v2734 = vadd.f32 %v2601, %v2670
  %v2735 = vadd.f32 %v2602, %v2671
  %v2736 = vadd.f32 %v2603, %v2672
  %v2737 = vadd.f32 %v2604, %v2673
  %v2738 = vadd.f32 %v2605, %v2674
  %v2739 = vadd.f32 %v2606, %v2675
  %v2740 = vadd.f32 %v2607, %v2676
  %v2741 = vadd.f32 %v2608, %v2677
  %v2742 = vadd.f32 %v2609, %v2678
  %v2743 = vadd.f32 %v2610, %v2679
  %v2744 = vadd.f32 %v2611, %v2680
  %v2745 = vadd.f32 %v2612, %v2681
  %v2746 = vadd.f32 %v2613, %v2682
  %v2747 = vadd.f32 %v2614, %v2683
  %v2748 = vadd.f32 %v2615, %v2684
  %v2749 = vadd.f32 %v2616, %v2685
  %v2750 = vadd.f32 %v2617, %v2686
  %v2751 = vadd.f32 %v2618, %v2687
  %v2752 = vadd.f32 %v2619, %v2688
  %v2753 = vadd.f32 %v2620, %v2689
  %s2754 = scalar_lea.vmem %s1, 13
  %v2755 = vld [vmem:[%s2754] sm:$0x1]
  %v2757 = vperm.slane %v2755, 0
  %v2759 = vmul.f32 %v2476, %v2757
  %v2760 = vmul.f32 %v2477, %v2757
  %v2761 = vmul.f32 %v2478, %v2757
  %v2762 = vmul.f32 %v2479, %v2757
  %v2763 = vmul.f32 %v2480, %v2757
  %v2764 = vmul.f32 %v2481, %v2757
  %v2765 = vmul.f32 %v2482, %v2757
  %v2766 = vmul.f32 %v2483, %v2757
  %v2767 = vmul.f32 %v2484, %v2757
  %v2768 = vmul.f32 %v2485, %v2757
  %v2769 = vmul.f32 %v2486, %v2757
  %v2770 = vmul.f32 %v2487, %v2757
  %v2771 = vmul.f32 %v2488, %v2757
  %v2772 = vmul.f32 %v2489, %v2757
  %v2773 = vmul.f32 %v2490, %v2757
  %v2774 = vmul.f32 %v2491, %v2757
  %v2775 = vmul.f32 %v2492, %v2757
  %v2776 = vmul.f32 %v2493, %v2757
  %v2777 = vmul.f32 %v2494, %v2757
  %v2778 = vmul.f32 %v2495, %v2757
  %v2779 = vmul.f32 %v2496, %v2757
  %v2780 = vmul.f32 %v2497, %v2757
  %v2781 = vmul.f32 %v2498, %v2757
  %v2782 = vmul.f32 %v2499, %v2757
  %v2783 = vmul.f32 %v2500, %v2757
  %v2784 = vmul.f32 %v2501, %v2757
  %v2785 = vmul.f32 %v2502, %v2757
  %v2786 = vmul.f32 %v2503, %v2757
  %v2787 = vmul.f32 %v2504, %v2757
  %v2788 = vmul.f32 %v2505, %v2757
  %v2789 = vmul.f32 %v2506, %v2757
  %v2790 = vmul.f32 %v2507, %v2757
  %v2791 = vmul.f32 %v2516, %v2757
  %v2792 = vmul.f32 %v2517, %v2757
  %v2793 = vmul.f32 %v2518, %v2757
  %v2794 = vmul.f32 %v2519, %v2757
  %v2795 = vmul.f32 %v2520, %v2757
  %v2796 = vmul.f32 %v2521, %v2757
  %v2797 = vmul.f32 %v2522, %v2757
  %v2798 = vmul.f32 %v2523, %v2757
  %v2799 = vmul.f32 %v2524, %v2757
  %v2800 = vmul.f32 %v2525, %v2757
  %v2801 = vmul.f32 %v2526, %v2757
  %v2802 = vmul.f32 %v2527, %v2757
  %v2803 = vmul.f32 %v2528, %v2757
  %v2804 = vmul.f32 %v2529, %v2757
  %v2805 = vmul.f32 %v2530, %v2757
  %v2806 = vmul.f32 %v2531, %v2757
  %v2807 = vmul.f32 %v2532, %v2757
  %v2808 = vmul.f32 %v2533, %v2757
  %v2809 = vmul.f32 %v2534, %v2757
  %v2810 = vmul.f32 %v2535, %v2757
  %v2811 = vmul.f32 %v2536, %v2757
  %v2812 = vmul.f32 %v2537, %v2757
  %v2813 = vmul.f32 %v2538, %v2757
  %v2814 = vmul.f32 %v2539, %v2757
  %v2815 = vmul.f32 %v2540, %v2757
  %v2816 = vmul.f32 %v2541, %v2757
  %v2817 = vmul.f32 %v2542, %v2757
  %v2818 = vmul.f32 %v2543, %v2757
  %v2819 = vmul.f32 %v2544, %v2757
  %v2820 = vmul.f32 %v2545, %v2757
  %v2821 = vmul.f32 %v2546, %v2757
  %v2822 = vmul.f32 %v2547, %v2757
  %v2823 = vadd.f32 %v2690, %v2759
  %v2824 = vadd.f32 %v2691, %v2760
  %v2825 = vadd.f32 %v2692, %v2761
  %v2826 = vadd.f32 %v2693, %v2762
  %v2827 = vadd.f32 %v2694, %v2763
  %v2828 = vadd.f32 %v2695, %v2764
  %v2829 = vadd.f32 %v2696, %v2765
  %v2830 = vadd.f32 %v2697, %v2766
  %v2831 = vadd.f32 %v2698, %v2767
  %v2832 = vadd.f32 %v2699, %v2768
  %v2833 = vadd.f32 %v2700, %v2769
  %v2834 = vadd.f32 %v2701, %v2770
  %v2835 = vadd.f32 %v2702, %v2771
  %v2836 = vadd.f32 %v2703, %v2772
  %v2837 = vadd.f32 %v2704, %v2773
  %v2838 = vadd.f32 %v2705, %v2774
  %v2839 = vadd.f32 %v2706, %v2775
  %v2840 = vadd.f32 %v2707, %v2776
  %v2841 = vadd.f32 %v2708, %v2777
  %v2842 = vadd.f32 %v2709, %v2778
  %v2843 = vadd.f32 %v2710, %v2779
  %v2844 = vadd.f32 %v2711, %v2780
  %v2845 = vadd.f32 %v2712, %v2781
  %v2846 = vadd.f32 %v2713, %v2782
  %v2847 = vadd.f32 %v2714, %v2783
  %v2848 = vadd.f32 %v2715, %v2784
  %v2849 = vadd.f32 %v2716, %v2785
  %v2850 = vadd.f32 %v2717, %v2786
  %v2851 = vadd.f32 %v2718, %v2787
  %v2852 = vadd.f32 %v2719, %v2788
  %v2853 = vadd.f32 %v2720, %v2789
  %v2854 = vadd.f32 %v2721, %v2790
  %v2855 = vadd.f32 %v2722, %v2791
  %v2856 = vadd.f32 %v2723, %v2792
  %v2857 = vadd.f32 %v2724, %v2793
  %v2858 = vadd.f32 %v2725, %v2794
  %v2859 = vadd.f32 %v2726, %v2795
  %v2860 = vadd.f32 %v2727, %v2796
  %v2861 = vadd.f32 %v2728, %v2797
  %v2862 = vadd.f32 %v2729, %v2798
  %v2863 = vadd.f32 %v2730, %v2799
  %v2864 = vadd.f32 %v2731, %v2800
  %v2865 = vadd.f32 %v2732, %v2801
  %v2866 = vadd.f32 %v2733, %v2802
  %v2867 = vadd.f32 %v2734, %v2803
  %v2868 = vadd.f32 %v2735, %v2804
  %v2869 = vadd.f32 %v2736, %v2805
  %v2870 = vadd.f32 %v2737, %v2806
  %v2871 = vadd.f32 %v2738, %v2807
  %v2872 = vadd.f32 %v2739, %v2808
  %v2873 = vadd.f32 %v2740, %v2809
  %v2874 = vadd.f32 %v2741, %v2810
  %v2875 = vadd.f32 %v2742, %v2811
  %v2876 = vadd.f32 %v2743, %v2812
  %v2877 = vadd.f32 %v2744, %v2813
  %v2878 = vadd.f32 %v2745, %v2814
  %v2879 = vadd.f32 %v2746, %v2815
  %v2880 = vadd.f32 %v2747, %v2816
  %v2881 = vadd.f32 %v2748, %v2817
  %v2882 = vadd.f32 %v2749, %v2818
  %v2883 = vadd.f32 %v2750, %v2819
  %v2884 = vadd.f32 %v2751, %v2820
  %v2885 = vadd.f32 %v2752, %v2821
  %v2886 = vadd.f32 %v2753, %v2822
  %s2887 = scalar_lea.vmem %s1, 18
  %v2888 = vld [vmem:[%s2887] sm:$0x1]
  %v2890 = vperm.slane %v2888, 0
  %v2892 = vmul.f32 %v2478, %v2890
  %v2893 = vmul.f32 %v2479, %v2890
  %v2894 = vmul.f32 %v2480, %v2890
  %v2895 = vmul.f32 %v2481, %v2890
  %v2896 = vmul.f32 %v2482, %v2890
  %v2897 = vmul.f32 %v2483, %v2890
  %v2898 = vmul.f32 %v2484, %v2890
  %v2899 = vmul.f32 %v2485, %v2890
  %v2900 = vmul.f32 %v2486, %v2890
  %v2901 = vmul.f32 %v2487, %v2890
  %v2902 = vmul.f32 %v2488, %v2890
  %v2903 = vmul.f32 %v2489, %v2890
  %v2904 = vmul.f32 %v2490, %v2890
  %v2905 = vmul.f32 %v2491, %v2890
  %v2906 = vmul.f32 %v2492, %v2890
  %v2907 = vmul.f32 %v2493, %v2890
  %v2908 = vmul.f32 %v2494, %v2890
  %v2909 = vmul.f32 %v2495, %v2890
  %v2910 = vmul.f32 %v2496, %v2890
  %v2911 = vmul.f32 %v2497, %v2890
  %v2912 = vmul.f32 %v2498, %v2890
  %v2913 = vmul.f32 %v2499, %v2890
  %v2914 = vmul.f32 %v2500, %v2890
  %v2915 = vmul.f32 %v2501, %v2890
  %v2916 = vmul.f32 %v2502, %v2890
  %v2917 = vmul.f32 %v2503, %v2890
  %v2918 = vmul.f32 %v2504, %v2890
  %v2919 = vmul.f32 %v2505, %v2890
  %v2920 = vmul.f32 %v2506, %v2890
  %v2921 = vmul.f32 %v2507, %v2890
  %v2922 = vmul.f32 %v2508, %v2890
  %v2923 = vmul.f32 %v2509, %v2890
  %v2924 = vmul.f32 %v2518, %v2890
  %v2925 = vmul.f32 %v2519, %v2890
  %v2926 = vmul.f32 %v2520, %v2890
  %v2927 = vmul.f32 %v2521, %v2890
  %v2928 = vmul.f32 %v2522, %v2890
  %v2929 = vmul.f32 %v2523, %v2890
  %v2930 = vmul.f32 %v2524, %v2890
  %v2931 = vmul.f32 %v2525, %v2890
  %v2932 = vmul.f32 %v2526, %v2890
  %v2933 = vmul.f32 %v2527, %v2890
  %v2934 = vmul.f32 %v2528, %v2890
  %v2935 = vmul.f32 %v2529, %v2890
  %v2936 = vmul.f32 %v2530, %v2890
  %v2937 = vmul.f32 %v2531, %v2890
  %v2938 = vmul.f32 %v2532, %v2890
  %v2939 = vmul.f32 %v2533, %v2890
  %v2940 = vmul.f32 %v2534, %v2890
  %v2941 = vmul.f32 %v2535, %v2890
  %v2942 = vmul.f32 %v2536, %v2890
  %v2943 = vmul.f32 %v2537, %v2890
  %v2944 = vmul.f32 %v2538, %v2890
  %v2945 = vmul.f32 %v2539, %v2890
  %v2946 = vmul.f32 %v2540, %v2890
  %v2947 = vmul.f32 %v2541, %v2890
  %v2948 = vmul.f32 %v2542, %v2890
  %v2949 = vmul.f32 %v2543, %v2890
  %v2950 = vmul.f32 %v2544, %v2890
  %v2951 = vmul.f32 %v2545, %v2890
  %v2952 = vmul.f32 %v2546, %v2890
  %v2953 = vmul.f32 %v2547, %v2890
  %v2954 = vmul.f32 %v2548, %v2890
  %v2955 = vmul.f32 %v2549, %v2890
  %v2956 = vadd.f32 %v2823, %v2892
  %v2957 = vadd.f32 %v2824, %v2893
  %v2958 = vadd.f32 %v2825, %v2894
  %v2959 = vadd.f32 %v2826, %v2895
  %v2960 = vadd.f32 %v2827, %v2896
  %v2961 = vadd.f32 %v2828, %v2897
  %v2962 = vadd.f32 %v2829, %v2898
  %v2963 = vadd.f32 %v2830, %v2899
  %v2964 = vadd.f32 %v2831, %v2900
  %v2965 = vadd.f32 %v2832, %v2901
  %v2966 = vadd.f32 %v2833, %v2902
  %v2967 = vadd.f32 %v2834, %v2903
  %v2968 = vadd.f32 %v2835, %v2904
  %v2969 = vadd.f32 %v2836, %v2905
  %v2970 = vadd.f32 %v2837, %v2906
  %v2971 = vadd.f32 %v2838, %v2907
  %v2972 = vadd.f32 %v2839, %v2908
  %v2973 = vadd.f32 %v2840, %v2909
  %v2974 = vadd.f32 %v2841, %v2910
  %v2975 = vadd.f32 %v2842, %v2911
  %v2976 = vadd.f32 %v2843, %v2912
  %v2977 = vadd.f32 %v2844, %v2913
  %v2978 = vadd.f32 %v2845, %v2914
  %v2979 = vadd.f32 %v2846, %v2915
  %v2980 = vadd.f32 %v2847, %v2916
  %v2981 = vadd.f32 %v2848, %v2917
  %v2982 = vadd.f32 %v2849, %v2918
  %v2983 = vadd.f32 %v2850, %v2919
  %v2984 = vadd.f32 %v2851, %v2920
  %v2985 = vadd.f32 %v2852, %v2921
  %v2986 = vadd.f32 %v2853, %v2922
  %v2987 = vadd.f32 %v2854, %v2923
  %v2988 = vadd.f32 %v2855, %v2924
  %v2989 = vadd.f32 %v2856, %v2925
  %v2990 = vadd.f32 %v2857, %v2926
  %v2991 = vadd.f32 %v2858, %v2927
  %v2992 = vadd.f32 %v2859, %v2928
  %v2993 = vadd.f32 %v2860, %v2929
  %v2994 = vadd.f32 %v2861, %v2930
  %v2995 = vadd.f32 %v2862, %v2931
  %v2996 = vadd.f32 %v2863, %v2932
  %v2997 = vadd.f32 %v2864, %v2933
  %v2998 = vadd.f32 %v2865, %v2934
  %v2999 = vadd.f32 %v2866, %v2935
  %v3000 = vadd.f32 %v2867, %v2936
  %v3001 = vadd.f32 %v2868, %v2937
  %v3002 = vadd.f32 %v2869, %v2938
  %v3003 = vadd.f32 %v2870, %v2939
  %v3004 = vadd.f32 %v2871, %v2940
  %v3005 = vadd.f32 %v2872, %v2941
  %v3006 = vadd.f32 %v2873, %v2942
  %v3007 = vadd.f32 %v2874, %v2943
  %v3008 = vadd.f32 %v2875, %v2944
  %v3009 = vadd.f32 %v2876, %v2945
  %v3010 = vadd.f32 %v2877, %v2946
  %v3011 = vadd.f32 %v2878, %v2947
  %v3012 = vadd.f32 %v2879, %v2948
  %v3013 = vadd.f32 %v2880, %v2949
  %v3014 = vadd.f32 %v2881, %v2950
  %v3015 = vadd.f32 %v2882, %v2951
  %v3016 = vadd.f32 %v2883, %v2952
  %v3017 = vadd.f32 %v2884, %v2953
  %v3018 = vadd.f32 %v2885, %v2954
  %v3019 = vadd.f32 %v2886, %v2955
  %s3020 = scalar_lea.vmem %s1, 23
  %v3021 = vld [vmem:[%s3020] sm:$0x1]
  %v3023 = vperm.slane %v3021, 0
  %v3025 = vmul.f32 %v2480, %v3023
  %v3026 = vmul.f32 %v2481, %v3023
  %v3027 = vmul.f32 %v2482, %v3023
  %v3028 = vmul.f32 %v2483, %v3023
  %v3029 = vmul.f32 %v2484, %v3023
  %v3030 = vmul.f32 %v2485, %v3023
  %v3031 = vmul.f32 %v2486, %v3023
  %v3032 = vmul.f32 %v2487, %v3023
  %v3033 = vmul.f32 %v2488, %v3023
  %v3034 = vmul.f32 %v2489, %v3023
  %v3035 = vmul.f32 %v2490, %v3023
  %v3036 = vmul.f32 %v2491, %v3023
  %v3037 = vmul.f32 %v2492, %v3023
  %v3038 = vmul.f32 %v2493, %v3023
  %v3039 = vmul.f32 %v2494, %v3023
  %v3040 = vmul.f32 %v2495, %v3023
  %v3041 = vmul.f32 %v2496, %v3023
  %v3042 = vmul.f32 %v2497, %v3023
  %v3043 = vmul.f32 %v2498, %v3023
  %v3044 = vmul.f32 %v2499, %v3023
  %v3045 = vmul.f32 %v2500, %v3023
  %v3046 = vmul.f32 %v2501, %v3023
  %v3047 = vmul.f32 %v2502, %v3023
  %v3048 = vmul.f32 %v2503, %v3023
  %v3049 = vmul.f32 %v2504, %v3023
  %v3050 = vmul.f32 %v2505, %v3023
  %v3051 = vmul.f32 %v2506, %v3023
  %v3052 = vmul.f32 %v2507, %v3023
  %v3053 = vmul.f32 %v2508, %v3023
  %v3054 = vmul.f32 %v2509, %v3023
  %v3055 = vmul.f32 %v2510, %v3023
  %v3056 = vmul.f32 %v2511, %v3023
  %v3057 = vmul.f32 %v2520, %v3023
  %v3058 = vmul.f32 %v2521, %v3023
  %v3059 = vmul.f32 %v2522, %v3023
  %v3060 = vmul.f32 %v2523, %v3023
  %v3061 = vmul.f32 %v2524, %v3023
  %v3062 = vmul.f32 %v2525, %v3023
  %v3063 = vmul.f32 %v2526, %v3023
  %v3064 = vmul.f32 %v2527, %v3023
  %v3065 = vmul.f32 %v2528, %v3023
  %v3066 = vmul.f32 %v2529, %v3023
  %v3067 = vmul.f32 %v2530, %v3023
  %v3068 = vmul.f32 %v2531, %v3023
  %v3069 = vmul.f32 %v2532, %v3023
  %v3070 = vmul.f32 %v2533, %v3023
  %v3071 = vmul.f32 %v2534, %v3023
  %v3072 = vmul.f32 %v2535, %v3023
  %v3073 = vmul.f32 %v2536, %v3023
  %v3074 = vmul.f32 %v2537, %v3023
  %v3075 = vmul.f32 %v2538, %v3023
  %v3076 = vmul.f32 %v2539, %v3023
  %v3077 = vmul.f32 %v2540, %v3023
  %v3078 = vmul.f32 %v2541, %v3023
  %v3079 = vmul.f32 %v2542, %v3023
  %v3080 = vmul.f32 %v2543, %v3023
  %v3081 = vmul.f32 %v2544, %v3023
  %v3082 = vmul.f32 %v2545, %v3023
  %v3083 = vmul.f32 %v2546, %v3023
  %v3084 = vmul.f32 %v2547, %v3023
  %v3085 = vmul.f32 %v2548, %v3023
  %v3086 = vmul.f32 %v2549, %v3023
  %v3087 = vmul.f32 %v2550, %v3023
  %v3088 = vmul.f32 %v2551, %v3023
  %v3089 = vadd.f32 %v2956, %v3025
  %v3090 = vadd.f32 %v2957, %v3026
  %v3091 = vadd.f32 %v2958, %v3027
  %v3092 = vadd.f32 %v2959, %v3028
  %v3093 = vadd.f32 %v2960, %v3029
  %v3094 = vadd.f32 %v2961, %v3030
  %v3095 = vadd.f32 %v2962, %v3031
  %v3096 = vadd.f32 %v2963, %v3032
  %v3097 = vadd.f32 %v2964, %v3033
  %v3098 = vadd.f32 %v2965, %v3034
  %v3099 = vadd.f32 %v2966, %v3035
  %v3100 = vadd.f32 %v2967, %v3036
  %v3101 = vadd.f32 %v2968, %v3037
  %v3102 = vadd.f32 %v2969, %v3038
  %v3103 = vadd.f32 %v2970, %v3039
  %v3104 = vadd.f32 %v2971, %v3040
  %v3105 = vadd.f32 %v2972, %v3041
  %v3106 = vadd.f32 %v2973, %v3042
  %v3107 = vadd.f32 %v2974, %v3043
  %v3108 = vadd.f32 %v2975, %v3044
  %v3109 = vadd.f32 %v2976, %v3045
  %v3110 = vadd.f32 %v2977, %v3046
  %v3111 = vadd.f32 %v2978, %v3047
  %v3112 = vadd.f32 %v2979, %v3048
  %v3113 = vadd.f32 %v2980, %v3049
  %v3114 = vadd.f32 %v2981, %v3050
  %v3115 = vadd.f32 %v2982, %v3051
  %v3116 = vadd.f32 %v2983, %v3052
  %v3117 = vadd.f32 %v2984, %v3053
  %v3118 = vadd.f32 %v2985, %v3054
  %v3119 = vadd.f32 %v2986, %v3055
  %v3120 = vadd.f32 %v2987, %v3056
  %v3121 = vadd.f32 %v2988, %v3057
  %v3122 = vadd.f32 %v2989, %v3058
  %v3123 = vadd.f32 %v2990, %v3059
  %v3124 = vadd.f32 %v2991, %v3060
  %v3125 = vadd.f32 %v2992, %v3061
  %v3126 = vadd.f32 %v2993, %v3062
  %v3127 = vadd.f32 %v2994, %v3063
  %v3128 = vadd.f32 %v2995, %v3064
  %v3129 = vadd.f32 %v2996, %v3065
  %v3130 = vadd.f32 %v2997, %v3066
  %v3131 = vadd.f32 %v2998, %v3067
  %v3132 = vadd.f32 %v2999, %v3068
  %v3133 = vadd.f32 %v3000, %v3069
  %v3134 = vadd.f32 %v3001, %v3070
  %v3135 = vadd.f32 %v3002, %v3071
  %v3136 = vadd.f32 %v3003, %v3072
  %v3137 = vadd.f32 %v3004, %v3073
  %v3138 = vadd.f32 %v3005, %v3074
  %v3139 = vadd.f32 %v3006, %v3075
  %v3140 = vadd.f32 %v3007, %v3076
  %v3141 = vadd.f32 %v3008, %v3077
  %v3142 = vadd.f32 %v3009, %v3078
  %v3143 = vadd.f32 %v3010, %v3079
  %v3144 = vadd.f32 %v3011, %v3080
  %v3145 = vadd.f32 %v3012, %v3081
  %v3146 = vadd.f32 %v3013, %v3082
  %v3147 = vadd.f32 %v3014, %v3083
  %v3148 = vadd.f32 %v3015, %v3084
  %v3149 = vadd.f32 %v3016, %v3085
  %v3150 = vadd.f32 %v3017, %v3086
  %v3151 = vadd.f32 %v3018, %v3087
  %v3152 = vadd.f32 %v3019, %v3088
  %v3153 = vadd.f32 %v2408, %v3089
  %v3154 = vadd.f32 %v2409, %v3090
  %v3155 = vadd.f32 %v2410, %v3091
  %v3156 = vadd.f32 %v2411, %v3092
  %v3157 = vadd.f32 %v2412, %v3093
  %v3158 = vadd.f32 %v2413, %v3094
  %v3159 = vadd.f32 %v2414, %v3095
  %v3160 = vadd.f32 %v2415, %v3096
  %v3161 = vadd.f32 %v2416, %v3097
  %v3162 = vadd.f32 %v2417, %v3098
  %v3163 = vadd.f32 %v2418, %v3099
  %v3164 = vadd.f32 %v2419, %v3100
  %v3165 = vadd.f32 %v2420, %v3101
  %v3166 = vadd.f32 %v2421, %v3102
  %v3167 = vadd.f32 %v2422, %v3103
  %v3168 = vadd.f32 %v2423, %v3104
  %v3169 = vadd.f32 %v2424, %v3105
  %v3170 = vadd.f32 %v2425, %v3106
  %v3171 = vadd.f32 %v2426, %v3107
  %v3172 = vadd.f32 %v2427, %v3108
  %v3173 = vadd.f32 %v2428, %v3109
  %v3174 = vadd.f32 %v2429, %v3110
  %v3175 = vadd.f32 %v2430, %v3111
  %v3176 = vadd.f32 %v2431, %v3112
  %v3177 = vadd.f32 %v2432, %v3113
  %v3178 = vadd.f32 %v2433, %v3114
  %v3179 = vadd.f32 %v2434, %v3115
  %v3180 = vadd.f32 %v2435, %v3116
  %v3181 = vadd.f32 %v2436, %v3117
  %v3182 = vadd.f32 %v2437, %v3118
  %v3183 = vadd.f32 %v2438, %v3119
  %v3184 = vadd.f32 %v2439, %v3120
  %v3185 = vadd.f32 %v2440, %v3121
  %v3186 = vadd.f32 %v2441, %v3122
  %v3187 = vadd.f32 %v2442, %v3123
  %v3188 = vadd.f32 %v2443, %v3124
  %v3189 = vadd.f32 %v2444, %v3125
  %v3190 = vadd.f32 %v2445, %v3126
  %v3191 = vadd.f32 %v2446, %v3127
  %v3192 = vadd.f32 %v2447, %v3128
  %v3193 = vadd.f32 %v2448, %v3129
  %v3194 = vadd.f32 %v2449, %v3130
  %v3195 = vadd.f32 %v2450, %v3131
  %v3196 = vadd.f32 %v2451, %v3132
  %v3197 = vadd.f32 %v2452, %v3133
  %v3198 = vadd.f32 %v2453, %v3134
  %v3199 = vadd.f32 %v2454, %v3135
  %v3200 = vadd.f32 %v2455, %v3136
  %v3201 = vadd.f32 %v2456, %v3137
  %v3202 = vadd.f32 %v2457, %v3138
  %v3203 = vadd.f32 %v2458, %v3139
  %v3204 = vadd.f32 %v2459, %v3140
  %v3205 = vadd.f32 %v2460, %v3141
  %v3206 = vadd.f32 %v2461, %v3142
  %v3207 = vadd.f32 %v2462, %v3143
  %v3208 = vadd.f32 %v2463, %v3144
  %v3209 = vadd.f32 %v2464, %v3145
  %v3210 = vadd.f32 %v2465, %v3146
  %v3211 = vadd.f32 %v2466, %v3147
  %v3212 = vadd.f32 %v2467, %v3148
  %v3213 = vadd.f32 %v2468, %v3149
  %v3214 = vadd.f32 %v2469, %v3150
  %v3215 = vadd.f32 %v2470, %v3151
  %v3216 = vadd.f32 %v2471, %v3152
  %v3217 = vld [vmem:[#allocation2 + $0x4] sm:$0xff]
  %v3218 = vld [vmem:[#allocation2 + $0xc] sm:$0xff]
  %v3219 = vld [vmem:[#allocation2 + $0x1c] sm:$0xff]
  %v3220 = vld [vmem:[#allocation2 + $0x24] sm:$0xff]
  %v3221 = vld [vmem:[#allocation2 + $0x34] sm:$0xff]
  %v3222 = vld [vmem:[#allocation2 + $0x3c] sm:$0xff]
  %v3223 = vld [vmem:[#allocation2 + $0x4c] sm:$0xff]
  %v3224 = vld [vmem:[#allocation2 + $0x54] sm:$0xff]
  %v3225 = vld [vmem:[#allocation2 + $0x64] sm:$0xff]
  %v3226 = vld [vmem:[#allocation2 + $0x6c] sm:$0xff]
  %v3227 = vld [vmem:[#allocation2 + $0x7c] sm:$0xff]
  %v3228 = vld [vmem:[#allocation2 + $0x84] sm:$0xff]
  %v3229 = vld [vmem:[#allocation2 + $0x94] sm:$0xff]
  %v3230 = vld [vmem:[#allocation2 + $0x9c] sm:$0xff]
  %v3231 = vld [vmem:[#allocation2 + $0xac] sm:$0xff]
  %v3232 = vld [vmem:[#allocation2 + $0xb4] sm:$0xff]
  %v3233 = vld [vmem:[#allocation2 + $0xc4] sm:$0xff]
  %v3234 = vld [vmem:[#allocation2 + $0xcc] sm:$0xff]
  %v3235 = vld [vmem:[#allocation2 + $0xdc] sm:$0xff]
  %v3236 = vld [vmem:[#allocation2 + $0xe4] sm:$0xff]
  %v3237 = vld [vmem:[#allocation2 + $0xf4] sm:$0xff]
  %v3238 = vld [vmem:[#allocation2 + $0xfc] sm:$0xff]
  %v3239 = vld [vmem:[#allocation2 + $0x10c] sm:$0xff]
  %v3240 = vld [vmem:[#allocation2 + $0x114] sm:$0xff]
  %v3241 = vld [vmem:[#allocation2 + $0x124] sm:$0xff]
  %v3242 = vld [vmem:[#allocation2 + $0x12c] sm:$0xff]
  %v3243 = vld [vmem:[#allocation2 + $0x13c] sm:$0xff]
  %v3244 = vld [vmem:[#allocation2 + $0x144] sm:$0xff]
  %v3245 = vld [vmem:[#allocation2 + $0x154] sm:$0xff]
  %v3246 = vld [vmem:[#allocation2 + $0x15c] sm:$0xff]
  %v3247 = vld [vmem:[#allocation2 + $0x16c] sm:$0xff]
  %v3248 = vld [vmem:[#allocation2 + $0x174] sm:$0xff]
  %v3249 = vld [vmem:[#allocation2 + $0x184] sm:$0xff]
  %v3250 = vld [vmem:[#allocation2 + $0x18c] sm:$0xff]
  %v3251 = vld [vmem:[#allocation2 + $0x19c] sm:$0xff]
  %v3252 = vld [vmem:[#allocation2 + $0x1a4] sm:$0xff]
  %v3253 = vld [vmem:[#allocation2 + $0x1b4] sm:$0xff]
  %v3254 = vld [vmem:[#allocation2 + $0x1bc] sm:$0xff]
  %v3255 = vld [vmem:[#allocation2 + $0x1cc] sm:$0xff]
  %v3256 = vld [vmem:[#allocation2 + $0x1d4] sm:$0xff]
  %v3257 = vld [vmem:[#allocation2 + $0x1e4] sm:$0xff]
  %v3258 = vld [vmem:[#allocation2 + $0x1ec] sm:$0xff]
  %v3259 = vld [vmem:[#allocation2 + $0x1fc] sm:$0xff]
  %v3260 = vld [vmem:[#allocation2 + $0x204] sm:$0xff]
  %v3261 = vld [vmem:[#allocation2 + $0x214] sm:$0xff]
  %v3262 = vld [vmem:[#allocation2 + $0x21c] sm:$0xff]
  %v3263 = vld [vmem:[#allocation2 + $0x22c] sm:$0xff]
  %v3264 = vld [vmem:[#allocation2 + $0x234] sm:$0xff]
  %v3265 = vld [vmem:[#allocation2 + $0x244] sm:$0xff]
  %v3266 = vld [vmem:[#allocation2 + $0x24c] sm:$0xff]
  %v3267 = vld [vmem:[#allocation2 + $0x25c] sm:$0xff]
  %v3268 = vld [vmem:[#allocation2 + $0x264] sm:$0xff]
  %v3269 = vld [vmem:[#allocation2 + $0x274] sm:$0xff]
  %v3270 = vld [vmem:[#allocation2 + $0x27c] sm:$0xff]
  %v3271 = vld [vmem:[#allocation2 + $0x28c] sm:$0xff]
  %v3272 = vld [vmem:[#allocation2 + $0x294] sm:$0xff]
  %v3273 = vld [vmem:[#allocation2 + $0x2a4] sm:$0xff]
  %v3274 = vld [vmem:[#allocation2 + $0x2ac] sm:$0xff]
  %v3275 = vld [vmem:[#allocation2 + $0x2bc] sm:$0xff]
  %v3276 = vld [vmem:[#allocation2 + $0x2c4] sm:$0xff]
  %v3277 = vld [vmem:[#allocation2 + $0x2d4] sm:$0xff]
  %v3278 = vld [vmem:[#allocation2 + $0x2dc] sm:$0xff]
  %v3279 = vld [vmem:[#allocation2 + $0x2ec] sm:$0xff]
  %v3280 = vld [vmem:[#allocation2 + $0x2f4] sm:$0xff]
  %v3281 = vld [vmem:[#allocation2 + $0x304] sm:$0xff]
  %v3282 = vld [vmem:[#allocation2 + $0x30c] sm:$0xff]
  %v3283 = vld [vmem:[#allocation2 + $0x31c] sm:$0xff]
  %v3284 = vld [vmem:[#allocation2 + $0x324] sm:$0xff]
  %v3285 = vld [vmem:[#allocation2 + $0x334] sm:$0xff]
  %v3286 = vld [vmem:[#allocation2 + $0x33c] sm:$0xff]
  %v3287 = vld [vmem:[#allocation2 + $0x34c] sm:$0xff]
  %v3288 = vld [vmem:[#allocation2 + $0x354] sm:$0xff]
  %v3289 = vld [vmem:[#allocation2 + $0x364] sm:$0xff]
  %v3290 = vld [vmem:[#allocation2 + $0x36c] sm:$0xff]
  %v3291 = vld [vmem:[#allocation2 + $0x37c] sm:$0xff]
  %v3292 = vld [vmem:[#allocation2 + $0x384] sm:$0xff]
  %v3293 = vld [vmem:[#allocation2 + $0x394] sm:$0xff]
  %v3294 = vld [vmem:[#allocation2 + $0x39c] sm:$0xff]
  %v3295 = vld [vmem:[#allocation2 + $0x3ac] sm:$0xff]
  %v3296 = vld [vmem:[#allocation2 + $0x3b4] sm:$0xff]
  %s3297 = scalar_lea.vmem %s1, 4
  %v3298 = vld [vmem:[%s3297] sm:$0x1]
  %v3300 = vperm.slane %v3298, 0
  %v3302 = vmul.f32 %v3217, %v3300
  %v3303 = vmul.f32 %v3218, %v3300
  %v3304 = vmul.f32 %v3219, %v3300
  %v3305 = vmul.f32 %v3220, %v3300
  %v3306 = vmul.f32 %v3221, %v3300
  %v3307 = vmul.f32 %v3222, %v3300
  %v3308 = vmul.f32 %v3223, %v3300
  %v3309 = vmul.f32 %v3224, %v3300
  %v3310 = vmul.f32 %v3225, %v3300
  %v3311 = vmul.f32 %v3226, %v3300
  %v3312 = vmul.f32 %v3227, %v3300
  %v3313 = vmul.f32 %v3228, %v3300
  %v3314 = vmul.f32 %v3229, %v3300
  %v3315 = vmul.f32 %v3230, %v3300
  %v3316 = vmul.f32 %v3231, %v3300
  %v3317 = vmul.f32 %v3232, %v3300
  %v3318 = vmul.f32 %v3233, %v3300
  %v3319 = vmul.f32 %v3234, %v3300
  %v3320 = vmul.f32 %v3235, %v3300
  %v3321 = vmul.f32 %v3236, %v3300
  %v3322 = vmul.f32 %v3237, %v3300
  %v3323 = vmul.f32 %v3238, %v3300
  %v3324 = vmul.f32 %v3239, %v3300
  %v3325 = vmul.f32 %v3240, %v3300
  %v3326 = vmul.f32 %v3241, %v3300
  %v3327 = vmul.f32 %v3242, %v3300
  %v3328 = vmul.f32 %v3243, %v3300
  %v3329 = vmul.f32 %v3244, %v3300
  %v3330 = vmul.f32 %v3245, %v3300
  %v3331 = vmul.f32 %v3246, %v3300
  %v3332 = vmul.f32 %v3247, %v3300
  %v3333 = vmul.f32 %v3248, %v3300
  %v3334 = vmul.f32 %v3257, %v3300
  %v3335 = vmul.f32 %v3258, %v3300
  %v3336 = vmul.f32 %v3259, %v3300
  %v3337 = vmul.f32 %v3260, %v3300
  %v3338 = vmul.f32 %v3261, %v3300
  %v3339 = vmul.f32 %v3262, %v3300
  %v3340 = vmul.f32 %v3263, %v3300
  %v3341 = vmul.f32 %v3264, %v3300
  %v3342 = vmul.f32 %v3265, %v3300
  %v3343 = vmul.f32 %v3266, %v3300
  %v3344 = vmul.f32 %v3267, %v3300
  %v3345 = vmul.f32 %v3268, %v3300
  %v3346 = vmul.f32 %v3269, %v3300
  %v3347 = vmul.f32 %v3270, %v3300
  %v3348 = vmul.f32 %v3271, %v3300
  %v3349 = vmul.f32 %v3272, %v3300
  %v3350 = vmul.f32 %v3273, %v3300
  %v3351 = vmul.f32 %v3274, %v3300
  %v3352 = vmul.f32 %v3275, %v3300
  %v3353 = vmul.f32 %v3276, %v3300
  %v3354 = vmul.f32 %v3277, %v3300
  %v3355 = vmul.f32 %v3278, %v3300
  %v3356 = vmul.f32 %v3279, %v3300
  %v3357 = vmul.f32 %v3280, %v3300
  %v3358 = vmul.f32 %v3281, %v3300
  %v3359 = vmul.f32 %v3282, %v3300
  %v3360 = vmul.f32 %v3283, %v3300
  %v3361 = vmul.f32 %v3284, %v3300
  %v3362 = vmul.f32 %v3285, %v3300
  %v3363 = vmul.f32 %v3286, %v3300
  %v3364 = vmul.f32 %v3287, %v3300
  %v3365 = vmul.f32 %v3288, %v3300
  %s3366 = scalar_lea.vmem %s1, 9
  %v3367 = vld [vmem:[%s3366] sm:$0x1]
  %v3369 = vperm.slane %v3367, 0
  %v3371 = vmul.f32 %v3219, %v3369
  %v3372 = vmul.f32 %v3220, %v3369
  %v3373 = vmul.f32 %v3221, %v3369
  %v3374 = vmul.f32 %v3222, %v3369
  %v3375 = vmul.f32 %v3223, %v3369
  %v3376 = vmul.f32 %v3224, %v3369
  %v3377 = vmul.f32 %v3225, %v3369
  %v3378 = vmul.f32 %v3226, %v3369
  %v3379 = vmul.f32 %v3227, %v3369
  %v3380 = vmul.f32 %v3228, %v3369
  %v3381 = vmul.f32 %v3229, %v3369
  %v3382 = vmul.f32 %v3230, %v3369
  %v3383 = vmul.f32 %v3231, %v3369
  %v3384 = vmul.f32 %v3232, %v3369
  %v3385 = vmul.f32 %v3233, %v3369
  %v3386 = vmul.f32 %v3234, %v3369
  %v3387 = vmul.f32 %v3235, %v3369
  %v3388 = vmul.f32 %v3236, %v3369
  %v3389 = vmul.f32 %v3237, %v3369
  %v3390 = vmul.f32 %v3238, %v3369
  %v3391 = vmul.f32 %v3239, %v3369
  %v3392 = vmul.f32 %v3240, %v3369
  %v3393 = vmul.f32 %v3241, %v3369
  %v3394 = vmul.f32 %v3242, %v3369
  %v3395 = vmul.f32 %v3243, %v3369
  %v3396 = vmul.f32 %v3244, %v3369
  %v3397 = vmul.f32 %v3245, %v3369
  %v3398 = vmul.f32 %v3246, %v3369
  %v3399 = vmul.f32 %v3247, %v3369
  %v3400 = vmul.f32 %v3248, %v3369
  %v3401 = vmul.f32 %v3249, %v3369
  %v3402 = vmul.f32 %v3250, %v3369
  %v3403 = vmul.f32 %v3259, %v3369
  %v3404 = vmul.f32 %v3260, %v3369
  %v3405 = vmul.f32 %v3261, %v3369
  %v3406 = vmul.f32 %v3262, %v3369
  %v3407 = vmul.f32 %v3263, %v3369
  %v3408 = vmul.f32 %v3264, %v3369
  %v3409 = vmul.f32 %v3265, %v3369
  %v3410 = vmul.f32 %v3266, %v3369
  %v3411 = vmul.f32 %v3267, %v3369
  %v3412 = vmul.f32 %v3268, %v3369
  %v3413 = vmul.f32 %v3269, %v3369
  %v3414 = vmul.f32 %v3270, %v3369
  %v3415 = vmul.f32 %v3271, %v3369
  %v3416 = vmul.f32 %v3272, %v3369
  %v3417 = vmul.f32 %v3273, %v3369
  %v3418 = vmul.f32 %v3274, %v3369
  %v3419 = vmul.f32 %v3275, %v3369
  %v3420 = vmul.f32 %v3276, %v3369
  %v3421 = vmul.f32 %v3277, %v3369
  %v3422 = vmul.f32 %v3278, %v3369
  %v3423 = vmul.f32 %v3279, %v3369
  %v3424 = vmul.f32 %v3280, %v3369
  %v3425 = vmul.f32 %v3281, %v3369
  %v3426 = vmul.f32 %v3282, %v3369
  %v3427 = vmul.f32 %v3283, %v3369
  %v3428 = vmul.f32 %v3284, %v3369
  %v3429 = vmul.f32 %v3285, %v3369
  %v3430 = vmul.f32 %v3286, %v3369
  %v3431 = vmul.f32 %v3287, %v3369
  %v3432 = vmul.f32 %v3288, %v3369
  %v3433 = vmul.f32 %v3289, %v3369
  %v3434 = vmul.f32 %v3290, %v3369
  %v3435 = vadd.f32 %v3302, %v3371
  %v3436 = vadd.f32 %v3303, %v3372
  %v3437 = vadd.f32 %v3304, %v3373
  %v3438 = vadd.f32 %v3305, %v3374
  %v3439 = vadd.f32 %v3306, %v3375
  %v3440 = vadd.f32 %v3307, %v3376
  %v3441 = vadd.f32 %v3308, %v3377
  %v3442 = vadd.f32 %v3309, %v3378
  %v3443 = vadd.f32 %v3310, %v3379
  %v3444 = vadd.f32 %v3311, %v3380
  %v3445 = vadd.f32 %v3312, %v3381
  %v3446 = vadd.f32 %v3313, %v3382
  %v3447 = vadd.f32 %v3314, %v3383
  %v3448 = vadd.f32 %v3315, %v3384
  %v3449 = vadd.f32 %v3316, %v3385
  %v3450 = vadd.f32 %v3317, %v3386
  %v3451 = vadd.f32 %v3318, %v3387
  %v3452 = vadd.f32 %v3319, %v3388
  %v3453 = vadd.f32 %v3320, %v3389
  %v3454 = vadd.f32 %v3321, %v3390
  %v3455 = vadd.f32 %v3322, %v3391
  %v3456 = vadd.f32 %v3323, %v3392
  %v3457 = vadd.f32 %v3324, %v3393
  %v3458 = vadd.f32 %v3325, %v3394
  %v3459 = vadd.f32 %v3326, %v3395
  %v3460 = vadd.f32 %v3327, %v3396
  %v3461 = vadd.f32 %v3328, %v3397
  %v3462 = vadd.f32 %v3329, %v3398
  %v3463 = vadd.f32 %v3330, %v3399
  %v3464 = vadd.f32 %v3331, %v3400
  %v3465 = vadd.f32 %v3332, %v3401
  %v3466 = vadd.f32 %v3333, %v3402
  %v3467 = vadd.f32 %v3334, %v3403
  %v3468 = vadd.f32 %v3335, %v3404
  %v3469 = vadd.f32 %v3336, %v3405
  %v3470 = vadd.f32 %v3337, %v3406
  %v3471 = vadd.f32 %v3338, %v3407
  %v3472 = vadd.f32 %v3339, %v3408
  %v3473 = vadd.f32 %v3340, %v3409
  %v3474 = vadd.f32 %v3341, %v3410
  %v3475 = vadd.f32 %v3342, %v3411
  %v3476 = vadd.f32 %v3343, %v3412
  %v3477 = vadd.f32 %v3344, %v3413
  %v3478 = vadd.f32 %v3345, %v3414
  %v3479 = vadd.f32 %v3346, %v3415
  %v3480 = vadd.f32 %v3347, %v3416
  %v3481 = vadd.f32 %v3348, %v3417
  %v3482 = vadd.f32 %v3349, %v3418
  %v3483 = vadd.f32 %v3350, %v3419
  %v3484 = vadd.f32 %v3351, %v3420
  %v3485 = vadd.f32 %v3352, %v3421
  %v3486 = vadd.f32 %v3353, %v3422
  %v3487 = vadd.f32 %v3354, %v3423
  %v3488 = vadd.f32 %v3355, %v3424
  %v3489 = vadd.f32 %v3356, %v3425
  %v3490 = vadd.f32 %v3357, %v3426
  %v3491 = vadd.f32 %v3358, %v3427
  %v3492 = vadd.f32 %v3359, %v3428
  %v3493 = vadd.f32 %v3360, %v3429
  %v3494 = vadd.f32 %v3361, %v3430
  %v3495 = vadd.f32 %v3362, %v3431
  %v3496 = vadd.f32 %v3363, %v3432
  %v3497 = vadd.f32 %v3364, %v3433
  %v3498 = vadd.f32 %v3365, %v3434
  %s3499 = scalar_lea.vmem %s1, 14
  %v3500 = vld [vmem:[%s3499] sm:$0x1]
  %v3502 = vperm.slane %v3500, 0
  %v3504 = vmul.f32 %v3221, %v3502
  %v3505 = vmul.f32 %v3222, %v3502
  %v3506 = vmul.f32 %v3223, %v3502
  %v3507 = vmul.f32 %v3224, %v3502
  %v3508 = vmul.f32 %v3225, %v3502
  %v3509 = vmul.f32 %v3226, %v3502
  %v3510 = vmul.f32 %v3227, %v3502
  %v3511 = vmul.f32 %v3228, %v3502
  %v3512 = vmul.f32 %v3229, %v3502
  %v3513 = vmul.f32 %v3230, %v3502
  %v3514 = vmul.f32 %v3231, %v3502
  %v3515 = vmul.f32 %v3232, %v3502
  %v3516 = vmul.f32 %v3233, %v3502
  %v3517 = vmul.f32 %v3234, %v3502
  %v3518 = vmul.f32 %v3235, %v3502
  %v3519 = vmul.f32 %v3236, %v3502
  %v3520 = vmul.f32 %v3237, %v3502
  %v3521 = vmul.f32 %v3238, %v3502
  %v3522 = vmul.f32 %v3239, %v3502
  %v3523 = vmul.f32 %v3240, %v3502
  %v3524 = vmul.f32 %v3241, %v3502
  %v3525 = vmul.f32 %v3242, %v3502
  %v3526 = vmul.f32 %v3243, %v3502
  %v3527 = vmul.f32 %v3244, %v3502
  %v3528 = vmul.f32 %v3245, %v3502
  %v3529 = vmul.f32 %v3246, %v3502
  %v3530 = vmul.f32 %v3247, %v3502
  %v3531 = vmul.f32 %v3248, %v3502
  %v3532 = vmul.f32 %v3249, %v3502
  %v3533 = vmul.f32 %v3250, %v3502
  %v3534 = vmul.f32 %v3251, %v3502
  %v3535 = vmul.f32 %v3252, %v3502
  %v3536 = vmul.f32 %v3261, %v3502
  %v3537 = vmul.f32 %v3262, %v3502
  %v3538 = vmul.f32 %v3263, %v3502
  %v3539 = vmul.f32 %v3264, %v3502
  %v3540 = vmul.f32 %v3265, %v3502
  %v3541 = vmul.f32 %v3266, %v3502
  %v3542 = vmul.f32 %v3267, %v3502
  %v3543 = vmul.f32 %v3268, %v3502
  %v3544 = vmul.f32 %v3269, %v3502
  %v3545 = vmul.f32 %v3270, %v3502
  %v3546 = vmul.f32 %v3271, %v3502
  %v3547 = vmul.f32 %v3272, %v3502
  %v3548 = vmul.f32 %v3273, %v3502
  %v3549 = vmul.f32 %v3274, %v3502
  %v3550 = vmul.f32 %v3275, %v3502
  %v3551 = vmul.f32 %v3276, %v3502
  %v3552 = vmul.f32 %v3277, %v3502
  %v3553 = vmul.f32 %v3278, %v3502
  %v3554 = vmul.f32 %v3279, %v3502
  %v3555 = vmul.f32 %v3280, %v3502
  %v3556 = vmul.f32 %v3281, %v3502
  %v3557 = vmul.f32 %v3282, %v3502
  %v3558 = vmul.f32 %v3283, %v3502
  %v3559 = vmul.f32 %v3284, %v3502
  %v3560 = vmul.f32 %v3285, %v3502
  %v3561 = vmul.f32 %v3286, %v3502
  %v3562 = vmul.f32 %v3287, %v3502
  %v3563 = vmul.f32 %v3288, %v3502
  %v3564 = vmul.f32 %v3289, %v3502
  %v3565 = vmul.f32 %v3290, %v3502
  %v3566 = vmul.f32 %v3291, %v3502
  %v3567 = vmul.f32 %v3292, %v3502
  %v3568 = vadd.f32 %v3435, %v3504
  %v3569 = vadd.f32 %v3436, %v3505
  %v3570 = vadd.f32 %v3437, %v3506
  %v3571 = vadd.f32 %v3438, %v3507
  %v3572 = vadd.f32 %v3439, %v3508
  %v3573 = vadd.f32 %v3440, %v3509
  %v3574 = vadd.f32 %v3441, %v3510
  %v3575 = vadd.f32 %v3442, %v3511
  %v3576 = vadd.f32 %v3443, %v3512
  %v3577 = vadd.f32 %v3444, %v3513
  %v3578 = vadd.f32 %v3445, %v3514
  %v3579 = vadd.f32 %v3446, %v3515
  %v3580 = vadd.f32 %v3447, %v3516
  %v3581 = vadd.f32 %v3448, %v3517
  %v3582 = vadd.f32 %v3449, %v3518
  %v3583 = vadd.f32 %v3450, %v3519
  %v3584 = vadd.f32 %v3451, %v3520
  %v3585 = vadd.f32 %v3452, %v3521
  %v3586 = vadd.f32 %v3453, %v3522
  %v3587 = vadd.f32 %v3454, %v3523
  %v3588 = vadd.f32 %v3455, %v3524
  %v3589 = vadd.f32 %v3456, %v3525
  %v3590 = vadd.f32 %v3457, %v3526
  %v3591 = vadd.f32 %v3458, %v3527
  %v3592 = vadd.f32 %v3459, %v3528
  %v3593 = vadd.f32 %v3460, %v3529
  %v3594 = vadd.f32 %v3461, %v3530
  %v3595 = vadd.f32 %v3462, %v3531
  %v3596 = vadd.f32 %v3463, %v3532
  %v3597 = vadd.f32 %v3464, %v3533
  %v3598 = vadd.f32 %v3465, %v3534
  %v3599 = vadd.f32 %v3466, %v3535
  %v3600 = vadd.f32 %v3467, %v3536
  %v3601 = vadd.f32 %v3468, %v3537
  %v3602 = vadd.f32 %v3469, %v3538
  %v3603 = vadd.f32 %v3470, %v3539
  %v3604 = vadd.f32 %v3471, %v3540
  %v3605 = vadd.f32 %v3472, %v3541
  %v3606 = vadd.f32 %v3473, %v3542
  %v3607 = vadd.f32 %v3474, %v3543
  %v3608 = vadd.f32 %v3475, %v3544
  %v3609 = vadd.f32 %v3476, %v3545
  %v3610 = vadd.f32 %v3477, %v3546
  %v3611 = vadd.f32 %v3478, %v3547
  %v3612 = vadd.f32 %v3479, %v3548
  %v3613 = vadd.f32 %v3480, %v3549
  %v3614 = vadd.f32 %v3481, %v3550
  %v3615 = vadd.f32 %v3482, %v3551
  %v3616 = vadd.f32 %v3483, %v3552
  %v3617 = vadd.f32 %v3484, %v3553
  %v3618 = vadd.f32 %v3485, %v3554
  %v3619 = vadd.f32 %v3486, %v3555
  %v3620 = vadd.f32 %v3487, %v3556
  %v3621 = vadd.f32 %v3488, %v3557
  %v3622 = vadd.f32 %v3489, %v3558
  %v3623 = vadd.f32 %v3490, %v3559
  %v3624 = vadd.f32 %v3491, %v3560
  %v3625 = vadd.f32 %v3492, %v3561
  %v3626 = vadd.f32 %v3493, %v3562
  %v3627 = vadd.f32 %v3494, %v3563
  %v3628 = vadd.f32 %v3495, %v3564
  %v3629 = vadd.f32 %v3496, %v3565
  %v3630 = vadd.f32 %v3497, %v3566
  %v3631 = vadd.f32 %v3498, %v3567
  %s3632 = scalar_lea.vmem %s1, 19
  %v3633 = vld [vmem:[%s3632] sm:$0x1]
  %v3635 = vperm.slane %v3633, 0
  %v3637 = vmul.f32 %v3223, %v3635
  %v3638 = vmul.f32 %v3224, %v3635
  %v3639 = vmul.f32 %v3225, %v3635
  %v3640 = vmul.f32 %v3226, %v3635
  %v3641 = vmul.f32 %v3227, %v3635
  %v3642 = vmul.f32 %v3228, %v3635
  %v3643 = vmul.f32 %v3229, %v3635
  %v3644 = vmul.f32 %v3230, %v3635
  %v3645 = vmul.f32 %v3231, %v3635
  %v3646 = vmul.f32 %v3232, %v3635
  %v3647 = vmul.f32 %v3233, %v3635
  %v3648 = vmul.f32 %v3234, %v3635
  %v3649 = vmul.f32 %v3235, %v3635
  %v3650 = vmul.f32 %v3236, %v3635
  %v3651 = vmul.f32 %v3237, %v3635
  %v3652 = vmul.f32 %v3238, %v3635
  %v3653 = vmul.f32 %v3239, %v3635
  %v3654 = vmul.f32 %v3240, %v3635
  %v3655 = vmul.f32 %v3241, %v3635
  %v3656 = vmul.f32 %v3242, %v3635
  %v3657 = vmul.f32 %v3243, %v3635
  %v3658 = vmul.f32 %v3244, %v3635
  %v3659 = vmul.f32 %v3245, %v3635
  %v3660 = vmul.f32 %v3246, %v3635
  %v3661 = vmul.f32 %v3247, %v3635
  %v3662 = vmul.f32 %v3248, %v3635
  %v3663 = vmul.f32 %v3249, %v3635
  %v3664 = vmul.f32 %v3250, %v3635
  %v3665 = vmul.f32 %v3251, %v3635
  %v3666 = vmul.f32 %v3252, %v3635
  %v3667 = vmul.f32 %v3253, %v3635
  %v3668 = vmul.f32 %v3254, %v3635
  %v3669 = vmul.f32 %v3263, %v3635
  %v3670 = vmul.f32 %v3264, %v3635
  %v3671 = vmul.f32 %v3265, %v3635
  %v3672 = vmul.f32 %v3266, %v3635
  %v3673 = vmul.f32 %v3267, %v3635
  %v3674 = vmul.f32 %v3268, %v3635
  %v3675 = vmul.f32 %v3269, %v3635
  %v3676 = vmul.f32 %v3270, %v3635
  %v3677 = vmul.f32 %v3271, %v3635
  %v3678 = vmul.f32 %v3272, %v3635
  %v3679 = vmul.f32 %v3273, %v3635
  %v3680 = vmul.f32 %v3274, %v3635
  %v3681 = vmul.f32 %v3275, %v3635
  %v3682 = vmul.f32 %v3276, %v3635
  %v3683 = vmul.f32 %v3277, %v3635
  %v3684 = vmul.f32 %v3278, %v3635
  %v3685 = vmul.f32 %v3279, %v3635
  %v3686 = vmul.f32 %v3280, %v3635
  %v3687 = vmul.f32 %v3281, %v3635
  %v3688 = vmul.f32 %v3282, %v3635
  %v3689 = vmul.f32 %v3283, %v3635
  %v3690 = vmul.f32 %v3284, %v3635
  %v3691 = vmul.f32 %v3285, %v3635
  %v3692 = vmul.f32 %v3286, %v3635
  %v3693 = vmul.f32 %v3287, %v3635
  %v3694 = vmul.f32 %v3288, %v3635
  %v3695 = vmul.f32 %v3289, %v3635
  %v3696 = vmul.f32 %v3290, %v3635
  %v3697 = vmul.f32 %v3291, %v3635
  %v3698 = vmul.f32 %v3292, %v3635
  %v3699 = vmul.f32 %v3293, %v3635
  %v3700 = vmul.f32 %v3294, %v3635
  %v3701 = vadd.f32 %v3568, %v3637
  %v3702 = vadd.f32 %v3569, %v3638
  %v3703 = vadd.f32 %v3570, %v3639
  %v3704 = vadd.f32 %v3571, %v3640
  %v3705 = vadd.f32 %v3572, %v3641
  %v3706 = vadd.f32 %v3573, %v3642
  %v3707 = vadd.f32 %v3574, %v3643
  %v3708 = vadd.f32 %v3575, %v3644
  %v3709 = vadd.f32 %v3576, %v3645
  %v3710 = vadd.f32 %v3577, %v3646
  %v3711 = vadd.f32 %v3578, %v3647
  %v3712 = vadd.f32 %v3579, %v3648
  %v3713 = vadd.f32 %v3580, %v3649
  %v3714 = vadd.f32 %v3581, %v3650
  %v3715 = vadd.f32 %v3582, %v3651
  %v3716 = vadd.f32 %v3583, %v3652
  %v3717 = vadd.f32 %v3584, %v3653
  %v3718 = vadd.f32 %v3585, %v3654
  %v3719 = vadd.f32 %v3586, %v3655
  %v3720 = vadd.f32 %v3587, %v3656
  %v3721 = vadd.f32 %v3588, %v3657
  %v3722 = vadd.f32 %v3589, %v3658
  %v3723 = vadd.f32 %v3590, %v3659
  %v3724 = vadd.f32 %v3591, %v3660
  %v3725 = vadd.f32 %v3592, %v3661
  %v3726 = vadd.f32 %v3593, %v3662
  %v3727 = vadd.f32 %v3594, %v3663
  %v3728 = vadd.f32 %v3595, %v3664
  %v3729 = vadd.f32 %v3596, %v3665
  %v3730 = vadd.f32 %v3597, %v3666
  %v3731 = vadd.f32 %v3598, %v3667
  %v3732 = vadd.f32 %v3599, %v3668
  %v3733 = vadd.f32 %v3600, %v3669
  %v3734 = vadd.f32 %v3601, %v3670
  %v3735 = vadd.f32 %v3602, %v3671
  %v3736 = vadd.f32 %v3603, %v3672
  %v3737 = vadd.f32 %v3604, %v3673
  %v3738 = vadd.f32 %v3605, %v3674
  %v3739 = vadd.f32 %v3606, %v3675
  %v3740 = vadd.f32 %v3607, %v3676
  %v3741 = vadd.f32 %v3608, %v3677
  %v3742 = vadd.f32 %v3609, %v3678
  %v3743 = vadd.f32 %v3610, %v3679
  %v3744 = vadd.f32 %v3611, %v3680
  %v3745 = vadd.f32 %v3612, %v3681
  %v3746 = vadd.f32 %v3613, %v3682
  %v3747 = vadd.f32 %v3614, %v3683
  %v3748 = vadd.f32 %v3615, %v3684
  %v3749 = vadd.f32 %v3616, %v3685
  %v3750 = vadd.f32 %v3617, %v3686
  %v3751 = vadd.f32 %v3618, %v3687
  %v3752 = vadd.f32 %v3619, %v3688
  %v3753 = vadd.f32 %v3620, %v3689
  %v3754 = vadd.f32 %v3621, %v3690
  %v3755 = vadd.f32 %v3622, %v3691
  %v3756 = vadd.f32 %v3623, %v3692
  %v3757 = vadd.f32 %v3624, %v3693
  %v3758 = vadd.f32 %v3625, %v3694
  %v3759 = vadd.f32 %v3626, %v3695
  %v3760 = vadd.f32 %v3627, %v3696
  %v3761 = vadd.f32 %v3628, %v3697
  %v3762 = vadd.f32 %v3629, %v3698
  %v3763 = vadd.f32 %v3630, %v3699
  %v3764 = vadd.f32 %v3631, %v3700
  %s3765 = scalar_lea.vmem %s1, 24
  %v3766 = vld [vmem:[%s3765] sm:$0x1]
  %v3768 = vperm.slane %v3766, 0
  %v3770 = vmul.f32 %v3225, %v3768
  %v3771 = vmul.f32 %v3226, %v3768
  %v3772 = vmul.f32 %v3227, %v3768
  %v3773 = vmul.f32 %v3228, %v3768
  %v3774 = vmul.f32 %v3229, %v3768
  %v3775 = vmul.f32 %v3230, %v3768
  %v3776 = vmul.f32 %v3231, %v3768
  %v3777 = vmul.f32 %v3232, %v3768
  %v3778 = vmul.f32 %v3233, %v3768
  %v3779 = vmul.f32 %v3234, %v3768
  %v3780 = vmul.f32 %v3235, %v3768
  %v3781 = vmul.f32 %v3236, %v3768
  %v3782 = vmul.f32 %v3237, %v3768
  %v3783 = vmul.f32 %v3238, %v3768
  %v3784 = vmul.f32 %v3239, %v3768
  %v3785 = vmul.f32 %v3240, %v3768
  %v3786 = vmul.f32 %v3241, %v3768
  %v3787 = vmul.f32 %v3242, %v3768
  %v3788 = vmul.f32 %v3243, %v3768
  %v3789 = vmul.f32 %v3244, %v3768
  %v3790 = vmul.f32 %v3245, %v3768
  %v3791 = vmul.f32 %v3246, %v3768
  %v3792 = vmul.f32 %v3247, %v3768
  %v3793 = vmul.f32 %v3248, %v3768
  %v3794 = vmul.f32 %v3249, %v3768
  %v3795 = vmul.f32 %v3250, %v3768
  %v3796 = vmul.f32 %v3251, %v3768
  %v3797 = vmul.f32 %v3252, %v3768
  %v3798 = vmul.f32 %v3253, %v3768
  %v3799 = vmul.f32 %v3254, %v3768
  %v3800 = vmul.f32 %v3255, %v3768
  %v3801 = vmul.f32 %v3256, %v3768
  %v3802 = vmul.f32 %v3265, %v3768
  %v3803 = vmul.f32 %v3266, %v3768
  %v3804 = vmul.f32 %v3267, %v3768
  %v3805 = vmul.f32 %v3268, %v3768
  %v3806 = vmul.f32 %v3269, %v3768
  %v3807 = vmul.f32 %v3270, %v3768
  %v3808 = vmul.f32 %v3271, %v3768
  %v3809 = vmul.f32 %v3272, %v3768
  %v3810 = vmul.f32 %v3273, %v3768
  %v3811 = vmul.f32 %v3274, %v3768
  %v3812 = vmul.f32 %v3275, %v3768
  %v3813 = vmul.f32 %v3276, %v3768
  %v3814 = vmul.f32 %v3277, %v3768
  %v3815 = vmul.f32 %v3278, %v3768
  %v3816 = vmul.f32 %v3279, %v3768
  %v3817 = vmul.f32 %v3280, %v3768
  %v3818 = vmul.f32 %v3281, %v3768
  %v3819 = vmul.f32 %v3282, %v3768
  %v3820 = vmul.f32 %v3283, %v3768
  %v3821 = vmul.f32 %v3284, %v3768
  %v3822 = vmul.f32 %v3285, %v3768
  %v3823 = vmul.f32 %v3286, %v3768
  %v3824 = vmul.f32 %v3287, %v3768
  %v3825 = vmul.f32 %v3288, %v3768
  %v3826 = vmul.f32 %v3289, %v3768
  %v3827 = vmul.f32 %v3290, %v3768
  %v3828 = vmul.f32 %v3291, %v3768
  %v3829 = vmul.f32 %v3292, %v3768
  %v3830 = vmul.f32 %v3293, %v3768
  %v3831 = vmul.f32 %v3294, %v3768
  %v3832 = vmul.f32 %v3295, %v3768
  %v3833 = vmul.f32 %v3296, %v3768
  %v3834 = vadd.f32 %v3701, %v3770
  %v3835 = vadd.f32 %v3702, %v3771
  %v3836 = vadd.f32 %v3703, %v3772
  %v3837 = vadd.f32 %v3704, %v3773
  %v3838 = vadd.f32 %v3705, %v3774
  %v3839 = vadd.f32 %v3706, %v3775
  %v3840 = vadd.f32 %v3707, %v3776
  %v3841 = vadd.f32 %v3708, %v3777
  %v3842 = vadd.f32 %v3709, %v3778
  %v3843 = vadd.f32 %v3710, %v3779
  %v3844 = vadd.f32 %v3711, %v3780
  %v3845 = vadd.f32 %v3712, %v3781
  %v3846 = vadd.f32 %v3713, %v3782
  %v3847 = vadd.f32 %v3714, %v3783
  %v3848 = vadd.f32 %v3715, %v3784
  %v3849 = vadd.f32 %v3716, %v3785
  %v3850 = vadd.f32 %v3717, %v3786
  %v3851 = vadd.f32 %v3718, %v3787
  %v3852 = vadd.f32 %v3719, %v3788
  %v3853 = vadd.f32 %v3720, %v3789
  %v3854 = vadd.f32 %v3721, %v3790
  %v3855 = vadd.f32 %v3722, %v3791
  %v3856 = vadd.f32 %v3723, %v3792
  %v3857 = vadd.f32 %v3724, %v3793
  %v3858 = vadd.f32 %v3725, %v3794
  %v3859 = vadd.f32 %v3726, %v3795
  %v3860 = vadd.f32 %v3727, %v3796
  %v3861 = vadd.f32 %v3728, %v3797
  %v3862 = vadd.f32 %v3729, %v3798
  %v3863 = vadd.f32 %v3730, %v3799
  %v3864 = vadd.f32 %v3731, %v3800
  %v3865 = vadd.f32 %v3732, %v3801
  %v3866 = vadd.f32 %v3733, %v3802
  %v3867 = vadd.f32 %v3734, %v3803
  %v3868 = vadd.f32 %v3735, %v3804
  %v3869 = vadd.f32 %v3736, %v3805
  %v3870 = vadd.f32 %v3737, %v3806
  %v3871 = vadd.f32 %v3738, %v3807
  %v3872 = vadd.f32 %v3739, %v3808
  %v3873 = vadd.f32 %v3740, %v3809
  %v3874 = vadd.f32 %v3741, %v3810
  %v3875 = vadd.f32 %v3742, %v3811
  %v3876 = vadd.f32 %v3743, %v3812
  %v3877 = vadd.f32 %v3744, %v3813
  %v3878 = vadd.f32 %v3745, %v3814
  %v3879 = vadd.f32 %v3746, %v3815
  %v3880 = vadd.f32 %v3747, %v3816
  %v3881 = vadd.f32 %v3748, %v3817
  %v3882 = vadd.f32 %v3749, %v3818
  %v3883 = vadd.f32 %v3750, %v3819
  %v3884 = vadd.f32 %v3751, %v3820
  %v3885 = vadd.f32 %v3752, %v3821
  %v3886 = vadd.f32 %v3753, %v3822
  %v3887 = vadd.f32 %v3754, %v3823
  %v3888 = vadd.f32 %v3755, %v3824
  %v3889 = vadd.f32 %v3756, %v3825
  %v3890 = vadd.f32 %v3757, %v3826
  %v3891 = vadd.f32 %v3758, %v3827
  %v3892 = vadd.f32 %v3759, %v3828
  %v3893 = vadd.f32 %v3760, %v3829
  %v3894 = vadd.f32 %v3761, %v3830
  %v3895 = vadd.f32 %v3762, %v3831
  %v3896 = vadd.f32 %v3763, %v3832
  %v3897 = vadd.f32 %v3764, %v3833
  %v3898 = vadd.f32 %v3153, %v3834
  %v3899 = vadd.f32 %v3154, %v3835
  %v3900 = vadd.f32 %v3155, %v3836
  %v3901 = vadd.f32 %v3156, %v3837
  %v3902 = vadd.f32 %v3157, %v3838
  %v3903 = vadd.f32 %v3158, %v3839
  %v3904 = vadd.f32 %v3159, %v3840
  %v3905 = vadd.f32 %v3160, %v3841
  %v3906 = vadd.f32 %v3161, %v3842
  %v3907 = vadd.f32 %v3162, %v3843
  %v3908 = vadd.f32 %v3163, %v3844
  %v3909 = vadd.f32 %v3164, %v3845
  %v3910 = vadd.f32 %v3165, %v3846
  %v3911 = vadd.f32 %v3166, %v3847
  %v3912 = vadd.f32 %v3167, %v3848
  %v3913 = vadd.f32 %v3168, %v3849
  %v3914 = vadd.f32 %v3169, %v3850
  %v3915 = vadd.f32 %v3170, %v3851
  %v3916 = vadd.f32 %v3171, %v3852
  %v3917 = vadd.f32 %v3172, %v3853
  %v3918 = vadd.f32 %v3173, %v3854
  %v3919 = vadd.f32 %v3174, %v3855
  %v3920 = vadd.f32 %v3175, %v3856
  %v3921 = vadd.f32 %v3176, %v3857
  %v3922 = vadd.f32 %v3177, %v3858
  %v3923 = vadd.f32 %v3178, %v3859
  %v3924 = vadd.f32 %v3179, %v3860
  %v3925 = vadd.f32 %v3180, %v3861
  %v3926 = vadd.f32 %v3181, %v3862
  %v3927 = vadd.f32 %v3182, %v3863
  %v3928 = vadd.f32 %v3183, %v3864
  %v3929 = vadd.f32 %v3184, %v3865
  %v3930 = vadd.f32 %v3185, %v3866
  %v3931 = vadd.f32 %v3186, %v3867
  %v3932 = vadd.f32 %v3187, %v3868
  %v3933 = vadd.f32 %v3188, %v3869
  %v3934 = vadd.f32 %v3189, %v3870
  %v3935 = vadd.f32 %v3190, %v3871
  %v3936 = vadd.f32 %v3191, %v3872
  %v3937 = vadd.f32 %v3192, %v3873
  %v3938 = vadd.f32 %v3193, %v3874
  %v3939 = vadd.f32 %v3194, %v3875
  %v3940 = vadd.f32 %v3195, %v3876
  %v3941 = vadd.f32 %v3196, %v3877
  %v3942 = vadd.f32 %v3197, %v3878
  %v3943 = vadd.f32 %v3198, %v3879
  %v3944 = vadd.f32 %v3199, %v3880
  %v3945 = vadd.f32 %v3200, %v3881
  %v3946 = vadd.f32 %v3201, %v3882
  %v3947 = vadd.f32 %v3202, %v3883
  %v3948 = vadd.f32 %v3203, %v3884
  %v3949 = vadd.f32 %v3204, %v3885
  %v3950 = vadd.f32 %v3205, %v3886
  %v3951 = vadd.f32 %v3206, %v3887
  %v3952 = vadd.f32 %v3207, %v3888
  %v3953 = vadd.f32 %v3208, %v3889
  %v3954 = vadd.f32 %v3209, %v3890
  %v3955 = vadd.f32 %v3210, %v3891
  %v3956 = vadd.f32 %v3211, %v3892
  %v3957 = vadd.f32 %v3212, %v3893
  %v3958 = vadd.f32 %v3213, %v3894
  %v3959 = vadd.f32 %v3214, %v3895
  %v3960 = vadd.f32 %v3215, %v3896
  %v3961 = vadd.f32 %v3216, %v3897
  %v3962 = vsel %vm17, %v3898, 0.0
  %v3963 = vsel %vm17, %v3899, 0.0
  %v3964 = vadd.f32 %v3962, %v3963
  %v3965 = vsel %vm17, %v3900, 0.0
  %v3966 = vadd.f32 %v3964, %v3965
  %v3967 = vsel %vm17, %v3901, 0.0
  %v3968 = vadd.f32 %v3966, %v3967
  %v3969 = vsel %vm17, %v3902, 0.0
  %v3970 = vadd.f32 %v3968, %v3969
  %v3971 = vsel %vm17, %v3903, 0.0
  %v3972 = vadd.f32 %v3970, %v3971
  %v3973 = vsel %vm17, %v3904, 0.0
  %v3974 = vadd.f32 %v3972, %v3973
  %v3975 = vsel %vm17, %v3905, 0.0
  %v3976 = vadd.f32 %v3974, %v3975
  %v3977 = vsel %vm17, %v3906, 0.0
  %v3978 = vadd.f32 %v3976, %v3977
  %v3979 = vsel %vm17, %v3907, 0.0
  %v3980 = vadd.f32 %v3978, %v3979
  %v3981 = vsel %vm17, %v3908, 0.0
  %v3982 = vadd.f32 %v3980, %v3981
  %v3983 = vsel %vm17, %v3909, 0.0
  %v3984 = vadd.f32 %v3982, %v3983
  %v3985 = vsel %vm17, %v3910, 0.0
  %v3986 = vadd.f32 %v3984, %v3985
  %v3987 = vsel %vm17, %v3911, 0.0
  %v3988 = vadd.f32 %v3986, %v3987
  %v3989 = vsel %vm17, %v3912, 0.0
  %v3990 = vadd.f32 %v3988, %v3989
  %v3991 = vsel %vm17, %v3913, 0.0
  %v3992 = vadd.f32 %v3990, %v3991
  %v3993 = vsel %vm17, %v3914, 0.0
  %v3994 = vadd.f32 %v3992, %v3993
  %v3995 = vsel %vm17, %v3915, 0.0
  %v3996 = vadd.f32 %v3994, %v3995
  %v3997 = vsel %vm17, %v3916, 0.0
  %v3998 = vadd.f32 %v3996, %v3997
  %v3999 = vsel %vm17, %v3917, 0.0
  %v4000 = vadd.f32 %v3998, %v3999
  %v4001 = vsel %vm17, %v3918, 0.0
  %v4002 = vadd.f32 %v4000, %v4001
  %v4003 = vsel %vm17, %v3919, 0.0
  %v4004 = vadd.f32 %v4002, %v4003
  %v4005 = vsel %vm17, %v3920, 0.0
  %v4006 = vadd.f32 %v4004, %v4005
  %v4007 = vsel %vm17, %v3921, 0.0
  %v4008 = vadd.f32 %v4006, %v4007
  %v4009 = vsel %vm17, %v3922, 0.0
  %v4010 = vadd.f32 %v4008, %v4009
  %v4011 = vsel %vm17, %v3923, 0.0
  %v4012 = vadd.f32 %v4010, %v4011
  %v4013 = vsel %vm17, %v3924, 0.0
  %v4014 = vadd.f32 %v4012, %v4013
  %v4015 = vsel %vm17, %v3925, 0.0
  %v4016 = vadd.f32 %v4014, %v4015
  %v4017 = vsel %vm17, %v3926, 0.0
  %v4018 = vadd.f32 %v4016, %v4017
  %v4019 = vsel %vm17, %v3927, 0.0
  %v4020 = vadd.f32 %v4018, %v4019
  %v4021 = vsel %vm17, %v3928, 0.0
  %v4022 = vadd.f32 %v4020, %v4021
  %v4023 = vsel %vm17, %v3929, 0.0
  %v4024 = vadd.f32 %v4022, %v4023
  %v4025 = vsel %vm17, %v3930, 0.0
  %v4026 = vadd.f32 %v4024, %v4025
  %v4027 = vsel %vm17, %v3931, 0.0
  %v4028 = vadd.f32 %v4026, %v4027
  %v4029 = vsel %vm17, %v3932, 0.0
  %v4030 = vadd.f32 %v4028, %v4029
  %v4031 = vsel %vm17, %v3933, 0.0
  %v4032 = vadd.f32 %v4030, %v4031
  %v4033 = vsel %vm17, %v3934, 0.0
  %v4034 = vadd.f32 %v4032, %v4033
  %v4035 = vsel %vm17, %v3935, 0.0
  %v4036 = vadd.f32 %v4034, %v4035
  %v4037 = vsel %vm17, %v3936, 0.0
  %v4038 = vadd.f32 %v4036, %v4037
  %v4039 = vsel %vm17, %v3937, 0.0
  %v4040 = vadd.f32 %v4038, %v4039
  %v4041 = vsel %vm17, %v3938, 0.0
  %v4042 = vadd.f32 %v4040, %v4041
  %v4043 = vsel %vm17, %v3939, 0.0
  %v4044 = vadd.f32 %v4042, %v4043
  %v4045 = vsel %vm17, %v3940, 0.0
  %v4046 = vadd.f32 %v4044, %v4045
  %v4047 = vsel %vm17, %v3941, 0.0
  %v4048 = vadd.f32 %v4046, %v4047
  %v4049 = vsel %vm17, %v3942, 0.0
  %v4050 = vadd.f32 %v4048, %v4049
  %v4051 = vsel %vm17, %v3943, 0.0
  %v4052 = vadd.f32 %v4050, %v4051
  %v4053 = vsel %vm17, %v3944, 0.0
  %v4054 = vadd.f32 %v4052, %v4053
  %v4055 = vsel %vm17, %v3945, 0.0
  %v4056 = vadd.f32 %v4054, %v4055
  %v4057 = vsel %vm17, %v3946, 0.0
  %v4058 = vadd.f32 %v4056, %v4057
  %v4059 = vsel %vm17, %v3947, 0.0
  %v4060 = vadd.f32 %v4058, %v4059
  %v4061 = vsel %vm17, %v3948, 0.0
  %v4062 = vadd.f32 %v4060, %v4061
  %v4063 = vsel %vm17, %v3949, 0.0
  %v4064 = vadd.f32 %v4062, %v4063
  %v4065 = vsel %vm17, %v3950, 0.0
  %v4066 = vadd.f32 %v4064, %v4065
  %v4067 = vsel %vm17, %v3951, 0.0
  %v4068 = vadd.f32 %v4066, %v4067
  %v4069 = vsel %vm17, %v3952, 0.0
  %v4070 = vadd.f32 %v4068, %v4069
  %v4071 = vsel %vm17, %v3953, 0.0
  %v4072 = vadd.f32 %v4070, %v4071
  %v4073 = vsel %vm17, %v3954, 0.0
  %v4074 = vadd.f32 %v4072, %v4073
  %v4075 = vsel %vm17, %v3955, 0.0
  %v4076 = vadd.f32 %v4074, %v4075
  %v4077 = vsel %vm17, %v3956, 0.0
  %v4078 = vadd.f32 %v4076, %v4077
  %v4079 = vsel %vm17, %v3957, 0.0
  %v4080 = vadd.f32 %v4078, %v4079
  %v4081 = vsel %vm17, %v3958, 0.0
  %v4082 = vadd.f32 %v4080, %v4081
  %v4083 = vsel %vm17, %v3959, 0.0
  %v4084 = vadd.f32 %v4082, %v4083
  %v4085 = vsel %vm17, %v3960, 0.0
  %v4086 = vadd.f32 %v4084, %v4085
  %v4087 = vsel %vm17, %v3961, 0.0
  %v4088 = vadd.f32 %v4086, %v4087
  %v4089 = vrot.slane %v4088, 4
  %v4090 = vadd.f32 %v4088, %v4089
  %v4091 = vrot.slane %v4090, 2
  %v4092 = vadd.f32 %v4090, %v4091
  %v4093 = vrot.slane %v4092, 1
  %v4094 = vadd.f32 %v4092, %v4093
  %v4095 = vmul.f32 %v4094, 0.001953125
  %v4096 = vsub.f32 %v3898, %v4095
  %v4097 = vsub.f32 %v3899, %v4095
  %v4098 = vsub.f32 %v3900, %v4095
  %v4099 = vsub.f32 %v3901, %v4095
  %v4100 = vsub.f32 %v3902, %v4095
  %v4101 = vsub.f32 %v3903, %v4095
  %v4102 = vsub.f32 %v3904, %v4095
  %v4103 = vsub.f32 %v3905, %v4095
  %v4104 = vsub.f32 %v3906, %v4095
  %v4105 = vsub.f32 %v3907, %v4095
  %v4106 = vsub.f32 %v3908, %v4095
  %v4107 = vsub.f32 %v3909, %v4095
  %v4108 = vsub.f32 %v3910, %v4095
  %v4109 = vsub.f32 %v3911, %v4095
  %v4110 = vsub.f32 %v3912, %v4095
  %v4111 = vsub.f32 %v3913, %v4095
  %v4112 = vsub.f32 %v3914, %v4095
  %v4113 = vsub.f32 %v3915, %v4095
  %v4114 = vsub.f32 %v3916, %v4095
  %v4115 = vsub.f32 %v3917, %v4095
  %v4116 = vsub.f32 %v3918, %v4095
  %v4117 = vsub.f32 %v3919, %v4095
  %v4118 = vsub.f32 %v3920, %v4095
  %v4119 = vsub.f32 %v3921, %v4095
  %v4120 = vsub.f32 %v3922, %v4095
  %v4121 = vsub.f32 %v3923, %v4095
  %v4122 = vsub.f32 %v3924, %v4095
  %v4123 = vsub.f32 %v3925, %v4095
  %v4124 = vsub.f32 %v3926, %v4095
  %v4125 = vsub.f32 %v3927, %v4095
  %v4126 = vsub.f32 %v3928, %v4095
  %v4127 = vsub.f32 %v3929, %v4095
  %v4128 = vsub.f32 %v3930, %v4095
  %v4129 = vsub.f32 %v3931, %v4095
  %v4130 = vsub.f32 %v3932, %v4095
  %v4131 = vsub.f32 %v3933, %v4095
  %v4132 = vsub.f32 %v3934, %v4095
  %v4133 = vsub.f32 %v3935, %v4095
  %v4134 = vsub.f32 %v3936, %v4095
  %v4135 = vsub.f32 %v3937, %v4095
  %v4136 = vsub.f32 %v3938, %v4095
  %v4137 = vsub.f32 %v3939, %v4095
  %v4138 = vsub.f32 %v3940, %v4095
  %v4139 = vsub.f32 %v3941, %v4095
  %v4140 = vsub.f32 %v3942, %v4095
  %v4141 = vsub.f32 %v3943, %v4095
  %v4142 = vsub.f32 %v3944, %v4095
  %v4143 = vsub.f32 %v3945, %v4095
  %v4144 = vsub.f32 %v3946, %v4095
  %v4145 = vsub.f32 %v3947, %v4095
  %v4146 = vsub.f32 %v3948, %v4095
  %v4147 = vsub.f32 %v3949, %v4095
  %v4148 = vsub.f32 %v3950, %v4095
  %v4149 = vsub.f32 %v3951, %v4095
  %v4150 = vsub.f32 %v3952, %v4095
  %v4151 = vsub.f32 %v3953, %v4095
  %v4152 = vsub.f32 %v3954, %v4095
  %v4153 = vsub.f32 %v3955, %v4095
  %v4154 = vsub.f32 %v3956, %v4095
  %v4155 = vsub.f32 %v3957, %v4095
  %v4156 = vsub.f32 %v3958, %v4095
  %v4157 = vsub.f32 %v3959, %v4095
  %v4158 = vsub.f32 %v3960, %v4095
  %v4159 = vsub.f32 %v3961, %v4095
  %v4160 = vmul.f32 %v4096, %v4096
  %v4161 = vmul.f32 %v4097, %v4097
  %v4162 = vmul.f32 %v4098, %v4098
  %v4163 = vmul.f32 %v4099, %v4099
  %v4164 = vmul.f32 %v4100, %v4100
  %v4165 = vmul.f32 %v4101, %v4101
  %v4166 = vmul.f32 %v4102, %v4102
  %v4167 = vmul.f32 %v4103, %v4103
  %v4168 = vmul.f32 %v4104, %v4104
  %v4169 = vmul.f32 %v4105, %v4105
  %v4170 = vmul.f32 %v4106, %v4106
  %v4171 = vmul.f32 %v4107, %v4107
  %v4172 = vmul.f32 %v4108, %v4108
  %v4173 = vmul.f32 %v4109, %v4109
  %v4174 = vmul.f32 %v4110, %v4110
  %v4175 = vmul.f32 %v4111, %v4111
  %v4176 = vmul.f32 %v4112, %v4112
  %v4177 = vmul.f32 %v4113, %v4113
  %v4178 = vmul.f32 %v4114, %v4114
  %v4179 = vmul.f32 %v4115, %v4115
  %v4180 = vmul.f32 %v4116, %v4116
  %v4181 = vmul.f32 %v4117, %v4117
  %v4182 = vmul.f32 %v4118, %v4118
  %v4183 = vmul.f32 %v4119, %v4119
  %v4184 = vmul.f32 %v4120, %v4120
  %v4185 = vmul.f32 %v4121, %v4121
  %v4186 = vmul.f32 %v4122, %v4122
  %v4187 = vmul.f32 %v4123, %v4123
  %v4188 = vmul.f32 %v4124, %v4124
  %v4189 = vmul.f32 %v4125, %v4125
  %v4190 = vmul.f32 %v4126, %v4126
  %v4191 = vmul.f32 %v4127, %v4127
  %v4192 = vmul.f32 %v4128, %v4128
  %v4193 = vmul.f32 %v4129, %v4129
  %v4194 = vmul.f32 %v4130, %v4130
  %v4195 = vmul.f32 %v4131, %v4131
  %v4196 = vmul.f32 %v4132, %v4132
  %v4197 = vmul.f32 %v4133, %v4133
  %v4198 = vmul.f32 %v4134, %v4134
  %v4199 = vmul.f32 %v4135, %v4135
  %v4200 = vmul.f32 %v4136, %v4136
  %v4201 = vmul.f32 %v4137, %v4137
  %v4202 = vmul.f32 %v4138, %v4138
  %v4203 = vmul.f32 %v4139, %v4139
  %v4204 = vmul.f32 %v4140, %v4140
  %v4205 = vmul.f32 %v4141, %v4141
  %v4206 = vmul.f32 %v4142, %v4142
  %v4207 = vmul.f32 %v4143, %v4143
  %v4208 = vmul.f32 %v4144, %v4144
  %v4209 = vmul.f32 %v4145, %v4145
  %v4210 = vmul.f32 %v4146, %v4146
  %v4211 = vmul.f32 %v4147, %v4147
  %v4212 = vmul.f32 %v4148, %v4148
  %v4213 = vmul.f32 %v4149, %v4149
  %v4214 = vmul.f32 %v4150, %v4150
  %v4215 = vmul.f32 %v4151, %v4151
  %v4216 = vmul.f32 %v4152, %v4152
  %v4217 = vmul.f32 %v4153, %v4153
  %v4218 = vmul.f32 %v4154, %v4154
  %v4219 = vmul.f32 %v4155, %v4155
  %v4220 = vmul.f32 %v4156, %v4156
  %v4221 = vmul.f32 %v4157, %v4157
  %v4222 = vmul.f32 %v4158, %v4158
  %v4223 = vmul.f32 %v4159, %v4159
  %v4224 = vsel %vm17, %v4160, 0.0
  %v4225 = vsel %vm17, %v4161, 0.0
  %v4226 = vadd.f32 %v4224, %v4225
  %v4227 = vsel %vm17, %v4162, 0.0
  %v4228 = vadd.f32 %v4226, %v4227
  %v4229 = vsel %vm17, %v4163, 0.0
  %v4230 = vadd.f32 %v4228, %v4229
  %v4231 = vsel %vm17, %v4164, 0.0
  %v4232 = vadd.f32 %v4230, %v4231
  %v4233 = vsel %vm17, %v4165, 0.0
  %v4234 = vadd.f32 %v4232, %v4233
  %v4235 = vsel %vm17, %v4166, 0.0
  %v4236 = vadd.f32 %v4234, %v4235
  %v4237 = vsel %vm17, %v4167, 0.0
  %v4238 = vadd.f32 %v4236, %v4237
  %v4239 = vsel %vm17, %v4168, 0.0
  %v4240 = vadd.f32 %v4238, %v4239
  %v4241 = vsel %vm17, %v4169, 0.0
  %v4242 = vadd.f32 %v4240, %v4241
  %v4243 = vsel %vm17, %v4170, 0.0
  %v4244 = vadd.f32 %v4242, %v4243
  %v4245 = vsel %vm17, %v4171, 0.0
  %v4246 = vadd.f32 %v4244, %v4245
  %v4247 = vsel %vm17, %v4172, 0.0
  %v4248 = vadd.f32 %v4246, %v4247
  %v4249 = vsel %vm17, %v4173, 0.0
  %v4250 = vadd.f32 %v4248, %v4249
  %v4251 = vsel %vm17, %v4174, 0.0
  %v4252 = vadd.f32 %v4250, %v4251
  %v4253 = vsel %vm17, %v4175, 0.0
  %v4254 = vadd.f32 %v4252, %v4253
  %v4255 = vsel %vm17, %v4176, 0.0
  %v4256 = vadd.f32 %v4254, %v4255
  %v4257 = vsel %vm17, %v4177, 0.0
  %v4258 = vadd.f32 %v4256, %v4257
  %v4259 = vsel %vm17, %v4178, 0.0
  %v4260 = vadd.f32 %v4258, %v4259
  %v4261 = vsel %vm17, %v4179, 0.0
  %v4262 = vadd.f32 %v4260, %v4261
  %v4263 = vsel %vm17, %v4180, 0.0
  %v4264 = vadd.f32 %v4262, %v4263
  %v4265 = vsel %vm17, %v4181, 0.0
  %v4266 = vadd.f32 %v4264, %v4265
  %v4267 = vsel %vm17, %v4182, 0.0
  %v4268 = vadd.f32 %v4266, %v4267
  %v4269 = vsel %vm17, %v4183, 0.0
  %v4270 = vadd.f32 %v4268, %v4269
  %v4271 = vsel %vm17, %v4184, 0.0
  %v4272 = vadd.f32 %v4270, %v4271
  %v4273 = vsel %vm17, %v4185, 0.0
  %v4274 = vadd.f32 %v4272, %v4273
  %v4275 = vsel %vm17, %v4186, 0.0
  %v4276 = vadd.f32 %v4274, %v4275
  %v4277 = vsel %vm17, %v4187, 0.0
  %v4278 = vadd.f32 %v4276, %v4277
  %v4279 = vsel %vm17, %v4188, 0.0
  %v4280 = vadd.f32 %v4278, %v4279
  %v4281 = vsel %vm17, %v4189, 0.0
  %v4282 = vadd.f32 %v4280, %v4281
  %v4283 = vsel %vm17, %v4190, 0.0
  %v4284 = vadd.f32 %v4282, %v4283
  %v4285 = vsel %vm17, %v4191, 0.0
  %v4286 = vadd.f32 %v4284, %v4285
  %v4287 = vsel %vm17, %v4192, 0.0
  %v4288 = vadd.f32 %v4286, %v4287
  %v4289 = vsel %vm17, %v4193, 0.0
  %v4290 = vadd.f32 %v4288, %v4289
  %v4291 = vsel %vm17, %v4194, 0.0
  %v4292 = vadd.f32 %v4290, %v4291
  %v4293 = vsel %vm17, %v4195, 0.0
  %v4294 = vadd.f32 %v4292, %v4293
  %v4295 = vsel %vm17, %v4196, 0.0
  %v4296 = vadd.f32 %v4294, %v4295
  %v4297 = vsel %vm17, %v4197, 0.0
  %v4298 = vadd.f32 %v4296, %v4297
  %v4299 = vsel %vm17, %v4198, 0.0
  %v4300 = vadd.f32 %v4298, %v4299
  %v4301 = vsel %vm17, %v4199, 0.0
  %v4302 = vadd.f32 %v4300, %v4301
  %v4303 = vsel %vm17, %v4200, 0.0
  %v4304 = vadd.f32 %v4302, %v4303
  %v4305 = vsel %vm17, %v4201, 0.0
  %v4306 = vadd.f32 %v4304, %v4305
  %v4307 = vsel %vm17, %v4202, 0.0
  %v4308 = vadd.f32 %v4306, %v4307
  %v4309 = vsel %vm17, %v4203, 0.0
  %v4310 = vadd.f32 %v4308, %v4309
  %v4311 = vsel %vm17, %v4204, 0.0
  %v4312 = vadd.f32 %v4310, %v4311
  %v4313 = vsel %vm17, %v4205, 0.0
  %v4314 = vadd.f32 %v4312, %v4313
  %v4315 = vsel %vm17, %v4206, 0.0
  %v4316 = vadd.f32 %v4314, %v4315
  %v4317 = vsel %vm17, %v4207, 0.0
  %v4318 = vadd.f32 %v4316, %v4317
  %v4319 = vsel %vm17, %v4208, 0.0
  %v4320 = vadd.f32 %v4318, %v4319
  %v4321 = vsel %vm17, %v4209, 0.0
  %v4322 = vadd.f32 %v4320, %v4321
  %v4323 = vsel %vm17, %v4210, 0.0
  %v4324 = vadd.f32 %v4322, %v4323
  %v4325 = vsel %vm17, %v4211, 0.0
  %v4326 = vadd.f32 %v4324, %v4325
  %v4327 = vsel %vm17, %v4212, 0.0
  %v4328 = vadd.f32 %v4326, %v4327
  %v4329 = vsel %vm17, %v4213, 0.0
  %v4330 = vadd.f32 %v4328, %v4329
  %v4331 = vsel %vm17, %v4214, 0.0
  %v4332 = vadd.f32 %v4330, %v4331
  %v4333 = vsel %vm17, %v4215, 0.0
  %v4334 = vadd.f32 %v4332, %v4333
  %v4335 = vsel %vm17, %v4216, 0.0
  %v4336 = vadd.f32 %v4334, %v4335
  %v4337 = vsel %vm17, %v4217, 0.0
  %v4338 = vadd.f32 %v4336, %v4337
  %v4339 = vsel %vm17, %v4218, 0.0
  %v4340 = vadd.f32 %v4338, %v4339
  %v4341 = vsel %vm17, %v4219, 0.0
  %v4342 = vadd.f32 %v4340, %v4341
  %v4343 = vsel %vm17, %v4220, 0.0
  %v4344 = vadd.f32 %v4342, %v4343
  %v4345 = vsel %vm17, %v4221, 0.0
  %v4346 = vadd.f32 %v4344, %v4345
  %v4347 = vsel %vm17, %v4222, 0.0
  %v4348 = vadd.f32 %v4346, %v4347
  %v4349 = vsel %vm17, %v4223, 0.0
  %v4350 = vadd.f32 %v4348, %v4349
  %v4351 = vrot.slane %v4350, 4
  %v4352 = vadd.f32 %v4350, %v4351
  %v4353 = vrot.slane %v4352, 2
  %v4354 = vadd.f32 %v4352, %v4353
  %v4355 = vrot.slane %v4354, 1
  %v4356 = vadd.f32 %v4354, %v4355
  %v4357 = vmul.f32 %v4356, 0.001953125
  %v4358 = vadd.f32 %v4357, 1e-05
  %v4359 = vrsqrt.pop %v4358
  %v4360 = vmul.f32 %v4359, %v4358
  %v4361 = vmul.f32 %v4360, %v4359
  %v4362 = vmul.f32 0.5, %v4361
  %v4363 = vsub.f32 1.5, %v4362
  %v4364 = vmul.f32 %v4359, %v4363
  %vm4365 = vweird.f32 %v4358
  %vm4366 = vweird.f32 %v4359
  %vm4367 = vmor %vm4365, %vm4366
  %v4368 = vsel %vm4367, %v4359, %v4364
  %v4369 = vld [vmem:[%s2] sm:$0x1]
  %v4370 = vmul.f32 %v4369, %v4368
  %v4372 = vperm.slane %v4370, 0
  %v4374 = vmul.f32 %v4096, %v4372
  %v4375 = vmul.f32 %v4097, %v4372
  %v4376 = vmul.f32 %v4098, %v4372
  %v4377 = vmul.f32 %v4099, %v4372
  %v4378 = vmul.f32 %v4100, %v4372
  %v4379 = vmul.f32 %v4101, %v4372
  %v4380 = vmul.f32 %v4102, %v4372
  %v4381 = vmul.f32 %v4103, %v4372
  %v4382 = vmul.f32 %v4104, %v4372
  %v4383 = vmul.f32 %v4105, %v4372
  %v4384 = vmul.f32 %v4106, %v4372
  %v4385 = vmul.f32 %v4107, %v4372
  %v4386 = vmul.f32 %v4108, %v4372
  %v4387 = vmul.f32 %v4109, %v4372
  %v4388 = vmul.f32 %v4110, %v4372
  %v4389 = vmul.f32 %v4111, %v4372
  %v4390 = vmul.f32 %v4112, %v4372
  %v4391 = vmul.f32 %v4113, %v4372
  %v4392 = vmul.f32 %v4114, %v4372
  %v4393 = vmul.f32 %v4115, %v4372
  %v4394 = vmul.f32 %v4116, %v4372
  %v4395 = vmul.f32 %v4117, %v4372
  %v4396 = vmul.f32 %v4118, %v4372
  %v4397 = vmul.f32 %v4119, %v4372
  %v4398 = vmul.f32 %v4120, %v4372
  %v4399 = vmul.f32 %v4121, %v4372
  %v4400 = vmul.f32 %v4122, %v4372
  %v4401 = vmul.f32 %v4123, %v4372
  %v4402 = vmul.f32 %v4124, %v4372
  %v4403 = vmul.f32 %v4125, %v4372
  %v4404 = vmul.f32 %v4126, %v4372
  %v4405 = vmul.f32 %v4127, %v4372
  %v4406 = vmul.f32 %v4128, %v4372
  %v4407 = vmul.f32 %v4129, %v4372
  %v4408 = vmul.f32 %v4130, %v4372
  %v4409 = vmul.f32 %v4131, %v4372
  %v4410 = vmul.f32 %v4132, %v4372
  %v4411 = vmul.f32 %v4133, %v4372
  %v4412 = vmul.f32 %v4134, %v4372
  %v4413 = vmul.f32 %v4135, %v4372
  %v4414 = vmul.f32 %v4136, %v4372
  %v4415 = vmul.f32 %v4137, %v4372
  %v4416 = vmul.f32 %v4138, %v4372
  %v4417 = vmul.f32 %v4139, %v4372
  %v4418 = vmul.f32 %v4140, %v4372
  %v4419 = vmul.f32 %v4141, %v4372
  %v4420 = vmul.f32 %v4142, %v4372
  %v4421 = vmul.f32 %v4143, %v4372
  %v4422 = vmul.f32 %v4144, %v4372
  %v4423 = vmul.f32 %v4145, %v4372
  %v4424 = vmul.f32 %v4146, %v4372
  %v4425 = vmul.f32 %v4147, %v4372
  %v4426 = vmul.f32 %v4148, %v4372
  %v4427 = vmul.f32 %v4149, %v4372
  %v4428 = vmul.f32 %v4150, %v4372
  %v4429 = vmul.f32 %v4151, %v4372
  %v4430 = vmul.f32 %v4152, %v4372
  %v4431 = vmul.f32 %v4153, %v4372
  %v4432 = vmul.f32 %v4154, %v4372
  %v4433 = vmul.f32 %v4155, %v4372
  %v4434 = vmul.f32 %v4156, %v4372
  %v4435 = vmul.f32 %v4157, %v4372
  %v4436 = vmul.f32 %v4158, %v4372
  %v4437 = vmul.f32 %v4159, %v4372
  %v4438 = vld [vmem:[%s3] sm:$0x1]
  %v4440 = vperm.slane %v4438, 0
  %v4442 = vadd.f32 %v4374, %v4440
  %v4443 = vadd.f32 %v4375, %v4440
  %v4444 = vadd.f32 %v4376, %v4440
  %v4445 = vadd.f32 %v4377, %v4440
  %v4446 = vadd.f32 %v4378, %v4440
  %v4447 = vadd.f32 %v4379, %v4440
  %v4448 = vadd.f32 %v4380, %v4440
  %v4449 = vadd.f32 %v4381, %v4440
  %v4450 = vadd.f32 %v4382, %v4440
  %v4451 = vadd.f32 %v4383, %v4440
  %v4452 = vadd.f32 %v4384, %v4440
  %v4453 = vadd.f32 %v4385, %v4440
  %v4454 = vadd.f32 %v4386, %v4440
  %v4455 = vadd.f32 %v4387, %v4440
  %v4456 = vadd.f32 %v4388, %v4440
  %v4457 = vadd.f32 %v4389, %v4440
  %v4458 = vadd.f32 %v4390, %v4440
  %v4459 = vadd.f32 %v4391, %v4440
  %v4460 = vadd.f32 %v4392, %v4440
  %v4461 = vadd.f32 %v4393, %v4440
  %v4462 = vadd.f32 %v4394, %v4440
  %v4463 = vadd.f32 %v4395, %v4440
  %v4464 = vadd.f32 %v4396, %v4440
  %v4465 = vadd.f32 %v4397, %v4440
  %v4466 = vadd.f32 %v4398, %v4440
  %v4467 = vadd.f32 %v4399, %v4440
  %v4468 = vadd.f32 %v4400, %v4440
  %v4469 = vadd.f32 %v4401, %v4440
  %v4470 = vadd.f32 %v4402, %v4440
  %v4471 = vadd.f32 %v4403, %v4440
  %v4472 = vadd.f32 %v4404, %v4440
  %v4473 = vadd.f32 %v4405, %v4440
  %v4474 = vadd.f32 %v4406, %v4440
  %v4475 = vadd.f32 %v4407, %v4440
  %v4476 = vadd.f32 %v4408, %v4440
  %v4477 = vadd.f32 %v4409, %v4440
  %v4478 = vadd.f32 %v4410, %v4440
  %v4479 = vadd.f32 %v4411, %v4440
  %v4480 = vadd.f32 %v4412, %v4440
  %v4481 = vadd.f32 %v4413, %v4440
  %v4482 = vadd.f32 %v4414, %v4440
  %v4483 = vadd.f32 %v4415, %v4440
  %v4484 = vadd.f32 %v4416, %v4440
  %v4485 = vadd.f32 %v4417, %v4440
  %v4486 = vadd.f32 %v4418, %v4440
  %v4487 = vadd.f32 %v4419, %v4440
  %v4488 = vadd.f32 %v4420, %v4440
  %v4489 = vadd.f32 %v4421, %v4440
  %v4490 = vadd.f32 %v4422, %v4440
  %v4491 = vadd.f32 %v4423, %v4440
  %v4492 = vadd.f32 %v4424, %v4440
  %v4493 = vadd.f32 %v4425, %v4440
  %v4494 = vadd.f32 %v4426, %v4440
  %v4495 = vadd.f32 %v4427, %v4440
  %v4496 = vadd.f32 %v4428, %v4440
  %v4497 = vadd.f32 %v4429, %v4440
  %v4498 = vadd.f32 %v4430, %v4440
  %v4499 = vadd.f32 %v4431, %v4440
  %v4500 = vadd.f32 %v4432, %v4440
  %v4501 = vadd.f32 %v4433, %v4440
  %v4502 = vadd.f32 %v4434, %v4440
  %v4503 = vadd.f32 %v4435, %v4440
  %v4504 = vadd.f32 %v4436, %v4440
  %v4505 = vadd.f32 %v4437, %v4440
  %4506 = vst.msk [vmem:[%s4] sm:$0xff] %vm17, %v4442
  %4507 = vst.msk [vmem:[%s4 + $0x8] sm:$0xff] %vm17, %v4443
  %4508 = vst.msk [vmem:[%s4 + $0x10] sm:$0xff] %vm17, %v4444
  %4509 = vst.msk [vmem:[%s4 + $0x18] sm:$0xff] %vm17, %v4445
  %4510 = vst.msk [vmem:[%s4 + $0x20] sm:$0xff] %vm17, %v4446
  %4511 = vst.msk [vmem:[%s4 + $0x28] sm:$0xff] %vm17, %v4447
  %4512 = vst.msk [vmem:[%s4 + $0x30] sm:$0xff] %vm17, %v4448
  %4513 = vst.msk [vmem:[%s4 + $0x38] sm:$0xff] %vm17, %v4449
  %4514 = vst.msk [vmem:[%s4 + $0x40] sm:$0xff] %vm17, %v4450
  %4515 = vst.msk [vmem:[%s4 + $0x48] sm:$0xff] %vm17, %v4451
  %4516 = vst.msk [vmem:[%s4 + $0x50] sm:$0xff] %vm17, %v4452
  %4517 = vst.msk [vmem:[%s4 + $0x58] sm:$0xff] %vm17, %v4453
  %4518 = vst.msk [vmem:[%s4 + $0x60] sm:$0xff] %vm17, %v4454
  %4519 = vst.msk [vmem:[%s4 + $0x68] sm:$0xff] %vm17, %v4455
  %4520 = vst.msk [vmem:[%s4 + $0x70] sm:$0xff] %vm17, %v4456
  %4521 = vst.msk [vmem:[%s4 + $0x78] sm:$0xff] %vm17, %v4457
  %4522 = vst.msk [vmem:[%s4 + $0x80] sm:$0xff] %vm17, %v4458
  %4523 = vst.msk [vmem:[%s4 + $0x88] sm:$0xff] %vm17, %v4459
  %4524 = vst.msk [vmem:[%s4 + $0x90] sm:$0xff] %vm17, %v4460
  %4525 = vst.msk [vmem:[%s4 + $0x98] sm:$0xff] %vm17, %v4461
  %4526 = vst.msk [vmem:[%s4 + $0xa0] sm:$0xff] %vm17, %v4462
  %4527 = vst.msk [vmem:[%s4 + $0xa8] sm:$0xff] %vm17, %v4463
  %4528 = vst.msk [vmem:[%s4 + $0xb0] sm:$0xff] %vm17, %v4464
  %4529 = vst.msk [vmem:[%s4 + $0xb8] sm:$0xff] %vm17, %v4465
  %4530 = vst.msk [vmem:[%s4 + $0xc0] sm:$0xff] %vm17, %v4466
  %4531 = vst.msk [vmem:[%s4 + $0xc8] sm:$0xff] %vm17, %v4467
  %4532 = vst.msk [vmem:[%s4 + $0xd0] sm:$0xff] %vm17, %v4468
  %4533 = vst.msk [vmem:[%s4 + $0xd8] sm:$0xff] %vm17, %v4469
  %4534 = vst.msk [vmem:[%s4 + $0xe0] sm:$0xff] %vm17, %v4470
  %4535 = vst.msk [vmem:[%s4 + $0xe8] sm:$0xff] %vm17, %v4471
  %4536 = vst.msk [vmem:[%s4 + $0xf0] sm:$0xff] %vm17, %v4472
  %4537 = vst.msk [vmem:[%s4 + $0xf8] sm:$0xff] %vm17, %v4473
  %4538 = vst.msk [vmem:[%s4 + $0x100] sm:$0xff] %vm17, %v4474
  %4539 = vst.msk [vmem:[%s4 + $0x108] sm:$0xff] %vm17, %v4475
  %4540 = vst.msk [vmem:[%s4 + $0x110] sm:$0xff] %vm17, %v4476
  %4541 = vst.msk [vmem:[%s4 + $0x118] sm:$0xff] %vm17, %v4477
  %4542 = vst.msk [vmem:[%s4 + $0x120] sm:$0xff] %vm17, %v4478
  %4543 = vst.msk [vmem:[%s4 + $0x128] sm:$0xff] %vm17, %v4479
  %4544 = vst.msk [vmem:[%s4 + $0x130] sm:$0xff] %vm17, %v4480
  %4545 = vst.msk [vmem:[%s4 + $0x138] sm:$0xff] %vm17, %v4481
  %4546 = vst.msk [vmem:[%s4 + $0x140] sm:$0xff] %vm17, %v4482
  %4547 = vst.msk [vmem:[%s4 + $0x148] sm:$0xff] %vm17, %v4483
  %4548 = vst.msk [vmem:[%s4 + $0x150] sm:$0xff] %vm17, %v4484
  %4549 = vst.msk [vmem:[%s4 + $0x158] sm:$0xff] %vm17, %v4485
  %4550 = vst.msk [vmem:[%s4 + $0x160] sm:$0xff] %vm17, %v4486
  %4551 = vst.msk [vmem:[%s4 + $0x168] sm:$0xff] %vm17, %v4487
  %4552 = vst.msk [vmem:[%s4 + $0x170] sm:$0xff] %vm17, %v4488
  %4553 = vst.msk [vmem:[%s4 + $0x178] sm:$0xff] %vm17, %v4489
  %4554 = vst.msk [vmem:[%s4 + $0x180] sm:$0xff] %vm17, %v4490
  %4555 = vst.msk [vmem:[%s4 + $0x188] sm:$0xff] %vm17, %v4491
  %4556 = vst.msk [vmem:[%s4 + $0x190] sm:$0xff] %vm17, %v4492
  %4557 = vst.msk [vmem:[%s4 + $0x198] sm:$0xff] %vm17, %v4493
  %4558 = vst.msk [vmem:[%s4 + $0x1a0] sm:$0xff] %vm17, %v4494
  %4559 = vst.msk [vmem:[%s4 + $0x1a8] sm:$0xff] %vm17, %v4495
  %4560 = vst.msk [vmem:[%s4 + $0x1b0] sm:$0xff] %vm17, %v4496
  %4561 = vst.msk [vmem:[%s4 + $0x1b8] sm:$0xff] %vm17, %v4497
  %4562 = vst.msk [vmem:[%s4 + $0x1c0] sm:$0xff] %vm17, %v4498
  %4563 = vst.msk [vmem:[%s4 + $0x1c8] sm:$0xff] %vm17, %v4499
  %4564 = vst.msk [vmem:[%s4 + $0x1d0] sm:$0xff] %vm17, %v4500
  %4565 = vst.msk [vmem:[%s4 + $0x1d8] sm:$0xff] %vm17, %v4501
  %4566 = vst.msk [vmem:[%s4 + $0x1e0] sm:$0xff] %vm17, %v4502
  %4567 = vst.msk [vmem:[%s4 + $0x1e8] sm:$0xff] %vm17, %v4503
  %4568 = vst.msk [vmem:[%s4 + $0x1f0] sm:$0xff] %vm17, %v4504
  %4569 = vst.msk [vmem:[%s4 + $0x1f8] sm:$0xff] %vm17, %v4505
  // Predicated region
  $region18: #{tpu_custom_call.1} parent=0 // pred_check
    _
  $region19: #{tpu_custom_call.1} parent=0 // pred_check_branch
    %4571 = sbr.rel (0) target = $region21
  $region20: #{tpu_custom_call.1} parent=0 // pred_region
    _
  $region21: #{tpu_custom_call.1} parent=0 // pred_fallthru
    _
  // Predicated region
  $region22: #{tpu_custom_call.1} parent=0 // pred_check
    _
  $region23: #{tpu_custom_call.1} parent=0 // pred_check_branch
    %4573 = sbr.rel (0) target = $region25
  $region24: #{tpu_custom_call.1} parent=0 // pred_region
    _
  $region25: #{tpu_custom_call.1} parent=0 // pred_fallthru
    _

</llo_original>
